<compile_context>
chip_gen: v6e
topology: v6e:2x2x1
jax: 0.10.0
libtpu: 0.0.40
codegen_flags: <defaults>
</compile_context>

<pallas_src>
import functools

import jax
import jax.numpy as jnp
from jax import lax
from jax.experimental import pallas as pl
from jax.experimental.pallas import tpu as pltpu


# ----------------------------------------------------------------------------
# Fused GLAM kernel (one grid step == one batch element)
# ----------------------------------------------------------------------------
def glam_kernel(scal_ref, col_ref, x_ref,
                Bl_ref, Bq_ref, Bk_ref,
                W1_ref, b1_ref, Wd_ref, bd_ref, w2_ref,
                Wq_ref, bq_ref, Wk_ref, bk_ref, Wv_ref, bv_ref,
                Watt_ref, batt_ref,
                out_ref,
                pad_ref, im2col_ref,
                *, Cr, W, HW, kv_block, pad_rows):
    f32 = jnp.float32
    bf16 = jnp.bfloat16

    # ------------- channel attention weights (ECA-style 1-D channel convs) ---
    gap = jnp.mean(x_ref[...].astype(f32), axis=0, keepdims=True)          # (1, C)
    a_loc = jax.nn.sigmoid(
        jnp.dot(gap, Bl_ref[...], preferred_element_type=f32) + scal_ref[0])
    q_row = jax.nn.sigmoid(
        jnp.dot(gap, Bq_ref[...], preferred_element_type=f32) + scal_ref[1])
    k_row = jax.nn.sigmoid(
        jnp.dot(gap, Bk_ref[...], preferred_element_type=f32) + scal_ref[2])
    # outer product k (C,) x q (C,) -> (C, C) via a K=1 contraction
    kq = lax.dot_general(k_row, q_row, (((0,), (0,)), ((), ())),
                         preferred_element_type=f32)
    e_c = jnp.exp(kq - jnp.max(kq, keepdims=True))
    kq_sm = (e_c * pl.reciprocal(jnp.sum(e_c, keepdims=True),
                                 approx=True)).astype(bf16)                 # (C, C) bf16

    # ------------- local spatial attention -----------------------------------
    att1 = jnp.dot(x_ref[...], W1_ref[...],
                   preferred_element_type=f32) + b1_ref[...]                # (HW, Cr)

    # zero only the two halo regions every step (interior is fully overwritten;
    # per-step zeroing keeps the kernel megacore-safe with scratch persistence)
    pad_ref[pl.ds(0, pad_rows), :] = jnp.zeros((pad_rows, Cr), f32)
    pad_ref[pl.ds(pad_rows + HW, pad_rows), :] = jnp.zeros((pad_rows, Cr), f32)
    pad_ref[pl.ds(pad_rows, HW), :] = att1

    # gather the 27 shifted/masked taps into a bf16 im2col slab, then ONE matmul
    col = col_ref[...]                                                      # (HW, 1) int32
    for di, d in enumerate((1, 2, 3)):                                      # 3 dilations
        for ky in range(3):
            for kx in range(3):
                dy, dx = (ky - 1) * d, (kx - 1) * d
                off = dy * W + dx                                           # static flat shift
                sl = pad_ref[pl.ds(pad_rows + off, HW), :]
                if dx != 0:                                                 # mask column wrap
                    valid = (col + dx >= 0) & (col + dx < W)
                    sl = jnp.where(valid, sl, 0.0)
                tap = di * 9 + ky * 3 + kx
                im2col_ref[:, pl.ds(tap * Cr, Cr)] = sl.astype(bf16)

    dsum = jnp.dot(im2col_ref[...], Wd_ref[...],
                   preferred_element_type=f32)                              # (HW, Cr)
    att2 = jnp.sum((dsum + bd_ref[...]) * w2_ref[...],
                   axis=1, keepdims=True) + scal_ref[3]
    gate = jax.nn.sigmoid(att2)                                             # (HW, 1)

    # fold the local branch into the output early: kills the (HW, C) f32 live
    # ranges of x / local_ch / local_att across the KV-chunk loop below.
    # w_l*local_att + w_x*x == x * (w_l*(1+a_loc)*(1+gate) + w_x)
    out_ref[...] = x_ref[...].astype(f32) * (
        scal_ref[4] * (a_loc + 1.0) * (gate + 1.0) + scal_ref[5])

    # ------------- global spatial attention (KV-chunked online softmax) ------
    Wk = Wk_ref[...]
    Wv = Wv_ref[...]
    bk = bk_ref[...]
    bv = bv_ref[...]
    q_sp = (jnp.dot(x_ref[...], Wq_ref[...], preferred_element_type=f32)
            + bq_ref[...]).astype(bf16)                                     # (HW, Cr)

    m_g = jnp.full((1, 1), -jnp.inf, f32)
    l_g = jnp.zeros((1, 1), f32)
    acc = jnp.zeros((HW, Cr), f32)
    for c in range(HW // kv_block):
        xk = x_ref[pl.ds(c * kv_block, kv_block), :]                        # (kv, C) bf16
        k_c = (jnp.dot(xk, Wk, preferred_element_type=f32) + bk).astype(bf16)
        v_c = (jnp.dot(xk, Wv, preferred_element_type=f32) + bv).astype(bf16)
        s = lax.dot_general(q_sp, k_c, (((1,), (1,)), ((), ())),
                            preferred_element_type=f32)                     # (HW, kv)
        m_new = jnp.maximum(m_g, jnp.max(s, keepdims=True))
        alpha = jnp.exp(m_g - m_new)
        p = jnp.exp(s - m_new)
        l_g = alpha * l_g + jnp.sum(p, keepdims=True)
        acc = alpha * acc + jnp.dot(p.astype(bf16), v_c,
                                    preferred_element_type=f32)
        m_g = m_new
    att_sp = acc * pl.reciprocal(l_g, approx=True)                          # (HW, Cr)
    ga = jnp.dot(att_sp.astype(bf16), Watt_ref[...],
                 preferred_element_type=f32) + batt_ref[...]                # (HW, C)

    # global channel + global spatial branches, accumulated into the output:
    # w_g*global_att == w_g * x * (1+att_ch) * (1+ga)
    att_ch = jnp.dot(x_ref[...], kq_sm, preferred_element_type=f32)         # (HW, C)
    out_ref[...] = out_ref[...] + scal_ref[6] * (
        x_ref[...].astype(f32) * (att_ch + 1.0) * (ga + 1.0))


# ----------------------------------------------------------------------------
# Wrapper (layout-only glue + single pallas_call)
# ----------------------------------------------------------------------------
def _stack_dilated(Wc):
    """(Co, Ci, 3, 3) torch conv weight -> (9*Ci, Co) tap-major matmul weight."""
    Co, Ci, _, _ = Wc.shape
    return jnp.transpose(Wc, (2, 3, 1, 0)).reshape(9 * Ci, Co)


def _band_matrix(w, C):
    """(C, C) band matrix B s.t. gap_row @ B == conv1d(gap, w, padding='same')."""
    ksz = w.shape[0]
    pad = (ksz - 1) // 2
    ii = jnp.arange(C, dtype=jnp.int32)[:, None]
    jj = jnp.arange(C, dtype=jnp.int32)[None, :]
    t = ii - jj + pad
    taps = jnp.asarray(w, jnp.float32)
    return jnp.where((t >= 0) & (t < ksz), taps[jnp.clip(t, 0, ksz - 1)], 0.0)


def _largest_divisor_leq(n, cap):
    for d in range(min(n, cap), 0, -1):
        if n % d == 0:
            return d
    return 1


def _vmem_capacity_bytes():
    try:
        info = pltpu.get_tpu_info()
        for name in ("vmem_capacity_bytes", "vmem_bytes", "vmem_size_bytes"):
            v = getattr(info, name, None)
            if v is not None and int(v) > 0:
                return int(v)
    except Exception:
        pass
    return 64 * 1024 * 1024          # conservative (v7x-sized) fallback


def glam_forward(x, p):
    N, C, H, W = x.shape
    HW = H * W
    Cr = p["W1"].shape[0]
    f32, bf16 = jnp.float32, jnp.bfloat16

    # tokens-by-channels slab (NHWC flattened); bf16 halves the activation DMA
    x_hwc = jnp.transpose(x, (0, 2, 3, 1)).reshape(N, HW, C).astype(bf16)

    # scalars -> SMEM: [b_local, b_q, b_k, b2, fw_l, fw_x, fw_g]
    fw = jax.nn.softmax(jnp.asarray(p["fusion"], f32))
    scal = jnp.stack([jnp.asarray(p["b_local"], f32),
                      jnp.asarray(p["b_q"], f32),
                      jnp.asarray(p["b_k"], f32),
                      jnp.asarray(p["b2"], f32).reshape(()),
                      fw[0], fw[1], fw[2]])

    col_ids = (jnp.arange(HW, dtype=jnp.int32) % W).reshape(HW, 1)

    # ECA channel-conv band matrices (weight-only -> precomputed once here)
    B_l = _band_matrix(p["w_local"], C)
    B_q = _band_matrix(p["w_q"], C)
    B_k = _band_matrix(p["w_k"], C)

    W1k = p["W1"].T.astype(bf16)
    b1k = p["b1"].reshape(1, Cr).astype(f32)
    Wd_stack = jnp.concatenate([_stack_dilated(p["Wd1"]),
                                _stack_dilated(p["Wd2"]),
                                _stack_dilated(p["Wd3"])], axis=0).astype(bf16)   # (27*Cr, Cr)
    bd_sum = (p["bd1"] + p["bd2"] + p["bd3"]).reshape(1, Cr).astype(f32)
    w2_row = p["W2"].reshape(1, Cr).astype(f32)
    Wq_k, bq_k = p["Wq"].T.astype(bf16), p["bq"].reshape(1, Cr).astype(f32)
    Wk_k, bk_k = p["Wk"].T.astype(bf16), p["bk"].reshape(1, Cr).astype(f32)
    Wv_k, bv_k = p["Wv"].T.astype(bf16), p["bv"].reshape(1, Cr).astype(f32)
    Watt_k, batt_k = p["Watt"].T.astype(bf16), p["batt"].reshape(1, C).astype(f32)

    # halo covering the largest flat-index shift of the dilated convs (3*W + 3),
    # rounded up to a sublane multiple so the att1 interior store stays aligned
    pad_rows = ((3 * W + 3 + 7) // 8) * 8

    # per-generation VMEM budget + KV chunking (largest divisor of HW <= cap)
    vmem_cap = _vmem_capacity_bytes()
    vmem_limit = int(min(0.75 * vmem_cap, 100 * 1024 * 1024))
    kv_cap = 512 if vmem_cap < 96 * 1024 * 1024 else 1024
    kv_block = _largest_divisor_leq(HW, kv_cap)

    smem = pl.BlockSpec(memory_space=pltpu.MemorySpace.SMEM)
    slab = lambda d: pl.BlockSpec((None, HW, d), lambda b: (b, 0, 0))
    full = lambda shp: pl.BlockSpec(shp, lambda b, _s=shp: tuple(0 for _ in _s))

    kernel = functools.partial(glam_kernel, Cr=Cr, W=W, HW=HW,
                               kv_block=kv_block, pad_rows=pad_rows)

    fused = pl.pallas_call(
        kernel,
        grid=(N,),
        in_specs=[smem, full((HW, 1)), slab(C),
                  full((C, C)), full((C, C)), full((C, C)),
                  full((C, Cr)), full((1, Cr)),
                  full((27 * Cr, Cr)), full((1, Cr)), full((1, Cr)),
                  full((C, Cr)), full((1, Cr)),
                  full((C, Cr)), full((1, Cr)),
                  full((C, Cr)), full((1, Cr)),
                  full((Cr, C)), full((1, C))],
        out_specs=pl.BlockSpec((None, HW, C), lambda b: (b, 0, 0)),
        out_shape=jax.ShapeDtypeStruct((N, HW, C), jnp.float32),
        scratch_shapes=[pltpu.VMEM((HW + 2 * pad_rows, Cr), jnp.float32),   # padded att1
                        pltpu.VMEM((HW, 27 * Cr), jnp.bfloat16)],           # im2col slab
        compiler_params=pltpu.CompilerParams(
            dimension_semantics=("parallel",),          # batch is fully independent
            vmem_limit_bytes=vmem_limit),
    )(scal, col_ids, x_hwc,
      B_l, B_q, B_k,
      W1k, b1k, Wd_stack, bd_sum, w2_row,
      Wq_k, bq_k, Wk_k, bk_k, Wv_k, bv_k, Watt_k, batt_k)

    return jnp.transpose(fused.reshape(N, H, W, C), (0, 3, 1, 2))           # NCHW out


# ----------------------------------------------------------------------------
# Pure-JAX reference (mirrors the PyTorch module) for a sanity check
# ----------------------------------------------------------------------------
def _conv1d_ref(v, w, b):
    kk = w.shape[0]
    pad = (kk - 1) // 2
    C = v.shape[1]
    vp = jnp.pad(v, ((0, 0), (pad, pad)))
    cols = [jnp.sum(vp[:, c:c + kk] * w[None, :], axis=1) for c in range(C)]
    return jnp.stack(cols, axis=1) + b


def _conv1x1_ref(inp, w, b):
    return jnp.einsum("nchw,oc->nohw", inp, w) + b[None, :, None, None]


def _dil_conv_ref(inp, w, b, d):
    out = lax.conv_general_dilated(inp, w, window_strides=(1, 1),
                                   padding=((d, d), (d, d)), rhs_dilation=(d, d),
                                   dimension_numbers=("NCHW", "OIHW", "NCHW"))
    return out + b[None, :, None, None]


def glam_ref(x, p):
    N, C, H, W = x.shape
    HW = H * W
    gap = jnp.mean(x, axis=(2, 3))                                          # (N, C)

    # local channel attention
    a_loc = jax.nn.sigmoid(_conv1d_ref(gap, p["w_local"], p["b_local"]))
    local_ch = x * a_loc[:, :, None, None] + x

    # global channel attention
    q = jax.nn.sigmoid(_conv1d_ref(gap, p["w_q"], p["b_q"]))
    k = jax.nn.sigmoid(_conv1d_ref(gap, p["w_k"], p["b_k"]))
    kq = k[:, :, None] * q[:, None, :]
    kq = jax.nn.softmax(kq.reshape(N, -1), axis=-1).reshape(N, C, C)
    value = jnp.transpose(x, (0, 2, 3, 1)).reshape(N, HW, C)
    att = jnp.einsum("npc,ncd->npd", value, kq)
    att = jnp.transpose(att, (0, 2, 1)).reshape(N, C, H, W)
    global_ch = x * att + x

    # local spatial attention
    att1 = _conv1x1_ref(x, p["W1"], p["b1"])
    dsum = (_dil_conv_ref(att1, p["Wd1"], p["bd1"], 1)
            + _dil_conv_ref(att1, p["Wd2"], p["bd2"], 2)
            + _dil_conv_ref(att1, p["Wd3"], p["bd3"], 3))
    gate = jax.nn.sigmoid(_conv1x1_ref(dsum, p["W2"], p["b2"]))
    local_att = local_ch * gate + local_ch

    # global spatial attention
    Cr = p["Wq"].shape[0]
    qg = _conv1x1_ref(x, p["Wq"], p["bq"]).reshape(N, Cr, HW)
    kg = _conv1x1_ref(x, p["Wk"], p["bk"]).reshape(N, Cr, HW)
    vg = _conv1x1_ref(x, p["Wv"], p["bv"]).reshape(N, Cr, HW)
    qk = jnp.einsum("nci,ncj->nij", kg, qg)
    qk = jax.nn.softmax(qk.reshape(N, -1), axis=-1).reshape(N, HW, HW)
    ga = jnp.einsum("nci,nij->ncj", vg, qk).reshape(N, Cr, H, W)
    ga = _conv1x1_ref(ga, p["Watt"], p["batt"])
    global_att = global_ch * ga + global_ch

    # fusion
    w = jax.nn.softmax(p["fusion"])
    return w[0] * local_att + w[1] * x + w[2] * global_att


# ----------------------------------------------------------------------------
def make_params(in_channels, num_reduced_channels, kernel_size, key):
    ks = jax.random.split(key, 24)
    nrm = lambda k, s, sc=0.2: sc * jax.random.normal(k, s, jnp.float32)
    C, Cr = in_channels, num_reduced_channels
    return {
        "w_local": nrm(ks[0], (kernel_size,), 0.5), "b_local": jnp.float32(0.01),
        "w_q": nrm(ks[1], (kernel_size,), 0.5), "b_q": jnp.float32(0.02),
        "w_k": nrm(ks[2], (kernel_size,), 0.5), "b_k": jnp.float32(-0.01),
        "W1": nrm(ks[3], (Cr, C)), "b1": nrm(ks[4], (Cr,), 0.05),
        "Wd1": nrm(ks[5], (Cr, Cr, 3, 3)), "bd1": nrm(ks[6], (Cr,), 0.05),
        "Wd2": nrm(ks[7], (Cr, Cr, 3, 3)), "bd2": nrm(ks[8], (Cr,), 0.05),
        "Wd3": nrm(ks[9], (Cr, Cr, 3, 3)), "bd3": nrm(ks[10], (Cr,), 0.05),
        "W2": nrm(ks[11], (1, Cr)), "b2": nrm(ks[12], (1,), 0.05),
        "Wq": nrm(ks[13], (Cr, C)), "bq": nrm(ks[14], (Cr,), 0.05),
        "Wk": nrm(ks[15], (Cr, C)), "bk": nrm(ks[16], (Cr,), 0.05),
        "Wv": nrm(ks[17], (Cr, C)), "bv": nrm(ks[18], (Cr,), 0.05),
        "Watt": nrm(ks[19], (C, Cr)), "batt": nrm(ks[20], (C,), 0.05),
        "fusion": jnp.array([0.333, 0.333, 0.333], jnp.float32),
    }


if __name__ == "__main__":
    # GLAM(in_channels=8, num_reduced_channels=4, feature_map_size=8, kernel_size=3)
    N, C, H, W = 2, 8, 8, 8
    Cr, ksz = 4, 3

    key = jax.random.PRNGKey(0)
    kx, kp = jax.random.split(key)
    x = jax.random.normal(kx, (N, C, H, W), jnp.float32)
    params = make_params(C, Cr, ksz, kp)

    out = jax.jit(glam_forward)(x, params)
    out = jax.block_until_ready(out)

    ref = glam_ref(x, params)
    max_diff = float(jnp.max(jnp.abs(out - ref)))
    assert out.shape == (N, C, H, W)
    assert bool(jnp.all(jnp.isfinite(out)))
    assert max_diff < 5e-2, f"mismatch vs reference: max |diff| = {max_diff}"

    print("KERNEL_OK")
</pallas_src>

<mosaic_0001>
module attributes {stable_mosaic.version = 11 : i64} {
  func.func @glam_kernel(%arg0: i32, %arg1: memref<7xf32, #tpu.memory_space<smem>>, %arg2: memref<64x1xi32, #tpu.memory_space<vmem>>, %arg3: memref<1x64x8xbf16, #tpu.memory_space<vmem>>, %arg4: memref<8x8xf32, #tpu.memory_space<vmem>>, %arg5: memref<8x8xf32, #tpu.memory_space<vmem>>, %arg6: memref<8x8xf32, #tpu.memory_space<vmem>>, %arg7: memref<8x4xbf16, #tpu.memory_space<vmem>>, %arg8: memref<1x4xf32, #tpu.memory_space<vmem>>, %arg9: memref<108x4xbf16, #tpu.memory_space<vmem>>, %arg10: memref<1x4xf32, #tpu.memory_space<vmem>>, %arg11: memref<1x4xf32, #tpu.memory_space<vmem>>, %arg12: memref<8x4xbf16, #tpu.memory_space<vmem>>, %arg13: memref<1x4xf32, #tpu.memory_space<vmem>>, %arg14: memref<8x4xbf16, #tpu.memory_space<vmem>>, %arg15: memref<1x4xf32, #tpu.memory_space<vmem>>, %arg16: memref<8x4xbf16, #tpu.memory_space<vmem>>, %arg17: memref<1x4xf32, #tpu.memory_space<vmem>>, %arg18: memref<4x8xbf16, #tpu.memory_space<vmem>>, %arg19: memref<1x8xf32, #tpu.memory_space<vmem>>, %arg20: memref<1x64x8xf32, #tpu.memory_space<vmem>>, %arg21: memref<128x4xf32, #tpu.memory_space<vmem>>, %arg22: memref<64x108xbf16, #tpu.memory_space<vmem>>) attributes {dimension_semantics = [#tpu.dimension_semantics<parallel>], iteration_bounds = array<i64: 2>, scalar_prefetch = 0 : i64, scratch_operands = 2 : i64, tpu.core_type = #tpu.core_type<tc>, window_params = [{transform_indices = @transform_0, window_bounds = array<i64: 7>}, {pipeline_mode = #tpu.pipeline_mode<synchronous>, transform_indices = @transform_1, window_bounds = array<i64: 64, 1>}, {transform_indices = @transform_2, window_bounds = array<i64: 1, 64, 8>}, {pipeline_mode = #tpu.pipeline_mode<synchronous>, transform_indices = @transform_3, window_bounds = array<i64: 8, 8>}, {pipeline_mode = #tpu.pipeline_mode<synchronous>, transform_indices = @transform_4, window_bounds = array<i64: 8, 8>}, {pipeline_mode = #tpu.pipeline_mode<synchronous>, transform_indices = @transform_5, window_bounds = array<i64: 8, 8>}, {pipeline_mode = #tpu.pipeline_mode<synchronous>, transform_indices = @transform_6, window_bounds = array<i64: 8, 4>}, {pipeline_mode = #tpu.pipeline_mode<synchronous>, transform_indices = @transform_7, window_bounds = array<i64: 1, 4>}, {pipeline_mode = #tpu.pipeline_mode<synchronous>, transform_indices = @transform_8, window_bounds = array<i64: 108, 4>}, {pipeline_mode = #tpu.pipeline_mode<synchronous>, transform_indices = @transform_9, window_bounds = array<i64: 1, 4>}, {pipeline_mode = #tpu.pipeline_mode<synchronous>, transform_indices = @transform_10, window_bounds = array<i64: 1, 4>}, {pipeline_mode = #tpu.pipeline_mode<synchronous>, transform_indices = @transform_11, window_bounds = array<i64: 8, 4>}, {pipeline_mode = #tpu.pipeline_mode<synchronous>, transform_indices = @transform_12, window_bounds = array<i64: 1, 4>}, {pipeline_mode = #tpu.pipeline_mode<synchronous>, transform_indices = @transform_13, window_bounds = array<i64: 8, 4>}, {pipeline_mode = #tpu.pipeline_mode<synchronous>, transform_indices = @transform_14, window_bounds = array<i64: 1, 4>}, {pipeline_mode = #tpu.pipeline_mode<synchronous>, transform_indices = @transform_15, window_bounds = array<i64: 8, 4>}, {pipeline_mode = #tpu.pipeline_mode<synchronous>, transform_indices = @transform_16, window_bounds = array<i64: 1, 4>}, {pipeline_mode = #tpu.pipeline_mode<synchronous>, transform_indices = @transform_17, window_bounds = array<i64: 4, 8>}, {pipeline_mode = #tpu.pipeline_mode<synchronous>, transform_indices = @transform_18, window_bounds = array<i64: 1, 8>}, {transform_indices = @transform_19, window_bounds = array<i64: 1, 64, 8>}]} {
    %c0 = arith.constant 0 : index
    %c0_0 = arith.constant 0 : index
    %c0_1 = arith.constant 0 : index
    %0 = vector.load %arg3[%c0, %c0_0, %c0_1] : memref<1x64x8xbf16, #tpu.memory_space<vmem>>, vector<1x64x8xbf16>
    %1 = vector.shape_cast %0 : vector<1x64x8xbf16> to vector<64x8xbf16>
    %2 = arith.extf %1 : vector<64x8xbf16> to vector<64x8xf32>
    %cst = arith.constant dense<0.000000e+00> : vector<8xf32>
    %3 = vector.multi_reduction <add>, %2, %cst [0] : vector<64x8xf32> to vector<8xf32>
    %4 = vector.shape_cast %3 : vector<8xf32> to vector<1x8xf32>
    %cst_2 = arith.constant 6.400000e+01 : f32
    %5 = vector.broadcast %cst_2 : f32 to vector<1x8xf32>
    %6 = arith.divf %4, %5 : vector<1x8xf32>
    %c0_3 = arith.constant 0 : index
    %c0_4 = arith.constant 0 : index
    %7 = vector.load %arg4[%c0_3, %c0_4] : memref<8x8xf32, #tpu.memory_space<vmem>>, vector<8x8xf32>
    %cst_5 = arith.constant dense<0.000000e+00> : vector<1x8xf32>
    %8 = tpu.matmul %6, %7, %cst_5 {dimension_numbers = #tpu.dot_dimension_numbers<[1], [0], [0], [1], [0, 0, 1, 1], [], []>} : vector<1x8xf32>, vector<8x8xf32>, vector<1x8xf32> -> vector<1x8xf32>
    %c0_6 = arith.constant 0 : index
    %9 = memref.load %arg1[%c0_6] : memref<7xf32, #tpu.memory_space<smem>>
    %10 = vector.broadcast %9 : f32 to vector<1x8xf32>
    %11 = arith.addf %8, %10 : vector<1x8xf32>
    %12 = arith.negf %11 : vector<1x8xf32>
    %13 = math.exp %12 : vector<1x8xf32>
    %cst_7 = arith.constant 1.000000e+00 : f32
    %14 = vector.broadcast %cst_7 : f32 to vector<1x8xf32>
    %15 = arith.addf %14, %13 : vector<1x8xf32>
    %16 = arith.divf %14, %15 : vector<1x8xf32>
    %c0_8 = arith.constant 0 : index
    %c0_9 = arith.constant 0 : index
    %17 = vector.load %arg5[%c0_8, %c0_9] : memref<8x8xf32, #tpu.memory_space<vmem>>, vector<8x8xf32>
    %cst_10 = arith.constant dense<0.000000e+00> : vector<1x8xf32>
    %18 = tpu.matmul %6, %17, %cst_10 {dimension_numbers = #tpu.dot_dimension_numbers<[1], [0], [0], [1], [0, 0, 1, 1], [], []>} : vector<1x8xf32>, vector<8x8xf32>, vector<1x8xf32> -> vector<1x8xf32>
    %c1 = arith.constant 1 : index
    %19 = memref.load %arg1[%c1] : memref<7xf32, #tpu.memory_space<smem>>
    %20 = vector.broadcast %19 : f32 to vector<1x8xf32>
    %21 = arith.addf %18, %20 : vector<1x8xf32>
    %22 = arith.negf %21 : vector<1x8xf32>
    %23 = math.exp %22 : vector<1x8xf32>
    %cst_11 = arith.constant 1.000000e+00 : f32
    %24 = vector.broadcast %cst_11 : f32 to vector<1x8xf32>
    %25 = arith.addf %24, %23 : vector<1x8xf32>
    %26 = arith.divf %24, %25 : vector<1x8xf32>
    %c0_12 = arith.constant 0 : index
    %c0_13 = arith.constant 0 : index
    %27 = vector.load %arg6[%c0_12, %c0_13] : memref<8x8xf32, #tpu.memory_space<vmem>>, vector<8x8xf32>
    %cst_14 = arith.constant dense<0.000000e+00> : vector<1x8xf32>
    %28 = tpu.matmul %6, %27, %cst_14 {dimension_numbers = #tpu.dot_dimension_numbers<[1], [0], [0], [1], [0, 0, 1, 1], [], []>} : vector<1x8xf32>, vector<8x8xf32>, vector<1x8xf32> -> vector<1x8xf32>
    %c2 = arith.constant 2 : index
    %29 = memref.load %arg1[%c2] : memref<7xf32, #tpu.memory_space<smem>>
    %30 = vector.broadcast %29 : f32 to vector<1x8xf32>
    %31 = arith.addf %28, %30 : vector<1x8xf32>
    %32 = arith.negf %31 : vector<1x8xf32>
    %33 = math.exp %32 : vector<1x8xf32>
    %cst_15 = arith.constant 1.000000e+00 : f32
    %34 = vector.broadcast %cst_15 : f32 to vector<1x8xf32>
    %35 = arith.addf %34, %33 : vector<1x8xf32>
    %36 = arith.divf %34, %35 : vector<1x8xf32>
    %cst_16 = arith.constant dense<0.000000e+00> : vector<8x8xf32>
    %37 = tpu.matmul %36, %26, %cst_16 {dimension_numbers = #tpu.dot_dimension_numbers<[0], [0], [1], [1], [0, 1, 1, 1], [], []>} : vector<1x8xf32>, vector<1x8xf32>, vector<8x8xf32> -> vector<8x8xf32>
    %38 = vector.shape_cast %37 : vector<8x8xf32> to vector<1x8x8xf32>
    %cst_17 = arith.constant dense<0xFF800000> : vector<1xf32>
    %39 = vector.multi_reduction <maximumf>, %38, %cst_17 [1, 2] : vector<1x8x8xf32> to vector<1xf32>
    %40 = vector.shape_cast %39 : vector<1xf32> to vector<1x1x1xf32>
    %41 = vector.extract %40[0, 0, 0] : f32 from vector<1x1x1xf32>
    %42 = vector.broadcast %41 : f32 to vector<1x1xf32>
    %43 = vector.broadcast %42 : vector<1x1xf32> to vector<8x8xf32>
    %44 = arith.subf %37, %43 : vector<8x8xf32>
    %45 = math.exp %44 : vector<8x8xf32>
    %46 = vector.shape_cast %45 : vector<8x8xf32> to vector<1x8x8xf32>
    %cst_18 = arith.constant dense<0.000000e+00> : vector<1xf32>
    %47 = vector.multi_reduction <add>, %46, %cst_18 [1, 2] : vector<1x8x8xf32> to vector<1xf32>
    %48 = vector.shape_cast %47 : vector<1xf32> to vector<1x1x1xf32>
    %49 = vector.extract %48[0, 0, 0] : f32 from vector<1x1x1xf32>
    %50 = vector.broadcast %49 : f32 to vector<1x1xf32>
    %51 = tpu.reciprocal %50 {approx = true} : vector<1x1xf32> -> vector<1x1xf32>
    %52 = vector.broadcast %51 : vector<1x1xf32> to vector<8x8xf32>
    %53 = arith.mulf %45, %52 : vector<8x8xf32>
    %54 = arith.truncf %53 : vector<8x8xf32> to vector<8x8xbf16>
    %c0_19 = arith.constant 0 : index
    %c0_20 = arith.constant 0 : index
    %c0_21 = arith.constant 0 : index
    %55 = vector.load %arg3[%c0_19, %c0_20, %c0_21] : memref<1x64x8xbf16, #tpu.memory_space<vmem>>, vector<1x64x8xbf16>
    %56 = vector.shape_cast %55 : vector<1x64x8xbf16> to vector<64x8xbf16>
    %c0_22 = arith.constant 0 : index
    %c0_23 = arith.constant 0 : index
    %57 = vector.load %arg7[%c0_22, %c0_23] : memref<8x4xbf16, #tpu.memory_space<vmem>>, vector<8x4xbf16>
    %cst_24 = arith.constant dense<0.000000e+00> : vector<64x4xf32>
    %58 = tpu.matmul %56, %57, %cst_24 {dimension_numbers = #tpu.dot_dimension_numbers<[1], [0], [0], [1], [0, 0, 1, 1], [], []>} : vector<64x8xbf16>, vector<8x4xbf16>, vector<64x4xf32> -> vector<64x4xf32>
    %c0_25 = arith.constant 0 : index
    %c0_26 = arith.constant 0 : index
    %59 = vector.load %arg8[%c0_25, %c0_26] : memref<1x4xf32, #tpu.memory_space<vmem>>, vector<1x4xf32>
    %60 = vector.broadcast %59 : vector<1x4xf32> to vector<64x4xf32>
    %61 = arith.addf %58, %60 : vector<64x4xf32>
    %cst_27 = arith.constant 0.000000e+00 : f32
    %62 = vector.broadcast %cst_27 : f32 to vector<32x4xf32>
    %c0_28 = arith.constant 0 : index
    %c0_29 = arith.constant 0 : index
    %63 = vector.load %arg21[%c0_28, %c0_29] : memref<128x4xf32, #tpu.memory_space<vmem>>, vector<32x4xf32>
    tpu.vector_store %arg21[%c0_28, %c0_29], %62 {strides = array<i32>} : memref<128x4xf32, #tpu.memory_space<vmem>>, vector<32x4xf32>,
    %cst_30 = arith.constant 0.000000e+00 : f32
    %64 = vector.broadcast %cst_30 : f32 to vector<32x4xf32>
    %c96 = arith.constant 96 : index
    %c0_31 = arith.constant 0 : index
    %65 = vector.load %arg21[%c96, %c0_31] : memref<128x4xf32, #tpu.memory_space<vmem>>, vector<32x4xf32>
    tpu.vector_store %arg21[%c96, %c0_31], %64 {strides = array<i32>} : memref<128x4xf32, #tpu.memory_space<vmem>>, vector<32x4xf32>,
    %c32 = arith.constant 32 : index
    %c0_32 = arith.constant 0 : index
    %66 = vector.load %arg21[%c32, %c0_32] : memref<128x4xf32, #tpu.memory_space<vmem>>, vector<64x4xf32>
    tpu.vector_store %arg21[%c32, %c0_32], %61 {strides = array<i32>} : memref<128x4xf32, #tpu.memory_space<vmem>>, vector<64x4xf32>,
    %c0_33 = arith.constant 0 : index
    %c0_34 = arith.constant 0 : index
    %67 = vector.load %arg2[%c0_33, %c0_34] : memref<64x1xi32, #tpu.memory_space<vmem>>, vector<64x1xi32>
    %c23 = arith.constant 23 : index
    %c0_35 = arith.constant 0 : index
    %68 = vector.load %arg21[%c23, %c0_35] : memref<128x4xf32, #tpu.memory_space<vmem>>, vector<64x4xf32>
    %c-1_i32 = arith.constant -1 : i32
    %69 = vector.broadcast %c-1_i32 : i32 to vector<64x1xi32>
    %70 = arith.addi %67, %69 : vector<64x1xi32>
    %c0_i32 = arith.constant 0 : i32
    %71 = vector.broadcast %c0_i32 : i32 to vector<64x1xi32>
    %72 = arith.cmpi sge, %70, %71 : vector<64x1xi32>
    %c-1_i32_36 = arith.constant -1 : i32
    %73 = vector.broadcast %c-1_i32_36 : i32 to vector<64x1xi32>
    %74 = arith.addi %67, %73 : vector<64x1xi32>
    %c8_i32 = arith.constant 8 : i32
    %75 = vector.broadcast %c8_i32 : i32 to vector<64x1xi32>
    %76 = arith.cmpi slt, %74, %75 : vector<64x1xi32>
    %77 = arith.andi %72, %76 : vector<64x1xi1>
    %cst_37 = arith.constant 0.000000e+00 : f32
    %78 = vector.shape_cast %77 : vector<64x1xi1> to vector<64x1xi1>
    %79 = vector.broadcast %78 : vector<64x1xi1> to vector<64x4xi1>
    %80 = vector.broadcast %cst_37 : f32 to vector<64x4xf32>
    %81 = arith.select %79, %68, %80 : vector<64x4xi1>, vector<64x4xf32>
    %82 = arith.truncf %81 : vector<64x4xf32> to vector<64x4xbf16>
    %c0_38 = arith.constant 0 : index
    %c0_39 = arith.constant 0 : index
    %83 = vector.load %arg22[%c0_38, %c0_39] : memref<64x108xbf16, #tpu.memory_space<vmem>>, vector<64x4xbf16>
    tpu.vector_store %arg22[%c0_38, %c0_39], %82 {strides = array<i32>} : memref<64x108xbf16, #tpu.memory_space<vmem>>, vector<64x4xbf16>,
    %c24 = arith.constant 24 : index
    %c0_40 = arith.constant 0 : index
    %84 = vector.load %arg21[%c24, %c0_40] : memref<128x4xf32, #tpu.memory_space<vmem>>, vector<64x4xf32>
    %85 = arith.truncf %84 : vector<64x4xf32> to vector<64x4xbf16>
    %c0_41 = arith.constant 0 : index
    %c4 = arith.constant 4 : index
    %86 = vector.load %arg22[%c0_41, %c4] : memref<64x108xbf16, #tpu.memory_space<vmem>>, vector<64x4xbf16>
    tpu.vector_store %arg22[%c0_41, %c4], %85 {strides = array<i32>} : memref<64x108xbf16, #tpu.memory_space<vmem>>, vector<64x4xbf16>,
    %c25 = arith.constant 25 : index
    %c0_42 = arith.constant 0 : index
    %87 = vector.load %arg21[%c25, %c0_42] : memref<128x4xf32, #tpu.memory_space<vmem>>, vector<64x4xf32>
    %c1_i32 = arith.constant 1 : i32
    %88 = vector.broadcast %c1_i32 : i32 to vector<64x1xi32>
    %89 = arith.addi %67, %88 : vector<64x1xi32>
    %c0_i32_43 = arith.constant 0 : i32
    %90 = vector.broadcast %c0_i32_43 : i32 to vector<64x1xi32>
    %91 = arith.cmpi sge, %89, %90 : vector<64x1xi32>
    %c1_i32_44 = arith.constant 1 : i32
    %92 = vector.broadcast %c1_i32_44 : i32 to vector<64x1xi32>
    %93 = arith.addi %67, %92 : vector<64x1xi32>
    %c8_i32_45 = arith.constant 8 : i32
    %94 = vector.broadcast %c8_i32_45 : i32 to vector<64x1xi32>
    %95 = arith.cmpi slt, %93, %94 : vector<64x1xi32>
    %96 = arith.andi %91, %95 : vector<64x1xi1>
    %cst_46 = arith.constant 0.000000e+00 : f32
    %97 = vector.shape_cast %96 : vector<64x1xi1> to vector<64x1xi1>
    %98 = vector.broadcast %97 : vector<64x1xi1> to vector<64x4xi1>
    %99 = vector.broadcast %cst_46 : f32 to vector<64x4xf32>
    %100 = arith.select %98, %87, %99 : vector<64x4xi1>, vector<64x4xf32>
    %101 = arith.truncf %100 : vector<64x4xf32> to vector<64x4xbf16>
    %c0_47 = arith.constant 0 : index
    %c8 = arith.constant 8 : index
    %102 = vector.load %arg22[%c0_47, %c8] : memref<64x108xbf16, #tpu.memory_space<vmem>>, vector<64x4xbf16>
    tpu.vector_store %arg22[%c0_47, %c8], %101 {strides = array<i32>} : memref<64x108xbf16, #tpu.memory_space<vmem>>, vector<64x4xbf16>,
    %c31 = arith.constant 31 : index
    %c0_48 = arith.constant 0 : index
    %103 = vector.load %arg21[%c31, %c0_48] : memref<128x4xf32, #tpu.memory_space<vmem>>, vector<64x4xf32>
    %c-1_i32_49 = arith.constant -1 : i32
    %104 = vector.broadcast %c-1_i32_49 : i32 to vector<64x1xi32>
    %105 = arith.addi %67, %104 : vector<64x1xi32>
    %c0_i32_50 = arith.constant 0 : i32
    %106 = vector.broadcast %c0_i32_50 : i32 to vector<64x1xi32>
    %107 = arith.cmpi sge, %105, %106 : vector<64x1xi32>
    %c-1_i32_51 = arith.constant -1 : i32
    %108 = vector.broadcast %c-1_i32_51 : i32 to vector<64x1xi32>
    %109 = arith.addi %67, %108 : vector<64x1xi32>
    %c8_i32_52 = arith.constant 8 : i32
    %110 = vector.broadcast %c8_i32_52 : i32 to vector<64x1xi32>
    %111 = arith.cmpi slt, %109, %110 : vector<64x1xi32>
    %112 = arith.andi %107, %111 : vector<64x1xi1>
    %cst_53 = arith.constant 0.000000e+00 : f32
    %113 = vector.shape_cast %112 : vector<64x1xi1> to vector<64x1xi1>
    %114 = vector.broadcast %113 : vector<64x1xi1> to vector<64x4xi1>
    %115 = vector.broadcast %cst_53 : f32 to vector<64x4xf32>
    %116 = arith.select %114, %103, %115 : vector<64x4xi1>, vector<64x4xf32>
    %117 = arith.truncf %116 : vector<64x4xf32> to vector<64x4xbf16>
    %c0_54 = arith.constant 0 : index
    %c12 = arith.constant 12 : index
    %118 = vector.load %arg22[%c0_54, %c12] : memref<64x108xbf16, #tpu.memory_space<vmem>>, vector<64x4xbf16>
    tpu.vector_store %arg22[%c0_54, %c12], %117 {strides = array<i32>} : memref<64x108xbf16, #tpu.memory_space<vmem>>, vector<64x4xbf16>,
    %c32_55 = arith.constant 32 : index
    %c0_56 = arith.constant 0 : index
    %119 = vector.load %arg21[%c32_55, %c0_56] : memref<128x4xf32, #tpu.memory_space<vmem>>, vector<64x4xf32>
    %120 = arith.truncf %119 : vector<64x4xf32> to vector<64x4xbf16>
    %c0_57 = arith.constant 0 : index
    %c16 = arith.constant 16 : index
    %121 = vector.load %arg22[%c0_57, %c16] : memref<64x108xbf16, #tpu.memory_space<vmem>>, vector<64x4xbf16>
    tpu.vector_store %arg22[%c0_57, %c16], %120 {strides = array<i32>} : memref<64x108xbf16, #tpu.memory_space<vmem>>, vector<64x4xbf16>,
    %c33 = arith.constant 33 : index
    %c0_58 = arith.constant 0 : index
    %122 = vector.load %arg21[%c33, %c0_58] : memref<128x4xf32, #tpu.memory_space<vmem>>, vector<64x4xf32>
    %c1_i32_59 = arith.constant 1 : i32
    %123 = vector.broadcast %c1_i32_59 : i32 to vector<64x1xi32>
    %124 = arith.addi %67, %123 : vector<64x1xi32>
    %c0_i32_60 = arith.constant 0 : i32
    %125 = vector.broadcast %c0_i32_60 : i32 to vector<64x1xi32>
    %126 = arith.cmpi sge, %124, %125 : vector<64x1xi32>
    %c1_i32_61 = arith.constant 1 : i32
    %127 = vector.broadcast %c1_i32_61 : i32 to vector<64x1xi32>
    %128 = arith.addi %67, %127 : vector<64x1xi32>
    %c8_i32_62 = arith.constant 8 : i32
    %129 = vector.broadcast %c8_i32_62 : i32 to vector<64x1xi32>
    %130 = arith.cmpi slt, %128, %129 : vector<64x1xi32>
    %131 = arith.andi %126, %130 : vector<64x1xi1>
    %cst_63 = arith.constant 0.000000e+00 : f32
    %132 = vector.shape_cast %131 : vector<64x1xi1> to vector<64x1xi1>
    %133 = vector.broadcast %132 : vector<64x1xi1> to vector<64x4xi1>
    %134 = vector.broadcast %cst_63 : f32 to vector<64x4xf32>
    %135 = arith.select %133, %122, %134 : vector<64x4xi1>, vector<64x4xf32>
    %136 = arith.truncf %135 : vector<64x4xf32> to vector<64x4xbf16>
    %c0_64 = arith.constant 0 : index
    %c20 = arith.constant 20 : index
    %137 = vector.load %arg22[%c0_64, %c20] : memref<64x108xbf16, #tpu.memory_space<vmem>>, vector<64x4xbf16>
    tpu.vector_store %arg22[%c0_64, %c20], %136 {strides = array<i32>} : memref<64x108xbf16, #tpu.memory_space<vmem>>, vector<64x4xbf16>,
    %c39 = arith.constant 39 : index
    %c0_65 = arith.constant 0 : index
    %138 = vector.load %arg21[%c39, %c0_65] : memref<128x4xf32, #tpu.memory_space<vmem>>, vector<64x4xf32>
    %c-1_i32_66 = arith.constant -1 : i32
    %139 = vector.broadcast %c-1_i32_66 : i32 to vector<64x1xi32>
    %140 = arith.addi %67, %139 : vector<64x1xi32>
    %c0_i32_67 = arith.constant 0 : i32
    %141 = vector.broadcast %c0_i32_67 : i32 to vector<64x1xi32>
    %142 = arith.cmpi sge, %140, %141 : vector<64x1xi32>
    %c-1_i32_68 = arith.constant -1 : i32
    %143 = vector.broadcast %c-1_i32_68 : i32 to vector<64x1xi32>
    %144 = arith.addi %67, %143 : vector<64x1xi32>
    %c8_i32_69 = arith.constant 8 : i32
    %145 = vector.broadcast %c8_i32_69 : i32 to vector<64x1xi32>
    %146 = arith.cmpi slt, %144, %145 : vector<64x1xi32>
    %147 = arith.andi %142, %146 : vector<64x1xi1>
    %cst_70 = arith.constant 0.000000e+00 : f32
    %148 = vector.shape_cast %147 : vector<64x1xi1> to vector<64x1xi1>
    %149 = vector.broadcast %148 : vector<64x1xi1> to vector<64x4xi1>
    %150 = vector.broadcast %cst_70 : f32 to vector<64x4xf32>
    %151 = arith.select %149, %138, %150 : vector<64x4xi1>, vector<64x4xf32>
    %152 = arith.truncf %151 : vector<64x4xf32> to vector<64x4xbf16>
    %c0_71 = arith.constant 0 : index
    %c24_72 = arith.constant 24 : index
    %153 = vector.load %arg22[%c0_71, %c24_72] : memref<64x108xbf16, #tpu.memory_space<vmem>>, vector<64x4xbf16>
    tpu.vector_store %arg22[%c0_71, %c24_72], %152 {strides = array<i32>} : memref<64x108xbf16, #tpu.memory_space<vmem>>, vector<64x4xbf16>,
    %c40 = arith.constant 40 : index
    %c0_73 = arith.constant 0 : index
    %154 = vector.load %arg21[%c40, %c0_73] : memref<128x4xf32, #tpu.memory_space<vmem>>, vector<64x4xf32>
    %155 = arith.truncf %154 : vector<64x4xf32> to vector<64x4xbf16>
    %c0_74 = arith.constant 0 : index
    %c28 = arith.constant 28 : index
    %156 = vector.load %arg22[%c0_74, %c28] : memref<64x108xbf16, #tpu.memory_space<vmem>>, vector<64x4xbf16>
    tpu.vector_store %arg22[%c0_74, %c28], %155 {strides = array<i32>} : memref<64x108xbf16, #tpu.memory_space<vmem>>, vector<64x4xbf16>,
    %c41 = arith.constant 41 : index
    %c0_75 = arith.constant 0 : index
    %157 = vector.load %arg21[%c41, %c0_75] : memref<128x4xf32, #tpu.memory_space<vmem>>, vector<64x4xf32>
    %c1_i32_76 = arith.constant 1 : i32
    %158 = vector.broadcast %c1_i32_76 : i32 to vector<64x1xi32>
    %159 = arith.addi %67, %158 : vector<64x1xi32>
    %c0_i32_77 = arith.constant 0 : i32
    %160 = vector.broadcast %c0_i32_77 : i32 to vector<64x1xi32>
    %161 = arith.cmpi sge, %159, %160 : vector<64x1xi32>
    %c1_i32_78 = arith.constant 1 : i32
    %162 = vector.broadcast %c1_i32_78 : i32 to vector<64x1xi32>
    %163 = arith.addi %67, %162 : vector<64x1xi32>
    %c8_i32_79 = arith.constant 8 : i32
    %164 = vector.broadcast %c8_i32_79 : i32 to vector<64x1xi32>
    %165 = arith.cmpi slt, %163, %164 : vector<64x1xi32>
    %166 = arith.andi %161, %165 : vector<64x1xi1>
    %cst_80 = arith.constant 0.000000e+00 : f32
    %167 = vector.shape_cast %166 : vector<64x1xi1> to vector<64x1xi1>
    %168 = vector.broadcast %167 : vector<64x1xi1> to vector<64x4xi1>
    %169 = vector.broadcast %cst_80 : f32 to vector<64x4xf32>
    %170 = arith.select %168, %157, %169 : vector<64x4xi1>, vector<64x4xf32>
    %171 = arith.truncf %170 : vector<64x4xf32> to vector<64x4xbf16>
    %c0_81 = arith.constant 0 : index
    %c32_82 = arith.constant 32 : index
    %172 = vector.load %arg22[%c0_81, %c32_82] : memref<64x108xbf16, #tpu.memory_space<vmem>>, vector<64x4xbf16>
    tpu.vector_store %arg22[%c0_81, %c32_82], %171 {strides = array<i32>} : memref<64x108xbf16, #tpu.memory_space<vmem>>, vector<64x4xbf16>,
    %c14 = arith.constant 14 : index
    %c0_83 = arith.constant 0 : index
    %173 = vector.load %arg21[%c14, %c0_83] : memref<128x4xf32, #tpu.memory_space<vmem>>, vector<64x4xf32>
    %c-2_i32 = arith.constant -2 : i32
    %174 = vector.broadcast %c-2_i32 : i32 to vector<64x1xi32>
    %175 = arith.addi %67, %174 : vector<64x1xi32>
    %c0_i32_84 = arith.constant 0 : i32
    %176 = vector.broadcast %c0_i32_84 : i32 to vector<64x1xi32>
    %177 = arith.cmpi sge, %175, %176 : vector<64x1xi32>
    %c-2_i32_85 = arith.constant -2 : i32
    %178 = vector.broadcast %c-2_i32_85 : i32 to vector<64x1xi32>
    %179 = arith.addi %67, %178 : vector<64x1xi32>
    %c8_i32_86 = arith.constant 8 : i32
    %180 = vector.broadcast %c8_i32_86 : i32 to vector<64x1xi32>
    %181 = arith.cmpi slt, %179, %180 : vector<64x1xi32>
    %182 = arith.andi %177, %181 : vector<64x1xi1>
    %cst_87 = arith.constant 0.000000e+00 : f32
    %183 = vector.shape_cast %182 : vector<64x1xi1> to vector<64x1xi1>
    %184 = vector.broadcast %183 : vector<64x1xi1> to vector<64x4xi1>
    %185 = vector.broadcast %cst_87 : f32 to vector<64x4xf32>
    %186 = arith.select %184, %173, %185 : vector<64x4xi1>, vector<64x4xf32>
    %187 = arith.truncf %186 : vector<64x4xf32> to vector<64x4xbf16>
    %c0_88 = arith.constant 0 : index
    %c36 = arith.constant 36 : index
    %188 = vector.load %arg22[%c0_88, %c36] : memref<64x108xbf16, #tpu.memory_space<vmem>>, vector<64x4xbf16>
    tpu.vector_store %arg22[%c0_88, %c36], %187 {strides = array<i32>} : memref<64x108xbf16, #tpu.memory_space<vmem>>, vector<64x4xbf16>,
    %c16_89 = arith.constant 16 : index
    %c0_90 = arith.constant 0 : index
    %189 = vector.load %arg21[%c16_89, %c0_90] : memref<128x4xf32, #tpu.memory_space<vmem>>, vector<64x4xf32>
    %190 = arith.truncf %189 : vector<64x4xf32> to vector<64x4xbf16>
    %c0_91 = arith.constant 0 : index
    %c40_92 = arith.constant 40 : index
    %191 = vector.load %arg22[%c0_91, %c40_92] : memref<64x108xbf16, #tpu.memory_space<vmem>>, vector<64x4xbf16>
    tpu.vector_store %arg22[%c0_91, %c40_92], %190 {strides = array<i32>} : memref<64x108xbf16, #tpu.memory_space<vmem>>, vector<64x4xbf16>,
    %c18 = arith.constant 18 : index
    %c0_93 = arith.constant 0 : index
    %192 = vector.load %arg21[%c18, %c0_93] : memref<128x4xf32, #tpu.memory_space<vmem>>, vector<64x4xf32>
    %c2_i32 = arith.constant 2 : i32
    %193 = vector.broadcast %c2_i32 : i32 to vector<64x1xi32>
    %194 = arith.addi %67, %193 : vector<64x1xi32>
    %c0_i32_94 = arith.constant 0 : i32
    %195 = vector.broadcast %c0_i32_94 : i32 to vector<64x1xi32>
    %196 = arith.cmpi sge, %194, %195 : vector<64x1xi32>
    %c2_i32_95 = arith.constant 2 : i32
    %197 = vector.broadcast %c2_i32_95 : i32 to vector<64x1xi32>
    %198 = arith.addi %67, %197 : vector<64x1xi32>
    %c8_i32_96 = arith.constant 8 : i32
    %199 = vector.broadcast %c8_i32_96 : i32 to vector<64x1xi32>
    %200 = arith.cmpi slt, %198, %199 : vector<64x1xi32>
    %201 = arith.andi %196, %200 : vector<64x1xi1>
    %cst_97 = arith.constant 0.000000e+00 : f32
    %202 = vector.shape_cast %201 : vector<64x1xi1> to vector<64x1xi1>
    %203 = vector.broadcast %202 : vector<64x1xi1> to vector<64x4xi1>
    %204 = vector.broadcast %cst_97 : f32 to vector<64x4xf32>
    %205 = arith.select %203, %192, %204 : vector<64x4xi1>, vector<64x4xf32>
    %206 = arith.truncf %205 : vector<64x4xf32> to vector<64x4xbf16>
    %c0_98 = arith.constant 0 : index
    %c44 = arith.constant 44 : index
    %207 = vector.load %arg22[%c0_98, %c44] : memref<64x108xbf16, #tpu.memory_space<vmem>>, vector<64x4xbf16>
    tpu.vector_store %arg22[%c0_98, %c44], %206 {strides = array<i32>} : memref<64x108xbf16, #tpu.memory_space<vmem>>, vector<64x4xbf16>,
    %c30 = arith.constant 30 : index
    %c0_99 = arith.constant 0 : index
    %208 = vector.load %arg21[%c30, %c0_99] : memref<128x4xf32, #tpu.memory_space<vmem>>, vector<64x4xf32>
    %c-2_i32_100 = arith.constant -2 : i32
    %209 = vector.broadcast %c-2_i32_100 : i32 to vector<64x1xi32>
    %210 = arith.addi %67, %209 : vector<64x1xi32>
    %c0_i32_101 = arith.constant 0 : i32
    %211 = vector.broadcast %c0_i32_101 : i32 to vector<64x1xi32>
    %212 = arith.cmpi sge, %210, %211 : vector<64x1xi32>
    %c-2_i32_102 = arith.constant -2 : i32
    %213 = vector.broadcast %c-2_i32_102 : i32 to vector<64x1xi32>
    %214 = arith.addi %67, %213 : vector<64x1xi32>
    %c8_i32_103 = arith.constant 8 : i32
    %215 = vector.broadcast %c8_i32_103 : i32 to vector<64x1xi32>
    %216 = arith.cmpi slt, %214, %215 : vector<64x1xi32>
    %217 = arith.andi %212, %216 : vector<64x1xi1>
    %cst_104 = arith.constant 0.000000e+00 : f32
    %218 = vector.shape_cast %217 : vector<64x1xi1> to vector<64x1xi1>
    %219 = vector.broadcast %218 : vector<64x1xi1> to vector<64x4xi1>
    %220 = vector.broadcast %cst_104 : f32 to vector<64x4xf32>
    %221 = arith.select %219, %208, %220 : vector<64x4xi1>, vector<64x4xf32>
    %222 = arith.truncf %221 : vector<64x4xf32> to vector<64x4xbf16>
    %c0_105 = arith.constant 0 : index
    %c48 = arith.constant 48 : index
    %223 = vector.load %arg22[%c0_105, %c48] : memref<64x108xbf16, #tpu.memory_space<vmem>>, vector<64x4xbf16>
    tpu.vector_store %arg22[%c0_105, %c48], %222 {strides = array<i32>} : memref<64x108xbf16, #tpu.memory_space<vmem>>, vector<64x4xbf16>,
    %c32_106 = arith.constant 32 : index
    %c0_107 = arith.constant 0 : index
    %224 = vector.load %arg21[%c32_106, %c0_107] : memref<128x4xf32, #tpu.memory_space<vmem>>, vector<64x4xf32>
    %225 = arith.truncf %224 : vector<64x4xf32> to vector<64x4xbf16>
    %c0_108 = arith.constant 0 : index
    %c52 = arith.constant 52 : index
    %226 = vector.load %arg22[%c0_108, %c52] : memref<64x108xbf16, #tpu.memory_space<vmem>>, vector<64x4xbf16>
    tpu.vector_store %arg22[%c0_108, %c52], %225 {strides = array<i32>} : memref<64x108xbf16, #tpu.memory_space<vmem>>, vector<64x4xbf16>,
    %c34 = arith.constant 34 : index
    %c0_109 = arith.constant 0 : index
    %227 = vector.load %arg21[%c34, %c0_109] : memref<128x4xf32, #tpu.memory_space<vmem>>, vector<64x4xf32>
    %c2_i32_110 = arith.constant 2 : i32
    %228 = vector.broadcast %c2_i32_110 : i32 to vector<64x1xi32>
    %229 = arith.addi %67, %228 : vector<64x1xi32>
    %c0_i32_111 = arith.constant 0 : i32
    %230 = vector.broadcast %c0_i32_111 : i32 to vector<64x1xi32>
    %231 = arith.cmpi sge, %229, %230 : vector<64x1xi32>
    %c2_i32_112 = arith.constant 2 : i32
    %232 = vector.broadcast %c2_i32_112 : i32 to vector<64x1xi32>
    %233 = arith.addi %67, %232 : vector<64x1xi32>
    %c8_i32_113 = arith.constant 8 : i32
    %234 = vector.broadcast %c8_i32_113 : i32 to vector<64x1xi32>
    %235 = arith.cmpi slt, %233, %234 : vector<64x1xi32>
    %236 = arith.andi %231, %235 : vector<64x1xi1>
    %cst_114 = arith.constant 0.000000e+00 : f32
    %237 = vector.shape_cast %236 : vector<64x1xi1> to vector<64x1xi1>
    %238 = vector.broadcast %237 : vector<64x1xi1> to vector<64x4xi1>
    %239 = vector.broadcast %cst_114 : f32 to vector<64x4xf32>
    %240 = arith.select %238, %227, %239 : vector<64x4xi1>, vector<64x4xf32>
    %241 = arith.truncf %240 : vector<64x4xf32> to vector<64x4xbf16>
    %c0_115 = arith.constant 0 : index
    %c56 = arith.constant 56 : index
    %242 = vector.load %arg22[%c0_115, %c56] : memref<64x108xbf16, #tpu.memory_space<vmem>>, vector<64x4xbf16>
    tpu.vector_store %arg22[%c0_115, %c56], %241 {strides = array<i32>} : memref<64x108xbf16, #tpu.memory_space<vmem>>, vector<64x4xbf16>,
    %c46 = arith.constant 46 : index
    %c0_116 = arith.constant 0 : index
    %243 = vector.load %arg21[%c46, %c0_116] : memref<128x4xf32, #tpu.memory_space<vmem>>, vector<64x4xf32>
    %c-2_i32_117 = arith.constant -2 : i32
    %244 = vector.broadcast %c-2_i32_117 : i32 to vector<64x1xi32>
    %245 = arith.addi %67, %244 : vector<64x1xi32>
    %c0_i32_118 = arith.constant 0 : i32
    %246 = vector.broadcast %c0_i32_118 : i32 to vector<64x1xi32>
    %247 = arith.cmpi sge, %245, %246 : vector<64x1xi32>
    %c-2_i32_119 = arith.constant -2 : i32
    %248 = vector.broadcast %c-2_i32_119 : i32 to vector<64x1xi32>
    %249 = arith.addi %67, %248 : vector<64x1xi32>
    %c8_i32_120 = arith.constant 8 : i32
    %250 = vector.broadcast %c8_i32_120 : i32 to vector<64x1xi32>
    %251 = arith.cmpi slt, %249, %250 : vector<64x1xi32>
    %252 = arith.andi %247, %251 : vector<64x1xi1>
    %cst_121 = arith.constant 0.000000e+00 : f32
    %253 = vector.shape_cast %252 : vector<64x1xi1> to vector<64x1xi1>
    %254 = vector.broadcast %253 : vector<64x1xi1> to vector<64x4xi1>
    %255 = vector.broadcast %cst_121 : f32 to vector<64x4xf32>
    %256 = arith.select %254, %243, %255 : vector<64x4xi1>, vector<64x4xf32>
    %257 = arith.truncf %256 : vector<64x4xf32> to vector<64x4xbf16>
    %c0_122 = arith.constant 0 : index
    %c60 = arith.constant 60 : index
    %258 = vector.load %arg22[%c0_122, %c60] : memref<64x108xbf16, #tpu.memory_space<vmem>>, vector<64x4xbf16>
    tpu.vector_store %arg22[%c0_122, %c60], %257 {strides = array<i32>} : memref<64x108xbf16, #tpu.memory_space<vmem>>, vector<64x4xbf16>,
    %c48_123 = arith.constant 48 : index
    %c0_124 = arith.constant 0 : index
    %259 = vector.load %arg21[%c48_123, %c0_124] : memref<128x4xf32, #tpu.memory_space<vmem>>, vector<64x4xf32>
    %260 = arith.truncf %259 : vector<64x4xf32> to vector<64x4xbf16>
    %c0_125 = arith.constant 0 : index
    %c64 = arith.constant 64 : index
    %261 = vector.load %arg22[%c0_125, %c64] : memref<64x108xbf16, #tpu.memory_space<vmem>>, vector<64x4xbf16>
    tpu.vector_store %arg22[%c0_125, %c64], %260 {strides = array<i32>} : memref<64x108xbf16, #tpu.memory_space<vmem>>, vector<64x4xbf16>,
    %c50 = arith.constant 50 : index
    %c0_126 = arith.constant 0 : index
    %262 = vector.load %arg21[%c50, %c0_126] : memref<128x4xf32, #tpu.memory_space<vmem>>, vector<64x4xf32>
    %c2_i32_127 = arith.constant 2 : i32
    %263 = vector.broadcast %c2_i32_127 : i32 to vector<64x1xi32>
    %264 = arith.addi %67, %263 : vector<64x1xi32>
    %c0_i32_128 = arith.constant 0 : i32
    %265 = vector.broadcast %c0_i32_128 : i32 to vector<64x1xi32>
    %266 = arith.cmpi sge, %264, %265 : vector<64x1xi32>
    %c2_i32_129 = arith.constant 2 : i32
    %267 = vector.broadcast %c2_i32_129 : i32 to vector<64x1xi32>
    %268 = arith.addi %67, %267 : vector<64x1xi32>
    %c8_i32_130 = arith.constant 8 : i32
    %269 = vector.broadcast %c8_i32_130 : i32 to vector<64x1xi32>
    %270 = arith.cmpi slt, %268, %269 : vector<64x1xi32>
    %271 = arith.andi %266, %270 : vector<64x1xi1>
    %cst_131 = arith.constant 0.000000e+00 : f32
    %272 = vector.shape_cast %271 : vector<64x1xi1> to vector<64x1xi1>
    %273 = vector.broadcast %272 : vector<64x1xi1> to vector<64x4xi1>
    %274 = vector.broadcast %cst_131 : f32 to vector<64x4xf32>
    %275 = arith.select %273, %262, %274 : vector<64x4xi1>, vector<64x4xf32>
    %276 = arith.truncf %275 : vector<64x4xf32> to vector<64x4xbf16>
    %c0_132 = arith.constant 0 : index
    %c68 = arith.constant 68 : index
    %277 = vector.load %arg22[%c0_132, %c68] : memref<64x108xbf16, #tpu.memory_space<vmem>>, vector<64x4xbf16>
    tpu.vector_store %arg22[%c0_132, %c68], %276 {strides = array<i32>} : memref<64x108xbf16, #tpu.memory_space<vmem>>, vector<64x4xbf16>,
    %c5 = arith.constant 5 : index
    %c0_133 = arith.constant 0 : index
    %278 = vector.load %arg21[%c5, %c0_133] : memref<128x4xf32, #tpu.memory_space<vmem>>, vector<64x4xf32>
    %c-3_i32 = arith.constant -3 : i32
    %279 = vector.broadcast %c-3_i32 : i32 to vector<64x1xi32>
    %280 = arith.addi %67, %279 : vector<64x1xi32>
    %c0_i32_134 = arith.constant 0 : i32
    %281 = vector.broadcast %c0_i32_134 : i32 to vector<64x1xi32>
    %282 = arith.cmpi sge, %280, %281 : vector<64x1xi32>
    %c-3_i32_135 = arith.constant -3 : i32
    %283 = vector.broadcast %c-3_i32_135 : i32 to vector<64x1xi32>
    %284 = arith.addi %67, %283 : vector<64x1xi32>
    %c8_i32_136 = arith.constant 8 : i32
    %285 = vector.broadcast %c8_i32_136 : i32 to vector<64x1xi32>
    %286 = arith.cmpi slt, %284, %285 : vector<64x1xi32>
    %287 = arith.andi %282, %286 : vector<64x1xi1>
    %cst_137 = arith.constant 0.000000e+00 : f32
    %288 = vector.shape_cast %287 : vector<64x1xi1> to vector<64x1xi1>
    %289 = vector.broadcast %288 : vector<64x1xi1> to vector<64x4xi1>
    %290 = vector.broadcast %cst_137 : f32 to vector<64x4xf32>
    %291 = arith.select %289, %278, %290 : vector<64x4xi1>, vector<64x4xf32>
    %292 = arith.truncf %291 : vector<64x4xf32> to vector<64x4xbf16>
    %c0_138 = arith.constant 0 : index
    %c72 = arith.constant 72 : index
    %293 = vector.load %arg22[%c0_138, %c72] : memref<64x108xbf16, #tpu.memory_space<vmem>>, vector<64x4xbf16>
    tpu.vector_store %arg22[%c0_138, %c72], %292 {strides = array<i32>} : memref<64x108xbf16, #tpu.memory_space<vmem>>, vector<64x4xbf16>,
    %c8_139 = arith.constant 8 : index
    %c0_140 = arith.constant 0 : index
    %294 = vector.load %arg21[%c8_139, %c0_140] : memref<128x4xf32, #tpu.memory_space<vmem>>, vector<64x4xf32>
    %295 = arith.truncf %294 : vector<64x4xf32> to vector<64x4xbf16>
    %c0_141 = arith.constant 0 : index
    %c76 = arith.constant 76 : index
    %296 = vector.load %arg22[%c0_141, %c76] : memref<64x108xbf16, #tpu.memory_space<vmem>>, vector<64x4xbf16>
    tpu.vector_store %arg22[%c0_141, %c76], %295 {strides = array<i32>} : memref<64x108xbf16, #tpu.memory_space<vmem>>, vector<64x4xbf16>,
    %c11 = arith.constant 11 : index
    %c0_142 = arith.constant 0 : index
    %297 = vector.load %arg21[%c11, %c0_142] : memref<128x4xf32, #tpu.memory_space<vmem>>, vector<64x4xf32>
    %c3_i32 = arith.constant 3 : i32
    %298 = vector.broadcast %c3_i32 : i32 to vector<64x1xi32>
    %299 = arith.addi %67, %298 : vector<64x1xi32>
    %c0_i32_143 = arith.constant 0 : i32
    %300 = vector.broadcast %c0_i32_143 : i32 to vector<64x1xi32>
    %301 = arith.cmpi sge, %299, %300 : vector<64x1xi32>
    %c3_i32_144 = arith.constant 3 : i32
    %302 = vector.broadcast %c3_i32_144 : i32 to vector<64x1xi32>
    %303 = arith.addi %67, %302 : vector<64x1xi32>
    %c8_i32_145 = arith.constant 8 : i32
    %304 = vector.broadcast %c8_i32_145 : i32 to vector<64x1xi32>
    %305 = arith.cmpi slt, %303, %304 : vector<64x1xi32>
    %306 = arith.andi %301, %305 : vector<64x1xi1>
    %cst_146 = arith.constant 0.000000e+00 : f32
    %307 = vector.shape_cast %306 : vector<64x1xi1> to vector<64x1xi1>
    %308 = vector.broadcast %307 : vector<64x1xi1> to vector<64x4xi1>
    %309 = vector.broadcast %cst_146 : f32 to vector<64x4xf32>
    %310 = arith.select %308, %297, %309 : vector<64x4xi1>, vector<64x4xf32>
    %311 = arith.truncf %310 : vector<64x4xf32> to vector<64x4xbf16>
    %c0_147 = arith.constant 0 : index
    %c80 = arith.constant 80 : index
    %312 = vector.load %arg22[%c0_147, %c80] : memref<64x108xbf16, #tpu.memory_space<vmem>>, vector<64x4xbf16>
    tpu.vector_store %arg22[%c0_147, %c80], %311 {strides = array<i32>} : memref<64x108xbf16, #tpu.memory_space<vmem>>, vector<64x4xbf16>,
    %c29 = arith.constant 29 : index
    %c0_148 = arith.constant 0 : index
    %313 = vector.load %arg21[%c29, %c0_148] : memref<128x4xf32, #tpu.memory_space<vmem>>, vector<64x4xf32>
    %c-3_i32_149 = arith.constant -3 : i32
    %314 = vector.broadcast %c-3_i32_149 : i32 to vector<64x1xi32>
    %315 = arith.addi %67, %314 : vector<64x1xi32>
    %c0_i32_150 = arith.constant 0 : i32
    %316 = vector.broadcast %c0_i32_150 : i32 to vector<64x1xi32>
    %317 = arith.cmpi sge, %315, %316 : vector<64x1xi32>
    %c-3_i32_151 = arith.constant -3 : i32
    %318 = vector.broadcast %c-3_i32_151 : i32 to vector<64x1xi32>
    %319 = arith.addi %67, %318 : vector<64x1xi32>
    %c8_i32_152 = arith.constant 8 : i32
    %320 = vector.broadcast %c8_i32_152 : i32 to vector<64x1xi32>
    %321 = arith.cmpi slt, %319, %320 : vector<64x1xi32>
    %322 = arith.andi %317, %321 : vector<64x1xi1>
    %cst_153 = arith.constant 0.000000e+00 : f32
    %323 = vector.shape_cast %322 : vector<64x1xi1> to vector<64x1xi1>
    %324 = vector.broadcast %323 : vector<64x1xi1> to vector<64x4xi1>
    %325 = vector.broadcast %cst_153 : f32 to vector<64x4xf32>
    %326 = arith.select %324, %313, %325 : vector<64x4xi1>, vector<64x4xf32>
    %327 = arith.truncf %326 : vector<64x4xf32> to vector<64x4xbf16>
    %c0_154 = arith.constant 0 : index
    %c84 = arith.constant 84 : index
    %328 = vector.load %arg22[%c0_154, %c84] : memref<64x108xbf16, #tpu.memory_space<vmem>>, vector<64x4xbf16>
    tpu.vector_store %arg22[%c0_154, %c84], %327 {strides = array<i32>} : memref<64x108xbf16, #tpu.memory_space<vmem>>, vector<64x4xbf16>,
    %c32_155 = arith.constant 32 : index
    %c0_156 = arith.constant 0 : index
    %329 = vector.load %arg21[%c32_155, %c0_156] : memref<128x4xf32, #tpu.memory_space<vmem>>, vector<64x4xf32>
    %330 = arith.truncf %329 : vector<64x4xf32> to vector<64x4xbf16>
    %c0_157 = arith.constant 0 : index
    %c88 = arith.constant 88 : index
    %331 = vector.load %arg22[%c0_157, %c88] : memref<64x108xbf16, #tpu.memory_space<vmem>>, vector<64x4xbf16>
    tpu.vector_store %arg22[%c0_157, %c88], %330 {strides = array<i32>} : memref<64x108xbf16, #tpu.memory_space<vmem>>, vector<64x4xbf16>,
    %c35 = arith.constant 35 : index
    %c0_158 = arith.constant 0 : index
    %332 = vector.load %arg21[%c35, %c0_158] : memref<128x4xf32, #tpu.memory_space<vmem>>, vector<64x4xf32>
    %c3_i32_159 = arith.constant 3 : i32
    %333 = vector.broadcast %c3_i32_159 : i32 to vector<64x1xi32>
    %334 = arith.addi %67, %333 : vector<64x1xi32>
    %c0_i32_160 = arith.constant 0 : i32
    %335 = vector.broadcast %c0_i32_160 : i32 to vector<64x1xi32>
    %336 = arith.cmpi sge, %334, %335 : vector<64x1xi32>
    %c3_i32_161 = arith.constant 3 : i32
    %337 = vector.broadcast %c3_i32_161 : i32 to vector<64x1xi32>
    %338 = arith.addi %67, %337 : vector<64x1xi32>
    %c8_i32_162 = arith.constant 8 : i32
    %339 = vector.broadcast %c8_i32_162 : i32 to vector<64x1xi32>
    %340 = arith.cmpi slt, %338, %339 : vector<64x1xi32>
    %341 = arith.andi %336, %340 : vector<64x1xi1>
    %cst_163 = arith.constant 0.000000e+00 : f32
    %342 = vector.shape_cast %341 : vector<64x1xi1> to vector<64x1xi1>
    %343 = vector.broadcast %342 : vector<64x1xi1> to vector<64x4xi1>
    %344 = vector.broadcast %cst_163 : f32 to vector<64x4xf32>
    %345 = arith.select %343, %332, %344 : vector<64x4xi1>, vector<64x4xf32>
    %346 = arith.truncf %345 : vector<64x4xf32> to vector<64x4xbf16>
    %c0_164 = arith.constant 0 : index
    %c92 = arith.constant 92 : index
    %347 = vector.load %arg22[%c0_164, %c92] : memref<64x108xbf16, #tpu.memory_space<vmem>>, vector<64x4xbf16>
    tpu.vector_store %arg22[%c0_164, %c92], %346 {strides = array<i32>} : memref<64x108xbf16, #tpu.memory_space<vmem>>, vector<64x4xbf16>,
    %c53 = arith.constant 53 : index
    %c0_165 = arith.constant 0 : index
    %348 = vector.load %arg21[%c53, %c0_165] : memref<128x4xf32, #tpu.memory_space<vmem>>, vector<64x4xf32>
    %c-3_i32_166 = arith.constant -3 : i32
    %349 = vector.broadcast %c-3_i32_166 : i32 to vector<64x1xi32>
    %350 = arith.addi %67, %349 : vector<64x1xi32>
    %c0_i32_167 = arith.constant 0 : i32
    %351 = vector.broadcast %c0_i32_167 : i32 to vector<64x1xi32>
    %352 = arith.cmpi sge, %350, %351 : vector<64x1xi32>
    %c-3_i32_168 = arith.constant -3 : i32
    %353 = vector.broadcast %c-3_i32_168 : i32 to vector<64x1xi32>
    %354 = arith.addi %67, %353 : vector<64x1xi32>
    %c8_i32_169 = arith.constant 8 : i32
    %355 = vector.broadcast %c8_i32_169 : i32 to vector<64x1xi32>
    %356 = arith.cmpi slt, %354, %355 : vector<64x1xi32>
    %357 = arith.andi %352, %356 : vector<64x1xi1>
    %cst_170 = arith.constant 0.000000e+00 : f32
    %358 = vector.shape_cast %357 : vector<64x1xi1> to vector<64x1xi1>
    %359 = vector.broadcast %358 : vector<64x1xi1> to vector<64x4xi1>
    %360 = vector.broadcast %cst_170 : f32 to vector<64x4xf32>
    %361 = arith.select %359, %348, %360 : vector<64x4xi1>, vector<64x4xf32>
    %362 = arith.truncf %361 : vector<64x4xf32> to vector<64x4xbf16>
    %c0_171 = arith.constant 0 : index
    %c96_172 = arith.constant 96 : index
    %363 = vector.load %arg22[%c0_171, %c96_172] : memref<64x108xbf16, #tpu.memory_space<vmem>>, vector<64x4xbf16>
    tpu.vector_store %arg22[%c0_171, %c96_172], %362 {strides = array<i32>} : memref<64x108xbf16, #tpu.memory_space<vmem>>, vector<64x4xbf16>,
    %c56_173 = arith.constant 56 : index
    %c0_174 = arith.constant 0 : index
    %364 = vector.load %arg21[%c56_173, %c0_174] : memref<128x4xf32, #tpu.memory_space<vmem>>, vector<64x4xf32>
    %365 = arith.truncf %364 : vector<64x4xf32> to vector<64x4xbf16>
    %c0_175 = arith.constant 0 : index
    %c100 = arith.constant 100 : index
    %366 = vector.load %arg22[%c0_175, %c100] : memref<64x108xbf16, #tpu.memory_space<vmem>>, vector<64x4xbf16>
    tpu.vector_store %arg22[%c0_175, %c100], %365 {strides = array<i32>} : memref<64x108xbf16, #tpu.memory_space<vmem>>, vector<64x4xbf16>,
    %c59 = arith.constant 59 : index
    %c0_176 = arith.constant 0 : index
    %367 = vector.load %arg21[%c59, %c0_176] : memref<128x4xf32, #tpu.memory_space<vmem>>, vector<64x4xf32>
    %c3_i32_177 = arith.constant 3 : i32
    %368 = vector.broadcast %c3_i32_177 : i32 to vector<64x1xi32>
    %369 = arith.addi %67, %368 : vector<64x1xi32>
    %c0_i32_178 = arith.constant 0 : i32
    %370 = vector.broadcast %c0_i32_178 : i32 to vector<64x1xi32>
    %371 = arith.cmpi sge, %369, %370 : vector<64x1xi32>
    %c3_i32_179 = arith.constant 3 : i32
    %372 = vector.broadcast %c3_i32_179 : i32 to vector<64x1xi32>
    %373 = arith.addi %67, %372 : vector<64x1xi32>
    %c8_i32_180 = arith.constant 8 : i32
    %374 = vector.broadcast %c8_i32_180 : i32 to vector<64x1xi32>
    %375 = arith.cmpi slt, %373, %374 : vector<64x1xi32>
    %376 = arith.andi %371, %375 : vector<64x1xi1>
    %cst_181 = arith.constant 0.000000e+00 : f32
    %377 = vector.shape_cast %376 : vector<64x1xi1> to vector<64x1xi1>
    %378 = vector.broadcast %377 : vector<64x1xi1> to vector<64x4xi1>
    %379 = vector.broadcast %cst_181 : f32 to vector<64x4xf32>
    %380 = arith.select %378, %367, %379 : vector<64x4xi1>, vector<64x4xf32>
    %381 = arith.truncf %380 : vector<64x4xf32> to vector<64x4xbf16>
    %c0_182 = arith.constant 0 : index
    %c104 = arith.constant 104 : index
    %382 = vector.load %arg22[%c0_182, %c104] : memref<64x108xbf16, #tpu.memory_space<vmem>>, vector<64x4xbf16>
    tpu.vector_store %arg22[%c0_182, %c104], %381 {strides = array<i32>} : memref<64x108xbf16, #tpu.memory_space<vmem>>, vector<64x4xbf16>,
    %c0_183 = arith.constant 0 : index
    %c0_184 = arith.constant 0 : index
    %383 = vector.load %arg22[%c0_183, %c0_184] : memref<64x108xbf16, #tpu.memory_space<vmem>>, vector<64x108xbf16>
    %c0_185 = arith.constant 0 : index
    %c0_186 = arith.constant 0 : index
    %384 = vector.load %arg9[%c0_185, %c0_186] : memref<108x4xbf16, #tpu.memory_space<vmem>>, vector<108x4xbf16>
    %cst_187 = arith.constant dense<0.000000e+00> : vector<64x4xf32>
    %385 = tpu.matmul %383, %384, %cst_187 {dimension_numbers = #tpu.dot_dimension_numbers<[1], [0], [0], [1], [0, 0, 1, 1], [], []>} : vector<64x108xbf16>, vector<108x4xbf16>, vector<64x4xf32> -> vector<64x4xf32>
    %c0_188 = arith.constant 0 : index
    %c0_189 = arith.constant 0 : index
    %386 = vector.load %arg10[%c0_188, %c0_189] : memref<1x4xf32, #tpu.memory_space<vmem>>, vector<1x4xf32>
    %387 = vector.broadcast %386 : vector<1x4xf32> to vector<64x4xf32>
    %388 = arith.addf %385, %387 : vector<64x4xf32>
    %c0_190 = arith.constant 0 : index
    %c0_191 = arith.constant 0 : index
    %389 = vector.load %arg11[%c0_190, %c0_191] : memref<1x4xf32, #tpu.memory_space<vmem>>, vector<1x4xf32>
    %390 = vector.broadcast %389 : vector<1x4xf32> to vector<64x4xf32>
    %391 = arith.mulf %388, %390 : vector<64x4xf32>
    %cst_192 = arith.constant dense<0.000000e+00> : vector<64xf32>
    %392 = vector.multi_reduction <add>, %391, %cst_192 [1] : vector<64x4xf32> to vector<64xf32>
    %393 = vector.shape_cast %392 : vector<64xf32> to vector<64x1xf32>
    %c3 = arith.constant 3 : index
    %394 = memref.load %arg1[%c3] : memref<7xf32, #tpu.memory_space<smem>>
    %395 = vector.broadcast %394 : f32 to vector<64x1xf32>
    %396 = arith.addf %393, %395 : vector<64x1xf32>
    %397 = arith.negf %396 : vector<64x1xf32>
    %398 = math.exp %397 : vector<64x1xf32>
    %cst_193 = arith.constant 1.000000e+00 : f32
    %399 = vector.broadcast %cst_193 : f32 to vector<64x1xf32>
    %400 = arith.addf %399, %398 : vector<64x1xf32>
    %401 = arith.divf %399, %400 : vector<64x1xf32>
    %c0_194 = arith.constant 0 : index
    %c0_195 = arith.constant 0 : index
    %c0_196 = arith.constant 0 : index
    %402 = vector.load %arg3[%c0_194, %c0_195, %c0_196] : memref<1x64x8xbf16, #tpu.memory_space<vmem>>, vector<1x64x8xbf16>
    %403 = vector.shape_cast %402 : vector<1x64x8xbf16> to vector<64x8xbf16>
    %404 = arith.extf %403 : vector<64x8xbf16> to vector<64x8xf32>
    %c4_197 = arith.constant 4 : index
    %405 = memref.load %arg1[%c4_197] : memref<7xf32, #tpu.memory_space<smem>>
    %cst_198 = arith.constant 1.000000e+00 : f32
    %406 = vector.broadcast %cst_198 : f32 to vector<1x8xf32>
    %407 = arith.addf %16, %406 : vector<1x8xf32>
    %408 = vector.broadcast %405 : f32 to vector<1x8xf32>
    %409 = arith.mulf %408, %407 : vector<1x8xf32>
    %cst_199 = arith.constant 1.000000e+00 : f32
    %410 = vector.broadcast %cst_199 : f32 to vector<64x1xf32>
    %411 = arith.addf %401, %410 : vector<64x1xf32>
    %412 = vector.broadcast %409 : vector<1x8xf32> to vector<64x8xf32>
    %413 = vector.broadcast %411 : vector<64x1xf32> to vector<64x8xf32>
    %414 = arith.mulf %412, %413 : vector<64x8xf32>
    %c5_200 = arith.constant 5 : index
    %415 = memref.load %arg1[%c5_200] : memref<7xf32, #tpu.memory_space<smem>>
    %416 = vector.broadcast %415 : f32 to vector<64x8xf32>
    %417 = arith.addf %414, %416 : vector<64x8xf32>
    %418 = arith.mulf %404, %417 : vector<64x8xf32>
    %c0_201 = arith.constant 0 : index
    %c0_202 = arith.constant 0 : index
    %c0_203 = arith.constant 0 : index
    %419 = vector.load %arg20[%c0_201, %c0_202, %c0_203] : memref<1x64x8xf32, #tpu.memory_space<vmem>>, vector<1x64x8xf32>
    %420 = vector.shape_cast %419 : vector<1x64x8xf32> to vector<64x8xf32>
    %421 = vector.shape_cast %418 : vector<64x8xf32> to vector<1x64x8xf32>
    tpu.vector_store %arg20[%c0_201, %c0_202, %c0_203], %421 {strides = array<i32>} : memref<1x64x8xf32, #tpu.memory_space<vmem>>, vector<1x64x8xf32>,
    %c0_204 = arith.constant 0 : index
    %c0_205 = arith.constant 0 : index
    %422 = vector.load %arg14[%c0_204, %c0_205] : memref<8x4xbf16, #tpu.memory_space<vmem>>, vector<8x4xbf16>
    %c0_206 = arith.constant 0 : index
    %c0_207 = arith.constant 0 : index
    %423 = vector.load %arg16[%c0_206, %c0_207] : memref<8x4xbf16, #tpu.memory_space<vmem>>, vector<8x4xbf16>
    %c0_208 = arith.constant 0 : index
    %c0_209 = arith.constant 0 : index
    %424 = vector.load %arg15[%c0_208, %c0_209] : memref<1x4xf32, #tpu.memory_space<vmem>>, vector<1x4xf32>
    %c0_210 = arith.constant 0 : index
    %c0_211 = arith.constant 0 : index
    %425 = vector.load %arg17[%c0_210, %c0_211] : memref<1x4xf32, #tpu.memory_space<vmem>>, vector<1x4xf32>
    %c0_212 = arith.constant 0 : index
    %c0_213 = arith.constant 0 : index
    %c0_214 = arith.constant 0 : index
    %426 = vector.load %arg3[%c0_212, %c0_213, %c0_214] : memref<1x64x8xbf16, #tpu.memory_space<vmem>>, vector<1x64x8xbf16>
    %427 = vector.shape_cast %426 : vector<1x64x8xbf16> to vector<64x8xbf16>
    %c0_215 = arith.constant 0 : index
    %c0_216 = arith.constant 0 : index
    %428 = vector.load %arg12[%c0_215, %c0_216] : memref<8x4xbf16, #tpu.memory_space<vmem>>, vector<8x4xbf16>
    %cst_217 = arith.constant dense<0.000000e+00> : vector<64x4xf32>
    %429 = tpu.matmul %427, %428, %cst_217 {dimension_numbers = #tpu.dot_dimension_numbers<[1], [0], [0], [1], [0, 0, 1, 1], [], []>} : vector<64x8xbf16>, vector<8x4xbf16>, vector<64x4xf32> -> vector<64x4xf32>
    %c0_218 = arith.constant 0 : index
    %c0_219 = arith.constant 0 : index
    %430 = vector.load %arg13[%c0_218, %c0_219] : memref<1x4xf32, #tpu.memory_space<vmem>>, vector<1x4xf32>
    %431 = vector.broadcast %430 : vector<1x4xf32> to vector<64x4xf32>
    %432 = arith.addf %429, %431 : vector<64x4xf32>
    %433 = arith.truncf %432 : vector<64x4xf32> to vector<64x4xbf16>
    %cst_220 = arith.constant 0xFF800000 : f32
    %434 = vector.broadcast %cst_220 : f32 to vector<1x1xf32>
    %cst_221 = arith.constant 0.000000e+00 : f32
    %435 = vector.broadcast %cst_221 : f32 to vector<1x1xf32>
    %cst_222 = arith.constant 0.000000e+00 : f32
    %436 = vector.broadcast %cst_222 : f32 to vector<64x4xf32>
    %c0_223 = arith.constant 0 : index
    %c0_224 = arith.constant 0 : index
    %c0_225 = arith.constant 0 : index
    %437 = vector.load %arg3[%c0_223, %c0_224, %c0_225] : memref<1x64x8xbf16, #tpu.memory_space<vmem>>, vector<1x64x8xbf16>
    %438 = vector.shape_cast %437 : vector<1x64x8xbf16> to vector<64x8xbf16>
    %cst_226 = arith.constant dense<0.000000e+00> : vector<64x4xf32>
    %439 = tpu.matmul %438, %422, %cst_226 {dimension_numbers = #tpu.dot_dimension_numbers<[1], [0], [0], [1], [0, 0, 1, 1], [], []>} : vector<64x8xbf16>, vector<8x4xbf16>, vector<64x4xf32> -> vector<64x4xf32>
    %440 = vector.broadcast %424 : vector<1x4xf32> to vector<64x4xf32>
    %441 = arith.addf %439, %440 : vector<64x4xf32>
    %442 = arith.truncf %441 : vector<64x4xf32> to vector<64x4xbf16>
    %cst_227 = arith.constant dense<0.000000e+00> : vector<64x4xf32>
    %443 = tpu.matmul %438, %423, %cst_227 {dimension_numbers = #tpu.dot_dimension_numbers<[1], [0], [0], [1], [0, 0, 1, 1], [], []>} : vector<64x8xbf16>, vector<8x4xbf16>, vector<64x4xf32> -> vector<64x4xf32>
    %444 = vector.broadcast %425 : vector<1x4xf32> to vector<64x4xf32>
    %445 = arith.addf %443, %444 : vector<64x4xf32>
    %446 = arith.truncf %445 : vector<64x4xf32> to vector<64x4xbf16>
    %cst_228 = arith.constant dense<0.000000e+00> : vector<64x64xf32>
    %447 = tpu.matmul %433, %442, %cst_228 {dimension_numbers = #tpu.dot_dimension_numbers<[1], [1], [0], [0], [0, 0, 1, 0], [], []>} : vector<64x4xbf16>, vector<64x4xbf16>, vector<64x64xf32> -> vector<64x64xf32>
    %448 = vector.shape_cast %447 : vector<64x64xf32> to vector<1x64x64xf32>
    %cst_229 = arith.constant dense<0xFF800000> : vector<1xf32>
    %449 = vector.multi_reduction <maximumf>, %448, %cst_229 [1, 2] : vector<1x64x64xf32> to vector<1xf32>
    %450 = vector.shape_cast %449 : vector<1xf32> to vector<1x1x1xf32>
    %451 = vector.extract %450[0, 0, 0] : f32 from vector<1x1x1xf32>
    %452 = vector.broadcast %451 : f32 to vector<1x1xf32>
    %453 = arith.maximumf %434, %452 : vector<1x1xf32>
    %454 = arith.subf %434, %453 : vector<1x1xf32>
    %455 = math.exp %454 : vector<1x1xf32>
    %456 = vector.broadcast %453 : vector<1x1xf32> to vector<64x64xf32>
    %457 = arith.subf %447, %456 : vector<64x64xf32>
    %458 = math.exp %457 : vector<64x64xf32>
    %459 = arith.mulf %455, %435 : vector<1x1xf32>
    %460 = vector.shape_cast %458 : vector<64x64xf32> to vector<1x64x64xf32>
    %cst_230 = arith.constant dense<0.000000e+00> : vector<1xf32>
    %461 = vector.multi_reduction <add>, %460, %cst_230 [1, 2] : vector<1x64x64xf32> to vector<1xf32>
    %462 = vector.shape_cast %461 : vector<1xf32> to vector<1x1x1xf32>
    %463 = vector.extract %462[0, 0, 0] : f32 from vector<1x1x1xf32>
    %464 = vector.broadcast %463 : f32 to vector<1x1xf32>
    %465 = arith.addf %459, %464 : vector<1x1xf32>
    %466 = vector.broadcast %455 : vector<1x1xf32> to vector<64x4xf32>
    %467 = arith.mulf %466, %436 : vector<64x4xf32>
    %468 = arith.truncf %458 : vector<64x64xf32> to vector<64x64xbf16>
    %cst_231 = arith.constant dense<0.000000e+00> : vector<64x4xf32>
    %469 = tpu.matmul %468, %446, %cst_231 {dimension_numbers = #tpu.dot_dimension_numbers<[1], [0], [0], [1], [0, 0, 1, 1], [], []>} : vector<64x64xbf16>, vector<64x4xbf16>, vector<64x4xf32> -> vector<64x4xf32>
    %470 = arith.addf %467, %469 : vector<64x4xf32>
    %471 = tpu.reciprocal %465 {approx = true} : vector<1x1xf32> -> vector<1x1xf32>
    %472 = vector.broadcast %471 : vector<1x1xf32> to vector<64x4xf32>
    %473 = arith.mulf %470, %472 : vector<64x4xf32>
    %474 = arith.truncf %473 : vector<64x4xf32> to vector<64x4xbf16>
    %c0_232 = arith.constant 0 : index
    %c0_233 = arith.constant 0 : index
    %475 = vector.load %arg18[%c0_232, %c0_233] : memref<4x8xbf16, #tpu.memory_space<vmem>>, vector<4x8xbf16>
    %cst_234 = arith.constant dense<0.000000e+00> : vector<64x8xf32>
    %476 = tpu.matmul %474, %475, %cst_234 {dimension_numbers = #tpu.dot_dimension_numbers<[1], [0], [0], [1], [0, 0, 1, 1], [], []>} : vector<64x4xbf16>, vector<4x8xbf16>, vector<64x8xf32> -> vector<64x8xf32>
    %c0_235 = arith.constant 0 : index
    %c0_236 = arith.constant 0 : index
    %477 = vector.load %arg19[%c0_235, %c0_236] : memref<1x8xf32, #tpu.memory_space<vmem>>, vector<1x8xf32>
    %478 = vector.broadcast %477 : vector<1x8xf32> to vector<64x8xf32>
    %479 = arith.addf %476, %478 : vector<64x8xf32>
    %c0_237 = arith.constant 0 : index
    %c0_238 = arith.constant 0 : index
    %c0_239 = arith.constant 0 : index
    %480 = vector.load %arg3[%c0_237, %c0_238, %c0_239] : memref<1x64x8xbf16, #tpu.memory_space<vmem>>, vector<1x64x8xbf16>
    %481 = vector.shape_cast %480 : vector<1x64x8xbf16> to vector<64x8xbf16>
    %cst_240 = arith.constant dense<0.000000e+00> : vector<64x8xf32>
    %482 = tpu.matmul %481, %54, %cst_240 {dimension_numbers = #tpu.dot_dimension_numbers<[1], [0], [0], [1], [0, 0, 1, 1], [], []>} : vector<64x8xbf16>, vector<8x8xbf16>, vector<64x8xf32> -> vector<64x8xf32>
    %c0_241 = arith.constant 0 : index
    %c0_242 = arith.constant 0 : index
    %c0_243 = arith.constant 0 : index
    %483 = vector.load %arg20[%c0_241, %c0_242, %c0_243] : memref<1x64x8xf32, #tpu.memory_space<vmem>>, vector<1x64x8xf32>
    %484 = vector.shape_cast %483 : vector<1x64x8xf32> to vector<64x8xf32>
    %c6 = arith.constant 6 : index
    %485 = memref.load %arg1[%c6] : memref<7xf32, #tpu.memory_space<smem>>
    %c0_244 = arith.constant 0 : index
    %c0_245 = arith.constant 0 : index
    %c0_246 = arith.constant 0 : index
    %486 = vector.load %arg3[%c0_244, %c0_245, %c0_246] : memref<1x64x8xbf16, #tpu.memory_space<vmem>>, vector<1x64x8xbf16>
    %487 = vector.shape_cast %486 : vector<1x64x8xbf16> to vector<64x8xbf16>
    %488 = arith.extf %487 : vector<64x8xbf16> to vector<64x8xf32>
    %cst_247 = arith.constant 1.000000e+00 : f32
    %489 = vector.broadcast %cst_247 : f32 to vector<64x8xf32>
    %490 = arith.addf %482, %489 : vector<64x8xf32>
    %491 = arith.mulf %488, %490 : vector<64x8xf32>
    %cst_248 = arith.constant 1.000000e+00 : f32
    %492 = vector.broadcast %cst_248 : f32 to vector<64x8xf32>
    %493 = arith.addf %479, %492 : vector<64x8xf32>
    %494 = arith.mulf %491, %493 : vector<64x8xf32>
    %495 = vector.broadcast %485 : f32 to vector<64x8xf32>
    %496 = arith.mulf %495, %494 : vector<64x8xf32>
    %497 = arith.addf %484, %496 : vector<64x8xf32>
    %c0_249 = arith.constant 0 : index
    %c0_250 = arith.constant 0 : index
    %c0_251 = arith.constant 0 : index
    %498 = vector.load %arg20[%c0_249, %c0_250, %c0_251] : memref<1x64x8xf32, #tpu.memory_space<vmem>>, vector<1x64x8xf32>
    %499 = vector.shape_cast %498 : vector<1x64x8xf32> to vector<64x8xf32>
    %500 = vector.shape_cast %497 : vector<64x8xf32> to vector<1x64x8xf32>
    tpu.vector_store %arg20[%c0_249, %c0_250, %c0_251], %500 {strides = array<i32>} : memref<1x64x8xf32, #tpu.memory_space<vmem>>, vector<1x64x8xf32>,
    return
  }
  func.func @transform_0(%arg0: i32) -> i32 {
    %c0_i32 = arith.constant 0 : i32
    %c0_i32_0 = arith.constant 0 : i32
    return %c0_i32 : i32
  }
  func.func @transform_1(%arg0: i32) -> (i32, i32) {
    %c0_i32 = arith.constant 0 : i32
    %c0_i32_0 = arith.constant 0 : i32
    %c0_i32_1 = arith.constant 0 : i32
    return %c0_i32, %c0_i32_0 : i32, i32
  }
  func.func @transform_2(%arg0: i32) -> (i32, i32, i32) {
    %c0_i32 = arith.constant 0 : i32
    %c0_i32_0 = arith.constant 0 : i32
    %c0_i32_1 = arith.constant 0 : i32
    return %arg0, %c0_i32, %c0_i32_0 : i32, i32, i32
  }
  func.func @transform_3(%arg0: i32) -> (i32, i32) {
    %c0_i32 = arith.constant 0 : i32
    %c0_i32_0 = arith.constant 0 : i32
    %c0_i32_1 = arith.constant 0 : i32
    return %c0_i32, %c0_i32_0 : i32, i32
  }
  func.func @transform_4(%arg0: i32) -> (i32, i32) {
    %c0_i32 = arith.constant 0 : i32
    %c0_i32_0 = arith.constant 0 : i32
    %c0_i32_1 = arith.constant 0 : i32
    return %c0_i32, %c0_i32_0 : i32, i32
  }
  func.func @transform_5(%arg0: i32) -> (i32, i32) {
    %c0_i32 = arith.constant 0 : i32
    %c0_i32_0 = arith.constant 0 : i32
    %c0_i32_1 = arith.constant 0 : i32
    return %c0_i32, %c0_i32_0 : i32, i32
  }
  func.func @transform_6(%arg0: i32) -> (i32, i32) {
    %c0_i32 = arith.constant 0 : i32
    %c0_i32_0 = arith.constant 0 : i32
    %c0_i32_1 = arith.constant 0 : i32
    return %c0_i32, %c0_i32_0 : i32, i32
  }
  func.func @transform_7(%arg0: i32) -> (i32, i32) {
    %c0_i32 = arith.constant 0 : i32
    %c0_i32_0 = arith.constant 0 : i32
    %c0_i32_1 = arith.constant 0 : i32
    return %c0_i32, %c0_i32_0 : i32, i32
  }
  func.func @transform_8(%arg0: i32) -> (i32, i32) {
    %c0_i32 = arith.constant 0 : i32
    %c0_i32_0 = arith.constant 0 : i32
    %c0_i32_1 = arith.constant 0 : i32
    return %c0_i32, %c0_i32_0 : i32, i32
  }
  func.func @transform_9(%arg0: i32) -> (i32, i32) {
    %c0_i32 = arith.constant 0 : i32
    %c0_i32_0 = arith.constant 0 : i32
    %c0_i32_1 = arith.constant 0 : i32
    return %c0_i32, %c0_i32_0 : i32, i32
  }
  func.func @transform_10(%arg0: i32) -> (i32, i32) {
    %c0_i32 = arith.constant 0 : i32
    %c0_i32_0 = arith.constant 0 : i32
    %c0_i32_1 = arith.constant 0 : i32
    return %c0_i32, %c0_i32_0 : i32, i32
  }
  func.func @transform_11(%arg0: i32) -> (i32, i32) {
    %c0_i32 = arith.constant 0 : i32
    %c0_i32_0 = arith.constant 0 : i32
    %c0_i32_1 = arith.constant 0 : i32
    return %c0_i32, %c0_i32_0 : i32, i32
  }
  func.func @transform_12(%arg0: i32) -> (i32, i32) {
    %c0_i32 = arith.constant 0 : i32
    %c0_i32_0 = arith.constant 0 : i32
    %c0_i32_1 = arith.constant 0 : i32
    return %c0_i32, %c0_i32_0 : i32, i32
  }
  func.func @transform_13(%arg0: i32) -> (i32, i32) {
    %c0_i32 = arith.constant 0 : i32
    %c0_i32_0 = arith.constant 0 : i32
    %c0_i32_1 = arith.constant 0 : i32
    return %c0_i32, %c0_i32_0 : i32, i32
  }
  func.func @transform_14(%arg0: i32) -> (i32, i32) {
    %c0_i32 = arith.constant 0 : i32
    %c0_i32_0 = arith.constant 0 : i32
    %c0_i32_1 = arith.constant 0 : i32
    return %c0_i32, %c0_i32_0 : i32, i32
  }
  func.func @transform_15(%arg0: i32) -> (i32, i32) {
    %c0_i32 = arith.constant 0 : i32
    %c0_i32_0 = arith.constant 0 : i32
    %c0_i32_1 = arith.constant 0 : i32
    return %c0_i32, %c0_i32_0 : i32, i32
  }
  func.func @transform_16(%arg0: i32) -> (i32, i32) {
    %c0_i32 = arith.constant 0 : i32
    %c0_i32_0 = arith.constant 0 : i32
    %c0_i32_1 = arith.constant 0 : i32
    return %c0_i32, %c0_i32_0 : i32, i32
  }
  func.func @transform_17(%arg0: i32) -> (i32, i32) {
    %c0_i32 = arith.constant 0 : i32
    %c0_i32_0 = arith.constant 0 : i32
    %c0_i32_1 = arith.constant 0 : i32
    return %c0_i32, %c0_i32_0 : i32, i32
  }
  func.func @transform_18(%arg0: i32) -> (i32, i32) {
    %c0_i32 = arith.constant 0 : i32
    %c0_i32_0 = arith.constant 0 : i32
    %c0_i32_1 = arith.constant 0 : i32
    return %c0_i32, %c0_i32_0 : i32, i32
  }
  func.func @transform_19(%arg0: i32) -> (i32, i32, i32) {
    %c0_i32 = arith.constant 0 : i32
    %c0_i32_0 = arith.constant 0 : i32
    %c0_i32_1 = arith.constant 0 : i32
    return %arg0, %c0_i32, %c0_i32_0 : i32, i32, i32
  }
}

</mosaic_0001>

<llo_original>
// kernel: glam_forward.1
$region0: #{glam_forward.1}
  #allocation0 [shape = 'u32[]', space=smem, size = 0x4, offset = 0x4, fixed_abs, tag = 'smem constant byte address 0x4 - core index']
  #allocation1 [shape = 'u32[144,128]{1,0:T(1,128)}', space=vmem, size = 0x12000, scoped, tag = 'internal scratch']
  #allocation2 [shape = 'f32[128,4]{1,0:T(8,128)}', space=vmem, size = 0x10000, scoped, tag = 'scratch operand']
  #allocation3 [shape = 'bf16[64,108]{1,0:T(8,128)(2,1)}', space=vmem, size = 0x4000, scoped, tag = 'scratch operand']
  %s0 = inlined_call_operand.vmem [shape: f32[7], index: 0, kind: input, shape index: {}]
  %s1 = inlined_call_operand.vmem [shape: s32[64,1], index: 1, kind: input, shape index: {}]
  %s2 = inlined_call_operand.vmem [shape: bf16[2,64,8], index: 2, kind: input, shape index: {}]
  %s3 = inlined_call_operand.vmem [shape: f32[8,8], index: 3, kind: input, shape index: {}]
  %s4 = inlined_call_operand.vmem [shape: f32[8,8], index: 4, kind: input, shape index: {}]
  %s5 = inlined_call_operand.vmem [shape: f32[8,8], index: 5, kind: input, shape index: {}]
  %s6 = inlined_call_operand.vmem [shape: bf16[8,4], index: 6, kind: input, shape index: {}]
  %s7 = inlined_call_operand.vmem [shape: f32[1,4], index: 7, kind: input, shape index: {}]
  %s8 = inlined_call_operand.vmem [shape: bf16[108,4], index: 8, kind: input, shape index: {}]
  %s9 = inlined_call_operand.vmem [shape: f32[1,4], index: 9, kind: input, shape index: {}]
  %s10 = inlined_call_operand.vmem [shape: f32[1,4], index: 10, kind: input, shape index: {}]
  %s11 = inlined_call_operand.vmem [shape: bf16[8,4], index: 11, kind: input, shape index: {}]
  %s12 = inlined_call_operand.vmem [shape: f32[1,4], index: 12, kind: input, shape index: {}]
  %s13 = inlined_call_operand.vmem [shape: bf16[8,4], index: 13, kind: input, shape index: {}]
  %s14 = inlined_call_operand.vmem [shape: f32[1,4], index: 14, kind: input, shape index: {}]
  %s15 = inlined_call_operand.vmem [shape: bf16[8,4], index: 15, kind: input, shape index: {}]
  %s16 = inlined_call_operand.vmem [shape: f32[1,4], index: 16, kind: input, shape index: {}]
  %s17 = inlined_call_operand.vmem [shape: bf16[4,8], index: 17, kind: input, shape index: {}]
  %s18 = inlined_call_operand.vmem [shape: f32[1,8], index: 18, kind: input, shape index: {}]
  %s19 = inlined_call_operand.vmem [shape: f32[2,64,8], index: 19, kind: output, shape index: {}]
  %s20 = sld [smem:[#allocation0]]
  $region113: #{glam_forward.1} parent=0
    _
  %s22 = ssub.s32 1, %s20
  %s23 = scalar_select 0, %s22, %s20
  $region1: #{glam_forward.1} parent=0
    #allocation4 [shape = 'u8[512]{0}', space=smem, size = 0x200, scoped, tag = 'input window, operand 0, single buffered']
    #allocation5 [shape = 's32[2]{0}', space=sflag, size = 0x8, scoped, tag = 'scoped memory for glam_forward.1']
    %24 = vsyncpa [#allocation5], 0
    loop: start=0, step=1, limit=4
    $region2: #{glam_forward.1} parent=1 // loop_pre_header
      _
    $region3: #{glam_forward.1} parent=1 // loop_header
      %s26 = sphi 0, %s30
      %p27 = scmp.ge.s32.totalorder %s26, 4
      %s34 = sphi 0, %s34
      %s36 = sphi 0, %s34
      %s37 = sphi 0, %s36
      %s51 = sphi 0, %s37
      %s55 = sphi 0, %s55
      %s57 = sphi 0, %s55
      %s58 = sphi 0, %s57
      %s72 = sphi 0, %s58
      %s78 = sphi 0, %s80
      %s81 = sphi 0, %s78
      %s82 = sphi 0, %s81
      %s98 = sphi 0, %s82
      %s102 = sphi 0, %s102
      %s104 = sphi 0, %s102
      %s105 = sphi 0, %s104
      %s119 = sphi 0, %s105
      %s123 = sphi 0, %s123
      %s125 = sphi 0, %s123
      %s126 = sphi 0, %s125
      %s140 = sphi 0, %s126
      %s144 = sphi 0, %s144
      %s146 = sphi 0, %s144
      %s147 = sphi 0, %s146
      %s161 = sphi 0, %s147
      %s165 = sphi 0, %s165
      %s167 = sphi 0, %s165
      %s168 = sphi 0, %s167
      %s182 = sphi 0, %s168
      %s186 = sphi 0, %s186
      %s188 = sphi 0, %s186
      %s189 = sphi 0, %s188
      %s203 = sphi 0, %s189
      %s207 = sphi 0, %s207
      %s209 = sphi 0, %s207
      %s210 = sphi 0, %s209
      %s224 = sphi 0, %s210
      %s228 = sphi 0, %s228
      %s230 = sphi 0, %s228
      %s231 = sphi 0, %s230
      %s245 = sphi 0, %s231
      %s249 = sphi 0, %s249
      %s251 = sphi 0, %s249
      %s252 = sphi 0, %s251
      %s266 = sphi 0, %s252
      %s270 = sphi 0, %s270
      %s272 = sphi 0, %s270
      %s273 = sphi 0, %s272
      %s287 = sphi 0, %s273
      %s291 = sphi 0, %s291
      %s293 = sphi 0, %s291
      %s294 = sphi 0, %s293
      %s308 = sphi 0, %s294
      %s312 = sphi 0, %s312
      %s314 = sphi 0, %s312
      %s315 = sphi 0, %s314
      %s329 = sphi 0, %s315
      %s333 = sphi 0, %s333
      %s335 = sphi 0, %s333
      %s336 = sphi 0, %s335
      %s350 = sphi 0, %s336
      %s354 = sphi 0, %s354
      %s356 = sphi 0, %s354
      %s357 = sphi 0, %s356
      %s371 = sphi 0, %s357
      %s375 = sphi 0, %s375
      %s377 = sphi 0, %s375
      %s378 = sphi 0, %s377
      %s392 = sphi 0, %s378
      %s396 = sphi 0, %s396
      %s398 = sphi 0, %s396
      %s399 = sphi 0, %s398
      %s413 = sphi 0, %s399
      %s417 = sphi 0, %s417
      %s419 = sphi 0, %s417
      %s420 = sphi 0, %s419
      %s434 = sphi 0, %s420
      %s440 = sphi 0, %s442
      %s443 = sphi 0, %s440
      %s444 = sphi 0, %s443
      %s460 = sphi 0, %s444
    $region4: #{glam_forward.1} parent=1 // loop_header_branch
      %29 = sbr.rel (%p27) target = $region8
    $region5: #{glam_forward.1} parent=1 // loop_body
      %s31 = ssub.s32 %s26, 1
      %s32 = ssub.s32 %s26, 2
      %s33 = sadd.s32 %s26, 1
      %s35 = sadd.s32 %s34, 1
      %p38 = scmp.eq.s32.totalorder %s26, 1
      %p39 = scmp.ne.s32.totalorder %s34, %s36
      %p40 = scmp.eq.s32.totalorder %s26, 0
      %p41 = por %p39, %p40
      %p42 = scmp.ne.s32.totalorder %s34, %s36
      %p43 = scmp.eq.s32.totalorder %s31, 1
      %p44 = por %p42, %p43
      %p45 = scmp.ne.s32.totalorder %s36, %s37
      %p46 = scmp.eq.s32.totalorder %s31, 0
      %p47 = por %p45, %p46
      %p48 = scmp.ne.s32.totalorder %s36, %s37
      %p49 = scmp.eq.s32.totalorder %s32, 1
      %p50 = por %p48, %p49
      %p52 = scmp.ne.s32.totalorder %s37, %s51
      %p53 = scmp.eq.s32.totalorder %s32, 0
      %p54 = por %p52, %p53
      %s56 = sadd.s32 %s55, 1
      %p59 = scmp.eq.s32.totalorder %s26, 1
      %p60 = scmp.ne.s32.totalorder %s55, %s57
      %p61 = scmp.eq.s32.totalorder %s26, 0
      %p62 = por %p60, %p61
      %p63 = scmp.ne.s32.totalorder %s55, %s57
      %p64 = scmp.eq.s32.totalorder %s31, 1
      %p65 = por %p63, %p64
      %p66 = scmp.ne.s32.totalorder %s57, %s58
      %p67 = scmp.eq.s32.totalorder %s31, 0
      %p68 = por %p66, %p67
      %p69 = scmp.ne.s32.totalorder %s57, %s58
      %p70 = scmp.eq.s32.totalorder %s32, 1
      %p71 = por %p69, %p70
      %p73 = scmp.ne.s32.totalorder %s58, %s72
      %p74 = scmp.eq.s32.totalorder %s32, 0
      %p75 = por %p73, %p74
      %s76 = ssub.s32 %s26, %s33
      %p77 = scmp.eq.s32.totalorder %s76, 0
      %s79 = sadd.s32 %s78, 1
      %s80 = scalar_select %p77, %s78, %s79
      %p83 = pneg %p77
      %p84 = scmp.eq.s32.totalorder %s26, 1
      %p85 = por %p83, %p84
      %p86 = scmp.ne.s32.totalorder %s78, %s81
      %p87 = scmp.eq.s32.totalorder %s26, 0
      %p88 = por %p86, %p87
      %p89 = scmp.ne.s32.totalorder %s78, %s81
      %p90 = scmp.eq.s32.totalorder %s31, 1
      %p91 = por %p89, %p90
      %p92 = scmp.ne.s32.totalorder %s81, %s82
      %p93 = scmp.eq.s32.totalorder %s31, 0
      %p94 = por %p92, %p93
      %p95 = scmp.ne.s32.totalorder %s81, %s82
      %p96 = scmp.eq.s32.totalorder %s32, 1
      %p97 = por %p95, %p96
      %p99 = scmp.ne.s32.totalorder %s82, %s98
      %p100 = scmp.eq.s32.totalorder %s32, 0
      %p101 = por %p99, %p100
      %s103 = sadd.s32 %s102, 1
      %p106 = scmp.eq.s32.totalorder %s26, 1
      %p107 = scmp.ne.s32.totalorder %s102, %s104
      %p108 = scmp.eq.s32.totalorder %s26, 0
      %p109 = por %p107, %p108
      %p110 = scmp.ne.s32.totalorder %s102, %s104
      %p111 = scmp.eq.s32.totalorder %s31, 1
      %p112 = por %p110, %p111
      %p113 = scmp.ne.s32.totalorder %s104, %s105
      %p114 = scmp.eq.s32.totalorder %s31, 0
      %p115 = por %p113, %p114
      %p116 = scmp.ne.s32.totalorder %s104, %s105
      %p117 = scmp.eq.s32.totalorder %s32, 1
      %p118 = por %p116, %p117
      %p120 = scmp.ne.s32.totalorder %s105, %s119
      %p121 = scmp.eq.s32.totalorder %s32, 0
      %p122 = por %p120, %p121
      %s124 = sadd.s32 %s123, 1
      %p127 = scmp.eq.s32.totalorder %s26, 1
      %p128 = scmp.ne.s32.totalorder %s123, %s125
      %p129 = scmp.eq.s32.totalorder %s26, 0
      %p130 = por %p128, %p129
      %p131 = scmp.ne.s32.totalorder %s123, %s125
      %p132 = scmp.eq.s32.totalorder %s31, 1
      %p133 = por %p131, %p132
      %p134 = scmp.ne.s32.totalorder %s125, %s126
      %p135 = scmp.eq.s32.totalorder %s31, 0
      %p136 = por %p134, %p135
      %p137 = scmp.ne.s32.totalorder %s125, %s126
      %p138 = scmp.eq.s32.totalorder %s32, 1
      %p139 = por %p137, %p138
      %p141 = scmp.ne.s32.totalorder %s126, %s140
      %p142 = scmp.eq.s32.totalorder %s32, 0
      %p143 = por %p141, %p142
      %s145 = sadd.s32 %s144, 1
      %p148 = scmp.eq.s32.totalorder %s26, 1
      %p149 = scmp.ne.s32.totalorder %s144, %s146
      %p150 = scmp.eq.s32.totalorder %s26, 0
      %p151 = por %p149, %p150
      %p152 = scmp.ne.s32.totalorder %s144, %s146
      %p153 = scmp.eq.s32.totalorder %s31, 1
      %p154 = por %p152, %p153
      %p155 = scmp.ne.s32.totalorder %s146, %s147
      %p156 = scmp.eq.s32.totalorder %s31, 0
      %p157 = por %p155, %p156
      %p158 = scmp.ne.s32.totalorder %s146, %s147
      %p159 = scmp.eq.s32.totalorder %s32, 1
      %p160 = por %p158, %p159
      %p162 = scmp.ne.s32.totalorder %s147, %s161
      %p163 = scmp.eq.s32.totalorder %s32, 0
      %p164 = por %p162, %p163
      %s166 = sadd.s32 %s165, 1
      %p169 = scmp.eq.s32.totalorder %s26, 1
      %p170 = scmp.ne.s32.totalorder %s165, %s167
      %p171 = scmp.eq.s32.totalorder %s26, 0
      %p172 = por %p170, %p171
      %p173 = scmp.ne.s32.totalorder %s165, %s167
      %p174 = scmp.eq.s32.totalorder %s31, 1
      %p175 = por %p173, %p174
      %p176 = scmp.ne.s32.totalorder %s167, %s168
      %p177 = scmp.eq.s32.totalorder %s31, 0
      %p178 = por %p176, %p177
      %p179 = scmp.ne.s32.totalorder %s167, %s168
      %p180 = scmp.eq.s32.totalorder %s32, 1
      %p181 = por %p179, %p180
      %p183 = scmp.ne.s32.totalorder %s168, %s182
      %p184 = scmp.eq.s32.totalorder %s32, 0
      %p185 = por %p183, %p184
      %s187 = sadd.s32 %s186, 1
      %p190 = scmp.eq.s32.totalorder %s26, 1
      %p191 = scmp.ne.s32.totalorder %s186, %s188
      %p192 = scmp.eq.s32.totalorder %s26, 0
      %p193 = por %p191, %p192
      %p194 = scmp.ne.s32.totalorder %s186, %s188
      %p195 = scmp.eq.s32.totalorder %s31, 1
      %p196 = por %p194, %p195
      %p197 = scmp.ne.s32.totalorder %s188, %s189
      %p198 = scmp.eq.s32.totalorder %s31, 0
      %p199 = por %p197, %p198
      %p200 = scmp.ne.s32.totalorder %s188, %s189
      %p201 = scmp.eq.s32.totalorder %s32, 1
      %p202 = por %p200, %p201
      %p204 = scmp.ne.s32.totalorder %s189, %s203
      %p205 = scmp.eq.s32.totalorder %s32, 0
      %p206 = por %p204, %p205
      %s208 = sadd.s32 %s207, 1
      %p211 = scmp.eq.s32.totalorder %s26, 1
      %p212 = scmp.ne.s32.totalorder %s207, %s209
      %p213 = scmp.eq.s32.totalorder %s26, 0
      %p214 = por %p212, %p213
      %p215 = scmp.ne.s32.totalorder %s207, %s209
      %p216 = scmp.eq.s32.totalorder %s31, 1
      %p217 = por %p215, %p216
      %p218 = scmp.ne.s32.totalorder %s209, %s210
      %p219 = scmp.eq.s32.totalorder %s31, 0
      %p220 = por %p218, %p219
      %p221 = scmp.ne.s32.totalorder %s209, %s210
      %p222 = scmp.eq.s32.totalorder %s32, 1
      %p223 = por %p221, %p222
      %p225 = scmp.ne.s32.totalorder %s210, %s224
      %p226 = scmp.eq.s32.totalorder %s32, 0
      %p227 = por %p225, %p226
      %s229 = sadd.s32 %s228, 1
      %p232 = scmp.eq.s32.totalorder %s26, 1
      %p233 = scmp.ne.s32.totalorder %s228, %s230
      %p234 = scmp.eq.s32.totalorder %s26, 0
      %p235 = por %p233, %p234
      %p236 = scmp.ne.s32.totalorder %s228, %s230
      %p237 = scmp.eq.s32.totalorder %s31, 1
      %p238 = por %p236, %p237
      %p239 = scmp.ne.s32.totalorder %s230, %s231
      %p240 = scmp.eq.s32.totalorder %s31, 0
      %p241 = por %p239, %p240
      %p242 = scmp.ne.s32.totalorder %s230, %s231
      %p243 = scmp.eq.s32.totalorder %s32, 1
      %p244 = por %p242, %p243
      %p246 = scmp.ne.s32.totalorder %s231, %s245
      %p247 = scmp.eq.s32.totalorder %s32, 0
      %p248 = por %p246, %p247
      %s250 = sadd.s32 %s249, 1
      %p253 = scmp.eq.s32.totalorder %s26, 1
      %p254 = scmp.ne.s32.totalorder %s249, %s251
      %p255 = scmp.eq.s32.totalorder %s26, 0
      %p256 = por %p254, %p255
      %p257 = scmp.ne.s32.totalorder %s249, %s251
      %p258 = scmp.eq.s32.totalorder %s31, 1
      %p259 = por %p257, %p258
      %p260 = scmp.ne.s32.totalorder %s251, %s252
      %p261 = scmp.eq.s32.totalorder %s31, 0
      %p262 = por %p260, %p261
      %p263 = scmp.ne.s32.totalorder %s251, %s252
      %p264 = scmp.eq.s32.totalorder %s32, 1
      %p265 = por %p263, %p264
      %p267 = scmp.ne.s32.totalorder %s252, %s266
      %p268 = scmp.eq.s32.totalorder %s32, 0
      %p269 = por %p267, %p268
      %s271 = sadd.s32 %s270, 1
      %p274 = scmp.eq.s32.totalorder %s26, 1
      %p275 = scmp.ne.s32.totalorder %s270, %s272
      %p276 = scmp.eq.s32.totalorder %s26, 0
      %p277 = por %p275, %p276
      %p278 = scmp.ne.s32.totalorder %s270, %s272
      %p279 = scmp.eq.s32.totalorder %s31, 1
      %p280 = por %p278, %p279
      %p281 = scmp.ne.s32.totalorder %s272, %s273
      %p282 = scmp.eq.s32.totalorder %s31, 0
      %p283 = por %p281, %p282
      %p284 = scmp.ne.s32.totalorder %s272, %s273
      %p285 = scmp.eq.s32.totalorder %s32, 1
      %p286 = por %p284, %p285
      %p288 = scmp.ne.s32.totalorder %s273, %s287
      %p289 = scmp.eq.s32.totalorder %s32, 0
      %p290 = por %p288, %p289
      %s292 = sadd.s32 %s291, 1
      %p295 = scmp.eq.s32.totalorder %s26, 1
      %p296 = scmp.ne.s32.totalorder %s291, %s293
      %p297 = scmp.eq.s32.totalorder %s26, 0
      %p298 = por %p296, %p297
      %p299 = scmp.ne.s32.totalorder %s291, %s293
      %p300 = scmp.eq.s32.totalorder %s31, 1
      %p301 = por %p299, %p300
      %p302 = scmp.ne.s32.totalorder %s293, %s294
      %p303 = scmp.eq.s32.totalorder %s31, 0
      %p304 = por %p302, %p303
      %p305 = scmp.ne.s32.totalorder %s293, %s294
      %p306 = scmp.eq.s32.totalorder %s32, 1
      %p307 = por %p305, %p306
      %p309 = scmp.ne.s32.totalorder %s294, %s308
      %p310 = scmp.eq.s32.totalorder %s32, 0
      %p311 = por %p309, %p310
      %s313 = sadd.s32 %s312, 1
      %p316 = scmp.eq.s32.totalorder %s26, 1
      %p317 = scmp.ne.s32.totalorder %s312, %s314
      %p318 = scmp.eq.s32.totalorder %s26, 0
      %p319 = por %p317, %p318
      %p320 = scmp.ne.s32.totalorder %s312, %s314
      %p321 = scmp.eq.s32.totalorder %s31, 1
      %p322 = por %p320, %p321
      %p323 = scmp.ne.s32.totalorder %s314, %s315
      %p324 = scmp.eq.s32.totalorder %s31, 0
      %p325 = por %p323, %p324
      %p326 = scmp.ne.s32.totalorder %s314, %s315
      %p327 = scmp.eq.s32.totalorder %s32, 1
      %p328 = por %p326, %p327
      %p330 = scmp.ne.s32.totalorder %s315, %s329
      %p331 = scmp.eq.s32.totalorder %s32, 0
      %p332 = por %p330, %p331
      %s334 = sadd.s32 %s333, 1
      %p337 = scmp.eq.s32.totalorder %s26, 1
      %p338 = scmp.ne.s32.totalorder %s333, %s335
      %p339 = scmp.eq.s32.totalorder %s26, 0
      %p340 = por %p338, %p339
      %p341 = scmp.ne.s32.totalorder %s333, %s335
      %p342 = scmp.eq.s32.totalorder %s31, 1
      %p343 = por %p341, %p342
      %p344 = scmp.ne.s32.totalorder %s335, %s336
      %p345 = scmp.eq.s32.totalorder %s31, 0
      %p346 = por %p344, %p345
      %p347 = scmp.ne.s32.totalorder %s335, %s336
      %p348 = scmp.eq.s32.totalorder %s32, 1
      %p349 = por %p347, %p348
      %p351 = scmp.ne.s32.totalorder %s336, %s350
      %p352 = scmp.eq.s32.totalorder %s32, 0
      %p353 = por %p351, %p352
      %s355 = sadd.s32 %s354, 1
      %p358 = scmp.eq.s32.totalorder %s26, 1
      %p359 = scmp.ne.s32.totalorder %s354, %s356
      %p360 = scmp.eq.s32.totalorder %s26, 0
      %p361 = por %p359, %p360
      %p362 = scmp.ne.s32.totalorder %s354, %s356
      %p363 = scmp.eq.s32.totalorder %s31, 1
      %p364 = por %p362, %p363
      %p365 = scmp.ne.s32.totalorder %s356, %s357
      %p366 = scmp.eq.s32.totalorder %s31, 0
      %p367 = por %p365, %p366
      %p368 = scmp.ne.s32.totalorder %s356, %s357
      %p369 = scmp.eq.s32.totalorder %s32, 1
      %p370 = por %p368, %p369
      %p372 = scmp.ne.s32.totalorder %s357, %s371
      %p373 = scmp.eq.s32.totalorder %s32, 0
      %p374 = por %p372, %p373
      %s376 = sadd.s32 %s375, 1
      %p379 = scmp.eq.s32.totalorder %s26, 1
      %p380 = scmp.ne.s32.totalorder %s375, %s377
      %p381 = scmp.eq.s32.totalorder %s26, 0
      %p382 = por %p380, %p381
      %p383 = scmp.ne.s32.totalorder %s375, %s377
      %p384 = scmp.eq.s32.totalorder %s31, 1
      %p385 = por %p383, %p384
      %p386 = scmp.ne.s32.totalorder %s377, %s378
      %p387 = scmp.eq.s32.totalorder %s31, 0
      %p388 = por %p386, %p387
      %p389 = scmp.ne.s32.totalorder %s377, %s378
      %p390 = scmp.eq.s32.totalorder %s32, 1
      %p391 = por %p389, %p390
      %p393 = scmp.ne.s32.totalorder %s378, %s392
      %p394 = scmp.eq.s32.totalorder %s32, 0
      %p395 = por %p393, %p394
      %s397 = sadd.s32 %s396, 1
      %p400 = scmp.eq.s32.totalorder %s26, 1
      %p401 = scmp.ne.s32.totalorder %s396, %s398
      %p402 = scmp.eq.s32.totalorder %s26, 0
      %p403 = por %p401, %p402
      %p404 = scmp.ne.s32.totalorder %s396, %s398
      %p405 = scmp.eq.s32.totalorder %s31, 1
      %p406 = por %p404, %p405
      %p407 = scmp.ne.s32.totalorder %s398, %s399
      %p408 = scmp.eq.s32.totalorder %s31, 0
      %p409 = por %p407, %p408
      %p410 = scmp.ne.s32.totalorder %s398, %s399
      %p411 = scmp.eq.s32.totalorder %s32, 1
      %p412 = por %p410, %p411
      %p414 = scmp.ne.s32.totalorder %s399, %s413
      %p415 = scmp.eq.s32.totalorder %s32, 0
      %p416 = por %p414, %p415
      %s418 = sadd.s32 %s417, 1
      %p421 = scmp.eq.s32.totalorder %s26, 1
      %p422 = scmp.ne.s32.totalorder %s417, %s419
      %p423 = scmp.eq.s32.totalorder %s26, 0
      %p424 = por %p422, %p423
      %p425 = scmp.ne.s32.totalorder %s417, %s419
      %p426 = scmp.eq.s32.totalorder %s31, 1
      %p427 = por %p425, %p426
      %p428 = scmp.ne.s32.totalorder %s419, %s420
      %p429 = scmp.eq.s32.totalorder %s31, 0
      %p430 = por %p428, %p429
      %p431 = scmp.ne.s32.totalorder %s419, %s420
      %p432 = scmp.eq.s32.totalorder %s32, 1
      %p433 = por %p431, %p432
      %p435 = scmp.ne.s32.totalorder %s420, %s434
      %p436 = scmp.eq.s32.totalorder %s32, 0
      %p437 = por %p435, %p436
      %s438 = ssub.s32 %s26, %s33
      %p439 = scmp.eq.s32.totalorder %s438, 0
      %s441 = sadd.s32 %s440, 1
      %s442 = scalar_select %p439, %s440, %s441
      %p445 = pneg %p439
      %p446 = scmp.eq.s32.totalorder %s26, 1
      %p447 = por %p445, %p446
      %p448 = scmp.ne.s32.totalorder %s440, %s443
      %p449 = scmp.eq.s32.totalorder %s26, 0
      %p450 = por %p448, %p449
      %p451 = scmp.ne.s32.totalorder %s440, %s443
      %p452 = scmp.eq.s32.totalorder %s31, 1
      %p453 = por %p451, %p452
      %p454 = scmp.ne.s32.totalorder %s443, %s444
      %p455 = scmp.eq.s32.totalorder %s31, 0
      %p456 = por %p454, %p455
      %p457 = scmp.ne.s32.totalorder %s443, %s444
      %p458 = scmp.eq.s32.totalorder %s32, 1
      %p459 = por %p457, %p458
      %p461 = scmp.ne.s32.totalorder %s444, %s460
      %p462 = scmp.eq.s32.totalorder %s32, 0
      %p463 = por %p461, %p462
      %p464 = scmp.le.s32.totalorder 1, %s26
      %p465 = scmp.lt.s32.totalorder %s26, 3
      %p466 = pnand %p464, %p465
      %p467 = pneg %p466
      // Predicated region
      $region9: #{glam_forward.1} parent=5 // pred_check
        _
      $region10: #{glam_forward.1} parent=5 // pred_check_branch
        %469 = sbr.rel (%p466) target = $region12
      $region11: #{glam_forward.1} parent=5 // pred_region
        %s470 = ssub.s32 %s26, 1
        // Predicated region
        $region13: #{glam_forward.1} parent=11 // pred_check
          %p471 = pneg %p47
        $region14: #{glam_forward.1} parent=11 // pred_check_branch
          %473 = sbr.rel (%p471) target = $region16
        $region15: #{glam_forward.1} parent=11 // pred_region
          %s475 = ssub.s32 16, 16
          %476 = vsyncadd [#allocation5], %s475
          %s478 = sshll.u32 %s0, 4
          %s479 = int_to_ptr.vmem [resolvable:$true] %s478
          %481 = dma.vmem_to_smem %s479, 16, [#allocation4], [#allocation5]
        $region16: #{glam_forward.1} parent=11 // pred_fallthru
          _
        // Predicated region
        $region17: #{glam_forward.1} parent=11 // pred_check
          %p482 = pneg %p68
        $region18: #{glam_forward.1} parent=11 // pred_check_branch
          %484 = sbr.rel (%p482) target = $region20
        $region19: #{glam_forward.1} parent=11 // pred_region
          _
        $region20: #{glam_forward.1} parent=11 // pred_fallthru
          _
        // Predicated region
        $region21: #{glam_forward.1} parent=11 // pred_check
          %p485 = pneg %p115
        $region22: #{glam_forward.1} parent=11 // pred_check_branch
          %487 = sbr.rel (%p485) target = $region24
        $region23: #{glam_forward.1} parent=11 // pred_region
          _
        $region24: #{glam_forward.1} parent=11 // pred_fallthru
          _
        // Predicated region
        $region25: #{glam_forward.1} parent=11 // pred_check
          %p488 = pneg %p136
        $region26: #{glam_forward.1} parent=11 // pred_check_branch
          %490 = sbr.rel (%p488) target = $region28
        $region27: #{glam_forward.1} parent=11 // pred_region
          _
        $region28: #{glam_forward.1} parent=11 // pred_fallthru
          _
        // Predicated region
        $region29: #{glam_forward.1} parent=11 // pred_check
          %p491 = pneg %p157
        $region30: #{glam_forward.1} parent=11 // pred_check_branch
          %493 = sbr.rel (%p491) target = $region32
        $region31: #{glam_forward.1} parent=11 // pred_region
          _
        $region32: #{glam_forward.1} parent=11 // pred_fallthru
          _
        // Predicated region
        $region33: #{glam_forward.1} parent=11 // pred_check
          %p494 = pneg %p178
        $region34: #{glam_forward.1} parent=11 // pred_check_branch
          %496 = sbr.rel (%p494) target = $region36
        $region35: #{glam_forward.1} parent=11 // pred_region
          _
        $region36: #{glam_forward.1} parent=11 // pred_fallthru
          _
        // Predicated region
        $region37: #{glam_forward.1} parent=11 // pred_check
          %p497 = pneg %p199
        $region38: #{glam_forward.1} parent=11 // pred_check_branch
          %499 = sbr.rel (%p497) target = $region40
        $region39: #{glam_forward.1} parent=11 // pred_region
          _
        $region40: #{glam_forward.1} parent=11 // pred_fallthru
          _
        // Predicated region
        $region41: #{glam_forward.1} parent=11 // pred_check
          %p500 = pneg %p220
        $region42: #{glam_forward.1} parent=11 // pred_check_branch
          %502 = sbr.rel (%p500) target = $region44
        $region43: #{glam_forward.1} parent=11 // pred_region
          _
        $region44: #{glam_forward.1} parent=11 // pred_fallthru
          _
        // Predicated region
        $region45: #{glam_forward.1} parent=11 // pred_check
          %p503 = pneg %p241
        $region46: #{glam_forward.1} parent=11 // pred_check_branch
          %505 = sbr.rel (%p503) target = $region48
        $region47: #{glam_forward.1} parent=11 // pred_region
          _
        $region48: #{glam_forward.1} parent=11 // pred_fallthru
          _
        // Predicated region
        $region49: #{glam_forward.1} parent=11 // pred_check
          %p506 = pneg %p262
        $region50: #{glam_forward.1} parent=11 // pred_check_branch
          %508 = sbr.rel (%p506) target = $region52
        $region51: #{glam_forward.1} parent=11 // pred_region
          _
        $region52: #{glam_forward.1} parent=11 // pred_fallthru
          _
        // Predicated region
        $region53: #{glam_forward.1} parent=11 // pred_check
          %p509 = pneg %p283
        $region54: #{glam_forward.1} parent=11 // pred_check_branch
          %511 = sbr.rel (%p509) target = $region56
        $region55: #{glam_forward.1} parent=11 // pred_region
          _
        $region56: #{glam_forward.1} parent=11 // pred_fallthru
          _
        // Predicated region
        $region57: #{glam_forward.1} parent=11 // pred_check
          %p512 = pneg %p304
        $region58: #{glam_forward.1} parent=11 // pred_check_branch
          %514 = sbr.rel (%p512) target = $region60
        $region59: #{glam_forward.1} parent=11 // pred_region
          _
        $region60: #{glam_forward.1} parent=11 // pred_fallthru
          _
        // Predicated region
        $region61: #{glam_forward.1} parent=11 // pred_check
          %p515 = pneg %p325
        $region62: #{glam_forward.1} parent=11 // pred_check_branch
          %517 = sbr.rel (%p515) target = $region64
        $region63: #{glam_forward.1} parent=11 // pred_region
          _
        $region64: #{glam_forward.1} parent=11 // pred_fallthru
          _
        // Predicated region
        $region65: #{glam_forward.1} parent=11 // pred_check
          %p518 = pneg %p346
        $region66: #{glam_forward.1} parent=11 // pred_check_branch
          %520 = sbr.rel (%p518) target = $region68
        $region67: #{glam_forward.1} parent=11 // pred_region
          _
        $region68: #{glam_forward.1} parent=11 // pred_fallthru
          _
        // Predicated region
        $region69: #{glam_forward.1} parent=11 // pred_check
          %p521 = pneg %p367
        $region70: #{glam_forward.1} parent=11 // pred_check_branch
          %523 = sbr.rel (%p521) target = $region72
        $region71: #{glam_forward.1} parent=11 // pred_region
          _
        $region72: #{glam_forward.1} parent=11 // pred_fallthru
          _
        // Predicated region
        $region73: #{glam_forward.1} parent=11 // pred_check
          %p524 = pneg %p388
        $region74: #{glam_forward.1} parent=11 // pred_check_branch
          %526 = sbr.rel (%p524) target = $region76
        $region75: #{glam_forward.1} parent=11 // pred_region
          _
        $region76: #{glam_forward.1} parent=11 // pred_fallthru
          _
        // Predicated region
        $region77: #{glam_forward.1} parent=11 // pred_check
          %p527 = pneg %p409
        $region78: #{glam_forward.1} parent=11 // pred_check_branch
          %529 = sbr.rel (%p527) target = $region80
        $region79: #{glam_forward.1} parent=11 // pred_region
          _
        $region80: #{glam_forward.1} parent=11 // pred_fallthru
          _
        // Predicated region
        $region81: #{glam_forward.1} parent=11 // pred_check
          %p530 = pneg %p430
        $region82: #{glam_forward.1} parent=11 // pred_check_branch
          %532 = sbr.rel (%p530) target = $region84
        $region83: #{glam_forward.1} parent=11 // pred_region
          _
        $region84: #{glam_forward.1} parent=11 // pred_fallthru
          _
      $region12: #{glam_forward.1} parent=5 // pred_fallthru
        _
      %p533 = scmp.lt.s32.totalorder %s26, 2
      // Predicated region
      $region85: #{glam_forward.1} parent=5 // pred_check
        %p534 = pneg %p533
      $region86: #{glam_forward.1} parent=5 // pred_check_branch
        %536 = sbr.rel (%p534) target = $region88
      $region87: #{glam_forward.1} parent=5 // pred_region
        // Predicated region
        $region89: #{glam_forward.1} parent=87 // pred_check
          %p537 = pneg %p88
        $region90: #{glam_forward.1} parent=87 // pred_check_branch
          %539 = sbr.rel (%p537) target = $region92
        $region91: #{glam_forward.1} parent=87 // pred_region
          %p540 = scmp.lt.s32.totalorder %s26, 1
          %s541 = scalar_select %p540, %s26, 1
          %s542 = smul.addr %s541, 8
          %s543 = smul.addr %s542, 4
          %s544 = scalar_lea.vmem %s2, %s543
        $region92: #{glam_forward.1} parent=87 // pred_fallthru
          _
      $region88: #{glam_forward.1} parent=5 // pred_fallthru
        _
      %p545 = scmp.le.s32.totalorder 1, %s26
      %p546 = scmp.lt.s32.totalorder %s26, 3
      %p547 = pnand %p545, %p546
      %p548 = pneg %p547
      // Predicated region
      $region93: #{glam_forward.1} parent=5 // pred_check
        _
      $region94: #{glam_forward.1} parent=5 // pred_check_branch
        %550 = sbr.rel (%p547) target = $region96
      $region95: #{glam_forward.1} parent=5 // pred_region
        %s551 = ssub.s32 %s26, 1
        // Predicated region
        $region97: #{glam_forward.1} parent=95 // pred_check
          %p552 = pneg %p47
        $region98: #{glam_forward.1} parent=95 // pred_check_branch
          %554 = sbr.rel (%p552) target = $region100
        $region99: #{glam_forward.1} parent=95 // pred_region
          %555 = dma.done [#allocation5], 16
        $region100: #{glam_forward.1} parent=95 // pred_fallthru
          _
        %556 = sfence
        %p557 = pneg %p47
        %p558 = pneg %p44
        %p559 = pneg %p68
        %p560 = pneg %p65
        %p561 = scmp.lt.s32.totalorder %s31, 1
        %s562 = scalar_select %p561, %s31, 1
        %s563 = smul.addr %s562, 8
        %s564 = smul.addr %s563, 4
        %s565 = scalar_lea.vmem %s2, %s564
        %p566 = pneg %p94
        %p567 = pneg %p91
        %p568 = pneg %p115
        %p569 = pneg %p112
        %p570 = pneg %p136
        %p571 = pneg %p133
        %p572 = pneg %p157
        %p573 = pneg %p154
        %p574 = pneg %p178
        %p575 = pneg %p175
        %p576 = pneg %p199
        %p577 = pneg %p196
        %p578 = pneg %p220
        %p579 = pneg %p217
        %p580 = pneg %p241
        %p581 = pneg %p238
        %p582 = pneg %p262
        %p583 = pneg %p259
        %p584 = pneg %p283
        %p585 = pneg %p280
        %p586 = pneg %p304
        %p587 = pneg %p301
        %p588 = pneg %p325
        %p589 = pneg %p322
        %p590 = pneg %p346
        %p591 = pneg %p343
        %p592 = pneg %p367
        %p593 = pneg %p364
        %p594 = pneg %p388
        %p595 = pneg %p385
        %p596 = pneg %p409
        %p597 = pneg %p406
        %p598 = pneg %p430
        %p599 = pneg %p427
        %p600 = pneg %p456
        %p601 = pneg %p453
        %p602 = scmp.lt.s32.totalorder %s31, 1
        %s603 = scalar_select %p602, %s31, 1
        %s604 = smul.addr %s603, 8
        %s605 = smul.addr %s604, 8
        %s606 = scalar_lea.vmem %s19, %s605
        %p607 = scmp.lt.s32.totalorder %s31, 1
        %s608 = scalar_select %p607, %s31, 1
        %s609 = smul.addr %s608, 8
        %s610 = smul.addr %s609, 4
        %s611 = scalar_lea.vmem %s2, %s610
        %p612 = scmp.lt.s32.totalorder %s31, 1
        %s613 = scalar_select %p612, %s31, 1
        %s614 = smul.addr %s613, 8
        %s615 = smul.addr %s614, 8
        %s616 = scalar_lea.vmem %s19, %s615
        %v618 = vld [vmem:[%s611] sm:$0xf]
        %v619 = vld [vmem:[%s611 + $0x4] sm:$0xf]
        %v620 = vld [vmem:[%s611 + $0x8] sm:$0xf]
        %v621 = vld [vmem:[%s611 + $0xc] sm:$0xf]
        %v622 = vld [vmem:[%s611 + $0x10] sm:$0xf]
        %v623 = vld [vmem:[%s611 + $0x14] sm:$0xf]
        %v624 = vld [vmem:[%s611 + $0x18] sm:$0xf]
        %v625 = vld [vmem:[%s611 + $0x1c] sm:$0xf]
        %v626 = vunpack.c.l.bf16 %v618
        %v627 = vunpack.c.l.bf16 %v619
        %v628 = vunpack.c.l.bf16 %v620
        %v629 = vunpack.c.l.bf16 %v621
        %v630 = vunpack.c.l.bf16 %v622
        %v631 = vunpack.c.l.bf16 %v623
        %v632 = vunpack.c.l.bf16 %v624
        %v633 = vunpack.c.l.bf16 %v625
        %vm634 = vcmask 64512
        %v635 = vsel %vm634, %v626, 0.0
        %v636 = vsel %vm634, %v627, 0.0
        %v637 = vadd.f32 %v635, %v636
        %v638 = vsel %vm634, %v628, 0.0
        %v639 = vadd.f32 %v637, %v638
        %v640 = vsel %vm634, %v629, 0.0
        %v641 = vadd.f32 %v639, %v640
        %v642 = vsel %vm634, %v630, 0.0
        %v643 = vadd.f32 %v641, %v642
        %v644 = vsel %vm634, %v631, 0.0
        %v645 = vadd.f32 %v643, %v644
        %v646 = vsel %vm634, %v632, 0.0
        %v647 = vadd.f32 %v645, %v646
        %v648 = vsel %vm634, %v633, 0.0
        %v649 = vadd.f32 %v647, %v648
        %v650 = vrot.slane %v649, 4
        %v651 = vadd.f32 %v649, %v650
        %v652 = vrot.slane %v651, 2
        %v653 = vadd.f32 %v651, %v652
        %v654 = vrot.slane %v653, 1
        %v655 = vadd.f32 %v653, %v654
        %v656 = vrcp.pop 64.0
        %v657 = vmul.f32 %v655, %v656
        %v658 = vld [vmem:[%s3] sm:$0xff]
        %s659 = sld [smem:[#allocation4]]
        %v660 = vstv %s659
        %v662 = vsel %vm634, %v657, 0
        %664 = vmatprep.subr.mxu0 0.0
        %665 = vmatpush1.msra.mxu0 0.0
        %666 = vmatprep.subr.mxu0 0.0
        %667 = vmatpush1.msra.mxu0 0.0
        %668 = vmatprep.subr.mxu0 0.0
        %669 = vmatpush1.msra.mxu0 0.0
        %670 = vmatprep.subr.mxu0 0.0
        %671 = vmatpush1.msra.mxu0 0.0
        %672 = vmatprep.subr.mxu0 0.0
        %673 = vmatpush1.msra.mxu0 0.0
        %674 = vmatprep.subr.mxu0 0.0
        %675 = vmatpush1.msra.mxu0 0.0
        %676 = vmatprep.subr.mxu0 0.0
        %677 = vmatpush1.msra.mxu0 0.0
        %678 = vmatprep.subr.mxu0 0.0
        %679 = vmatpush1.msra.mxu0 0.0
        %680 = vmatprep.subr.mxu0 0.0
        %681 = vmatpush1.msra.mxu0 0.0
        %682 = vmatprep.subr.mxu0 0.0
        %683 = vmatpush1.msra.mxu0 0.0
        %684 = vmatprep.subr.mxu0 0.0
        %685 = vmatpush1.msra.mxu0 0.0
        %686 = vmatprep.subr.mxu0 0.0
        %687 = vmatpush1.msra.mxu0 0.0
        %688 = vmatprep.subr.mxu0 0.0
        %689 = vmatpush1.msra.mxu0 0.0
        %690 = vmatprep.subr.mxu0 0.0
        %691 = vmatpush1.msra.mxu0 0.0
        %692 = vmatprep.subr.mxu0 0.0
        %693 = vmatpush1.msra.mxu0 0.0
        %694 = vmatprep.subr.mxu0 0.0
        %695 = vmatpush1.msra.mxu0 %v658
        %696 = vmatprep.subr.mxu0 0.0
        %697 = vmatpush2.msra.mxu0 0.0
        %698 = vmatprep.subr.mxu0 0.0
        %699 = vmatpush2.msra.mxu0 0.0
        %700 = vmatprep.subr.mxu0 0.0
        %701 = vmatpush2.msra.mxu0 0.0
        %702 = vmatprep.subr.mxu0 0.0
        %703 = vmatpush2.msra.mxu0 0.0
        %704 = vmatprep.subr.mxu0 0.0
        %705 = vmatpush2.msra.mxu0 0.0
        %706 = vmatprep.subr.mxu0 0.0
        %707 = vmatpush2.msra.mxu0 0.0
        %708 = vmatprep.subr.mxu0 0.0
        %709 = vmatpush2.msra.mxu0 0.0
        %710 = vmatprep.subr.mxu0 0.0
        %711 = vmatpush2.msra.mxu0 0.0
        %712 = vmatprep.subr.mxu0 0.0
        %713 = vmatpush2.msra.mxu0 0.0
        %714 = vmatprep.subr.mxu0 0.0
        %715 = vmatpush2.msra.mxu0 0.0
        %716 = vmatprep.subr.mxu0 0.0
        %717 = vmatpush2.msra.mxu0 0.0
        %718 = vmatprep.subr.mxu0 0.0
        %719 = vmatpush2.msra.mxu0 0.0
        %720 = vmatprep.subr.mxu0 0.0
        %721 = vmatpush2.msra.mxu0 0.0
        %722 = vmatprep.subr.mxu0 0.0
        %723 = vmatpush2.msra.mxu0 0.0
        %724 = vmatprep.subr.mxu0 0.0
        %725 = vmatpush2.msra.mxu0 0.0
        %726 = vmatprep.subr.mxu0 0.0
        %727 = vmatpush2.msra.mxu0 0.0
        %728 = vmatprep.mubr.f32.mxu0 0.0
        %729 = vmatmul.mubr.f32.gmra.mxu0 %v662
        %v730 = vpop.f32.mrf.mxu0
        %v731 = vadd.f32 %v660, %v730
        %v732 = vpop.f32.mrf.mxu0
        %733 = vdwg.mxu0
        %v734 = vxor.u32 %v731, 2147483648
        %v735 = vmul.f32 %v734, 1.442695
        %v736 = vpow.pop %v735
        %v737 = vadd.f32 %v736, 1.0
        %v738 = vrcp.pop %v737
        %v739 = vmul.f32 1.0, %v738
        %v740 = vld [vmem:[%s4] sm:$0xff]
        %s741 = sld [smem:[#allocation4 + $0x1]]
        %v742 = vstv %s741
        %743 = vmatprep.subr.mxu0 0.0
        %744 = vmatpush1.msra.mxu0 0.0
        %745 = vmatprep.subr.mxu0 0.0
        %746 = vmatpush1.msra.mxu0 0.0
        %747 = vmatprep.subr.mxu0 0.0
        %748 = vmatpush1.msra.mxu0 0.0
        %749 = vmatprep.subr.mxu0 0.0
        %750 = vmatpush1.msra.mxu0 0.0
        %751 = vmatprep.subr.mxu0 0.0
        %752 = vmatpush1.msra.mxu0 0.0
        %753 = vmatprep.subr.mxu0 0.0
        %754 = vmatpush1.msra.mxu0 0.0
        %755 = vmatprep.subr.mxu0 0.0
        %756 = vmatpush1.msra.mxu0 0.0
        %757 = vmatprep.subr.mxu0 0.0
        %758 = vmatpush1.msra.mxu0 0.0
        %759 = vmatprep.subr.mxu0 0.0
        %760 = vmatpush1.msra.mxu0 0.0
        %761 = vmatprep.subr.mxu0 0.0
        %762 = vmatpush1.msra.mxu0 0.0
        %763 = vmatprep.subr.mxu0 0.0
        %764 = vmatpush1.msra.mxu0 0.0
        %765 = vmatprep.subr.mxu0 0.0
        %766 = vmatpush1.msra.mxu0 0.0
        %767 = vmatprep.subr.mxu0 0.0
        %768 = vmatpush1.msra.mxu0 0.0
        %769 = vmatprep.subr.mxu0 0.0
        %770 = vmatpush1.msra.mxu0 0.0
        %771 = vmatprep.subr.mxu0 0.0
        %772 = vmatpush1.msra.mxu0 0.0
        %773 = vmatprep.subr.mxu0 0.0
        %774 = vmatpush1.msra.mxu0 %v740
        %775 = vmatprep.subr.mxu0 0.0
        %776 = vmatpush2.msra.mxu0 0.0
        %777 = vmatprep.subr.mxu0 0.0
        %778 = vmatpush2.msra.mxu0 0.0
        %779 = vmatprep.subr.mxu0 0.0
        %780 = vmatpush2.msra.mxu0 0.0
        %781 = vmatprep.subr.mxu0 0.0
        %782 = vmatpush2.msra.mxu0 0.0
        %783 = vmatprep.subr.mxu0 0.0
        %784 = vmatpush2.msra.mxu0 0.0
        %785 = vmatprep.subr.mxu0 0.0
        %786 = vmatpush2.msra.mxu0 0.0
        %787 = vmatprep.subr.mxu0 0.0
        %788 = vmatpush2.msra.mxu0 0.0
        %789 = vmatprep.subr.mxu0 0.0
        %790 = vmatpush2.msra.mxu0 0.0
        %791 = vmatprep.subr.mxu0 0.0
        %792 = vmatpush2.msra.mxu0 0.0
        %793 = vmatprep.subr.mxu0 0.0
        %794 = vmatpush2.msra.mxu0 0.0
        %795 = vmatprep.subr.mxu0 0.0
        %796 = vmatpush2.msra.mxu0 0.0
        %797 = vmatprep.subr.mxu0 0.0
        %798 = vmatpush2.msra.mxu0 0.0
        %799 = vmatprep.subr.mxu0 0.0
        %800 = vmatpush2.msra.mxu0 0.0
        %801 = vmatprep.subr.mxu0 0.0
        %802 = vmatpush2.msra.mxu0 0.0
        %803 = vmatprep.subr.mxu0 0.0
        %804 = vmatpush2.msra.mxu0 0.0
        %805 = vmatprep.subr.mxu0 0.0
        %806 = vmatpush2.msra.mxu0 0.0
        %807 = vmatprep.mubr.f32.mxu0 0.0
        %808 = vmatmul.mubr.f32.gmra.mxu0 %v662
        %v809 = vpop.f32.mrf.mxu0
        %v810 = vadd.f32 %v742, %v809
        %v811 = vpop.f32.mrf.mxu0
        %812 = vdwg.mxu0
        %v813 = vxor.u32 %v810, 2147483648
        %v814 = vmul.f32 %v813, 1.442695
        %v815 = vpow.pop %v814
        %v816 = vadd.f32 %v815, 1.0
        %v817 = vrcp.pop %v816
        %v818 = vmul.f32 1.0, %v817
        %v819 = vld [vmem:[%s5] sm:$0xff]
        %s820 = sld [smem:[#allocation4 + $0x2]]
        %v821 = vstv %s820
        %822 = vmatprep.subr.mxu0 0.0
        %823 = vmatpush1.msra.mxu0 0.0
        %824 = vmatprep.subr.mxu0 0.0
        %825 = vmatpush1.msra.mxu0 0.0
        %826 = vmatprep.subr.mxu0 0.0
        %827 = vmatpush1.msra.mxu0 0.0
        %828 = vmatprep.subr.mxu0 0.0
        %829 = vmatpush1.msra.mxu0 0.0
        %830 = vmatprep.subr.mxu0 0.0
        %831 = vmatpush1.msra.mxu0 0.0
        %832 = vmatprep.subr.mxu0 0.0
        %833 = vmatpush1.msra.mxu0 0.0
        %834 = vmatprep.subr.mxu0 0.0
        %835 = vmatpush1.msra.mxu0 0.0
        %836 = vmatprep.subr.mxu0 0.0
        %837 = vmatpush1.msra.mxu0 0.0
        %838 = vmatprep.subr.mxu0 0.0
        %839 = vmatpush1.msra.mxu0 0.0
        %840 = vmatprep.subr.mxu0 0.0
        %841 = vmatpush1.msra.mxu0 0.0
        %842 = vmatprep.subr.mxu0 0.0
        %843 = vmatpush1.msra.mxu0 0.0
        %844 = vmatprep.subr.mxu0 0.0
        %845 = vmatpush1.msra.mxu0 0.0
        %846 = vmatprep.subr.mxu0 0.0
        %847 = vmatpush1.msra.mxu0 0.0
        %848 = vmatprep.subr.mxu0 0.0
        %849 = vmatpush1.msra.mxu0 0.0
        %850 = vmatprep.subr.mxu0 0.0
        %851 = vmatpush1.msra.mxu0 0.0
        %852 = vmatprep.subr.mxu0 0.0
        %853 = vmatpush1.msra.mxu0 %v819
        %854 = vmatprep.subr.mxu0 0.0
        %855 = vmatpush2.msra.mxu0 0.0
        %856 = vmatprep.subr.mxu0 0.0
        %857 = vmatpush2.msra.mxu0 0.0
        %858 = vmatprep.subr.mxu0 0.0
        %859 = vmatpush2.msra.mxu0 0.0
        %860 = vmatprep.subr.mxu0 0.0
        %861 = vmatpush2.msra.mxu0 0.0
        %862 = vmatprep.subr.mxu0 0.0
        %863 = vmatpush2.msra.mxu0 0.0
        %864 = vmatprep.subr.mxu0 0.0
        %865 = vmatpush2.msra.mxu0 0.0
        %866 = vmatprep.subr.mxu0 0.0
        %867 = vmatpush2.msra.mxu0 0.0
        %868 = vmatprep.subr.mxu0 0.0
        %869 = vmatpush2.msra.mxu0 0.0
        %870 = vmatprep.subr.mxu0 0.0
        %871 = vmatpush2.msra.mxu0 0.0
        %872 = vmatprep.subr.mxu0 0.0
        %873 = vmatpush2.msra.mxu0 0.0
        %874 = vmatprep.subr.mxu0 0.0
        %875 = vmatpush2.msra.mxu0 0.0
        %876 = vmatprep.subr.mxu0 0.0
        %877 = vmatpush2.msra.mxu0 0.0
        %878 = vmatprep.subr.mxu0 0.0
        %879 = vmatpush2.msra.mxu0 0.0
        %880 = vmatprep.subr.mxu0 0.0
        %881 = vmatpush2.msra.mxu0 0.0
        %882 = vmatprep.subr.mxu0 0.0
        %883 = vmatpush2.msra.mxu0 0.0
        %884 = vmatprep.subr.mxu0 0.0
        %885 = vmatpush2.msra.mxu0 0.0
        %886 = vmatprep.mubr.f32.mxu0 0.0
        %887 = vmatmul.mubr.f32.gmra.mxu0 %v662
        %v888 = vpop.f32.mrf.mxu0
        %v889 = vadd.f32 %v821, %v888
        %v890 = vpop.f32.mrf.mxu0
        %891 = vdwg.mxu0
        %v892 = vxor.u32 %v889, 2147483648
        %v893 = vmul.f32 %v892, 1.442695
        %v894 = vpow.pop %v893
        %v895 = vadd.f32 %v894, 1.0
        %v896 = vrcp.pop %v895
        %v897 = vmul.f32 1.0, %v896
        %898 = vxpose.xlu0.b32.start [1/16] %v897, 128
        %899 = vxpose.xlu0.b32.cont [2/16] 0.0, 128
        %900 = vxpose.xlu0.b32.cont [3/16] 0.0, 128
        %901 = vxpose.xlu0.b32.cont [4/16] 0.0, 128
        %902 = vxpose.xlu0.b32.cont [5/16] 0.0, 128
        %903 = vxpose.xlu0.b32.cont [6/16] 0.0, 128
        %904 = vxpose.xlu0.b32.cont [7/16] 0.0, 128
        %905 = vxpose.xlu0.b32.cont [8/16] 0.0, 128
        %906 = vxpose.xlu0.b32.cont [9/16] 0.0, 128
        %907 = vxpose.xlu0.b32.cont [10/16] 0.0, 128
        %908 = vxpose.xlu0.b32.cont [11/16] 0.0, 128
        %909 = vxpose.xlu0.b32.cont [12/16] 0.0, 128
        %910 = vxpose.xlu0.b32.cont [13/16] 0.0, 128
        %911 = vxpose.xlu0.b32.cont [14/16] 0.0, 128
        %912 = vxpose.xlu0.b32.cont [15/16] 0.0, 128
        %913 = vxpose.xlu0.b32.end [16/16] 0.0, 128
        %v914 = vpop.trf.xlu0
        %v915 = vpop.trf.xlu0
        %v916 = vpop.trf.xlu0
        %v917 = vpop.trf.xlu0
        %v918 = vpop.trf.xlu0
        %v919 = vpop.trf.xlu0
        %v920 = vpop.trf.xlu0
        %v921 = vpop.trf.xlu0
        %v922 = vpop.trf.xlu0
        %v923 = vpop.trf.xlu0
        %v924 = vpop.trf.xlu0
        %v925 = vpop.trf.xlu0
        %v926 = vpop.trf.xlu0
        %v927 = vpop.trf.xlu0
        %v928 = vpop.trf.xlu0
        %v929 = vpop.trf.xlu0
        %vm930 = vcmask 7168
        %v932 = vsel %vm930, %v914, 0
        %vm934 = vcmask 1040384
        %v936 = vsel %vm934, %v818, 0
        %938 = vmatprep.subr.mxu0 0.0
        %939 = vmatpush1.msra.mxu0 0.0
        %940 = vmatprep.subr.mxu0 0.0
        %941 = vmatpush1.msra.mxu0 0.0
        %942 = vmatprep.subr.mxu0 0.0
        %943 = vmatpush1.msra.mxu0 0.0
        %944 = vmatprep.subr.mxu0 0.0
        %945 = vmatpush1.msra.mxu0 0.0
        %946 = vmatprep.subr.mxu0 0.0
        %947 = vmatpush1.msra.mxu0 0.0
        %948 = vmatprep.subr.mxu0 0.0
        %949 = vmatpush1.msra.mxu0 0.0
        %950 = vmatprep.subr.mxu0 0.0
        %951 = vmatpush1.msra.mxu0 0.0
        %952 = vmatprep.subr.mxu0 0.0
        %953 = vmatpush1.msra.mxu0 0.0
        %954 = vmatprep.subr.mxu0 0.0
        %955 = vmatpush1.msra.mxu0 0.0
        %956 = vmatprep.subr.mxu0 0.0
        %957 = vmatpush1.msra.mxu0 0.0
        %958 = vmatprep.subr.mxu0 0.0
        %959 = vmatpush1.msra.mxu0 0.0
        %960 = vmatprep.subr.mxu0 0.0
        %961 = vmatpush1.msra.mxu0 0.0
        %962 = vmatprep.subr.mxu0 0.0
        %963 = vmatpush1.msra.mxu0 0.0
        %964 = vmatprep.subr.mxu0 0.0
        %965 = vmatpush1.msra.mxu0 0.0
        %966 = vmatprep.subr.mxu0 0.0
        %967 = vmatpush1.msra.mxu0 0.0
        %968 = vmatprep.subr.mxu0 0.0
        %969 = vmatpush1.msra.mxu0 %v936
        %970 = vmatprep.subr.mxu0 0.0
        %971 = vmatpush2.msra.mxu0 0.0
        %972 = vmatprep.subr.mxu0 0.0
        %973 = vmatpush2.msra.mxu0 0.0
        %974 = vmatprep.subr.mxu0 0.0
        %975 = vmatpush2.msra.mxu0 0.0
        %976 = vmatprep.subr.mxu0 0.0
        %977 = vmatpush2.msra.mxu0 0.0
        %978 = vmatprep.subr.mxu0 0.0
        %979 = vmatpush2.msra.mxu0 0.0
        %980 = vmatprep.subr.mxu0 0.0
        %981 = vmatpush2.msra.mxu0 0.0
        %982 = vmatprep.subr.mxu0 0.0
        %983 = vmatpush2.msra.mxu0 0.0
        %984 = vmatprep.subr.mxu0 0.0
        %985 = vmatpush2.msra.mxu0 0.0
        %986 = vmatprep.subr.mxu0 0.0
        %987 = vmatpush2.msra.mxu0 0.0
        %988 = vmatprep.subr.mxu0 0.0
        %989 = vmatpush2.msra.mxu0 0.0
        %990 = vmatprep.subr.mxu0 0.0
        %991 = vmatpush2.msra.mxu0 0.0
        %992 = vmatprep.subr.mxu0 0.0
        %993 = vmatpush2.msra.mxu0 0.0
        %994 = vmatprep.subr.mxu0 0.0
        %995 = vmatpush2.msra.mxu0 0.0
        %996 = vmatprep.subr.mxu0 0.0
        %997 = vmatpush2.msra.mxu0 0.0
        %998 = vmatprep.subr.mxu0 0.0
        %999 = vmatpush2.msra.mxu0 0.0
        %1000 = vmatprep.subr.mxu0 0.0
        %1001 = vmatpush2.msra.mxu0 0.0
        %1002 = vmatprep.mubr.f32.mxu0 0.0
        %1003 = vmatmul.mubr.f32.gmra.mxu0 %v932
        %v1004 = vpop.f32.mrf.mxu0
        %v1005 = vadd.f32 0.0, %v1004
        %v1006 = vpop.f32.mrf.mxu0
        %1007 = vdwg.mxu0
        %v1008 = vsel %vm634, %v1005, -inf
        %1009 = vmax.xlane.f32.xlu0 %v1008
        %v1010 = vpop.xlane.xlu0 %1009
        %v1011 = vrot.slane %v1010, 4
        %v1012 = vmax.f32 %v1010, %v1011
        %v1013 = vrot.slane %v1012, 2
        %v1014 = vmax.f32 %v1012, %v1013
        %v1015 = vrot.slane %v1014, 1
        %v1016 = vmax.f32 %v1014, %v1015
        %s1017 = vtos %v1016
        %v1018 = vstv %s1017
        %v1019 = vsub.f32 %v1005, %v1018
        %v1020 = vmul.f32 %v1019, 1.442695
        %v1021 = vpow.pop %v1020
        %v1022 = vsel %vm634, %v1021, 0.0
        %1023 = vadd.xlane.f32.xlu0 %v1022
        %v1024 = vpop.xlane.xlu0 %1023
        %v1025 = vrot.slane %v1024, 4
        %v1026 = vadd.f32 %v1024, %v1025
        %v1027 = vrot.slane %v1026, 2
        %v1028 = vadd.f32 %v1026, %v1027
        %v1029 = vrot.slane %v1028, 1
        %v1030 = vadd.f32 %v1028, %v1029
        %s1031 = vtos %v1030
        %v1032 = vstv %s1031
        %v1033 = vrcp.pop %v1032
        %v1034 = vmul.f32 %v1021, %v1033
        %v1035 = vpack.c.bf16 %v1034, %v1034
        %v1036 = vld [vmem:[%s6] sm:$0xf]
        %v1037 = vld [vmem:[%s7] sm:$0x1]
        %v1039 = vlaneseq
        %v1040 = vshrl.u32 %v1039, 7
        %v1041 = vsub.s32 0, %v1040
        %v1042 = vrot.slane %v1037, %v1041
        %v1052 = vunpack.c.l.b16 %v618
        %v1053 = vunpack.c.l.b16 %v619
        %v1054 = vunpack.c.l.b16 %v620
        %v1055 = vunpack.c.l.b16 %v621
        %v1056 = vunpack.c.l.b16 %v622
        %v1057 = vunpack.c.l.b16 %v623
        %v1058 = vunpack.c.l.b16 %v624
        %v1059 = vunpack.c.l.b16 %v625
        %v1060 = vpack.c.b16 %v1053, %v1052
        %v1061 = vpack.c.b16 %v1055, %v1054
        %v1062 = vpack.c.b16 %v1057, %v1056
        %v1063 = vpack.c.b16 %v1059, %v1058
        %v1065 = vsel %vm634, %v1060, 0
        %v1068 = vsel %vm634, %v1061, 0
        %v1071 = vsel %vm634, %v1062, 0
        %v1074 = vsel %vm634, %v1063, 0
        %vm1076 = vcmask 1043456
        %v1078 = vsel %vm1076, %v1036, 0
        %1080 = vmatprep.subr.bf16.mxu0 0
        %1081 = vmatpush1.bf16.msra.mxu0 0
        %1082 = vmatprep.subr.bf16.mxu0 0
        %1083 = vmatpush1.bf16.msra.mxu0 0
        %1084 = vmatprep.subr.bf16.mxu0 0
        %1085 = vmatpush1.bf16.msra.mxu0 0
        %1086 = vmatprep.subr.bf16.mxu0 0
        %1087 = vmatpush1.bf16.msra.mxu0 0
        %1088 = vmatprep.subr.bf16.mxu0 0
        %1089 = vmatpush1.bf16.msra.mxu0 0
        %1090 = vmatprep.subr.bf16.mxu0 0
        %1091 = vmatpush1.bf16.msra.mxu0 0
        %1092 = vmatprep.subr.bf16.mxu0 0
        %1093 = vmatpush1.bf16.msra.mxu0 0
        %1094 = vmatprep.subr.bf16.mxu0 0
        %1095 = vmatpush1.bf16.msra.mxu0 %v1078
        %1096 = vmatprep.subr.bf16.mxu0 0
        %1097 = vmatpush2.bf16.msra.mxu0 0
        %1098 = vmatprep.subr.bf16.mxu0 0
        %1099 = vmatpush2.bf16.msra.mxu0 0
        %1100 = vmatprep.subr.bf16.mxu0 0
        %1101 = vmatpush2.bf16.msra.mxu0 0
        %1102 = vmatprep.subr.bf16.mxu0 0
        %1103 = vmatpush2.bf16.msra.mxu0 0
        %1104 = vmatprep.subr.bf16.mxu0 0
        %1105 = vmatpush2.bf16.msra.mxu0 0
        %1106 = vmatprep.subr.bf16.mxu0 0
        %1107 = vmatpush2.bf16.msra.mxu0 0
        %1108 = vmatprep.subr.bf16.mxu0 0
        %1109 = vmatpush2.bf16.msra.mxu0 0
        %1110 = vmatprep.subr.bf16.mxu0 0
        %1111 = vmatpush2.bf16.msra.mxu0 0
        %1112 = vmatprep.mubr.bf16.mxu0 0
        %1113 = vmatmul.mubr.bf16.gmra.mxu0 %v1065
        %v1114 = vpop.f32.mrf.mxu0
        %v1115 = vadd.f32 %v1042, %v1114
        %v1116 = vpop.f32.mrf.mxu0
        %v1117 = vpop.f32.mrf.mxu0
        %v1118 = vadd.f32 %v1042, %v1117
        %v1119 = vpop.f32.mrf.mxu0
        %1120 = vmatprep.mubr.bf16.mxu0 0
        %1121 = vmatmul.mubr.bf16.gmra.mxu0 %v1068
        %v1122 = vpop.f32.mrf.mxu0
        %v1123 = vadd.f32 %v1042, %v1122
        %v1124 = vpop.f32.mrf.mxu0
        %v1125 = vpop.f32.mrf.mxu0
        %v1126 = vadd.f32 %v1042, %v1125
        %v1127 = vpop.f32.mrf.mxu0
        %1128 = vmatprep.mubr.bf16.mxu0 0
        %1129 = vmatmul.mubr.bf16.gmra.mxu0 %v1071
        %v1130 = vpop.f32.mrf.mxu0
        %v1131 = vadd.f32 %v1042, %v1130
        %v1132 = vpop.f32.mrf.mxu0
        %v1133 = vpop.f32.mrf.mxu0
        %v1134 = vadd.f32 %v1042, %v1133
        %v1135 = vpop.f32.mrf.mxu0
        %1136 = vmatprep.mubr.bf16.mxu0 0
        %1137 = vmatmul.mubr.bf16.gmra.mxu0 %v1074
        %v1138 = vpop.f32.mrf.mxu0
        %v1139 = vadd.f32 %v1042, %v1138
        %v1140 = vpop.f32.mrf.mxu0
        %v1141 = vpop.f32.mrf.mxu0
        %v1142 = vadd.f32 %v1042, %v1141
        %v1143 = vpop.f32.mrf.mxu0
        %1144 = vdwg.mxu0
        %vm1145 = vcmask 31744
        %1146 = vst.msk [vmem:[#allocation2] sm:$0xff] %vm1145, 0.0
        %1147 = vst.msk [vmem:[#allocation2 + $0x8] sm:$0xff] %vm1145, 0.0
        %1148 = vst.msk [vmem:[#allocation2 + $0x10] sm:$0xff] %vm1145, 0.0
        %1149 = vst.msk [vmem:[#allocation2 + $0x18] sm:$0xff] %vm1145, 0.0
        %1150 = vst.msk [vmem:[#allocation2 + $0x60] sm:$0xff] %vm1145, 0.0
        %1151 = vst.msk [vmem:[#allocation2 + $0x68] sm:$0xff] %vm1145, 0.0
        %1152 = vst.msk [vmem:[#allocation2 + $0x70] sm:$0xff] %vm1145, 0.0
        %1153 = vst.msk [vmem:[#allocation2 + $0x78] sm:$0xff] %vm1145, 0.0
        %1154 = vst.msk [vmem:[#allocation2 + $0x20] sm:$0xff] %vm1145, %v1115
        %1155 = vst.msk [vmem:[#allocation2 + $0x28] sm:$0xff] %vm1145, %v1118
        %1156 = vst.msk [vmem:[#allocation2 + $0x30] sm:$0xff] %vm1145, %v1123
        %1157 = vst.msk [vmem:[#allocation2 + $0x38] sm:$0xff] %vm1145, %v1126
        %1158 = vst.msk [vmem:[#allocation2 + $0x40] sm:$0xff] %vm1145, %v1131
        %1159 = vst.msk [vmem:[#allocation2 + $0x48] sm:$0xff] %vm1145, %v1134
        %1160 = vst.msk [vmem:[#allocation2 + $0x50] sm:$0xff] %vm1145, %v1139
        %1161 = vst.msk [vmem:[#allocation2 + $0x58] sm:$0xff] %vm1145, %v1142
        %v1162 = vld [vmem:[%s1] sm:$0xff]
        %v1163 = vld [vmem:[%s1 + $0x8] sm:$0xff]
        %v1164 = vld [vmem:[%s1 + $0x10] sm:$0xff]
        %v1165 = vld [vmem:[%s1 + $0x18] sm:$0xff]
        %v1166 = vld [vmem:[%s1 + $0x20] sm:$0xff]
        %v1167 = vld [vmem:[%s1 + $0x28] sm:$0xff]
        %v1168 = vld [vmem:[%s1 + $0x30] sm:$0xff]
        %v1169 = vld [vmem:[%s1 + $0x38] sm:$0xff]
        %v1170 = vld [vmem:[#allocation2 + $0x17] sm:$0xff]
        %v1171 = vld [vmem:[#allocation2 + $0x1f] sm:$0xff]
        %v1172 = vld [vmem:[#allocation2 + $0x27] sm:$0xff]
        %v1173 = vld [vmem:[#allocation2 + $0x2f] sm:$0xff]
        %v1174 = vld [vmem:[#allocation2 + $0x37] sm:$0xff]
        %v1175 = vld [vmem:[#allocation2 + $0x3f] sm:$0xff]
        %v1176 = vld [vmem:[#allocation2 + $0x47] sm:$0xff]
        %v1177 = vld [vmem:[#allocation2 + $0x4f] sm:$0xff]
        %v1178 = vadd.s32 %v1162, 4294967295
        %v1179 = vadd.s32 %v1163, 4294967295
        %v1180 = vadd.s32 %v1164, 4294967295
        %v1181 = vadd.s32 %v1165, 4294967295
        %v1182 = vadd.s32 %v1166, 4294967295
        %v1183 = vadd.s32 %v1167, 4294967295
        %v1184 = vadd.s32 %v1168, 4294967295
        %v1185 = vadd.s32 %v1169, 4294967295
        %vm1186 = vcmp.ge.s32.totalorder %v1178, 0
        %vm1187 = vcmp.ge.s32.totalorder %v1179, 0
        %vm1188 = vcmp.ge.s32.totalorder %v1180, 0
        %vm1189 = vcmp.ge.s32.totalorder %v1181, 0
        %vm1190 = vcmp.ge.s32.totalorder %v1182, 0
        %vm1191 = vcmp.ge.s32.totalorder %v1183, 0
        %vm1192 = vcmp.ge.s32.totalorder %v1184, 0
        %vm1193 = vcmp.ge.s32.totalorder %v1185, 0
        %vm1194 = vcmp.lt.s32.totalorder %v1178, 8
        %vm1195 = vcmp.lt.s32.totalorder %v1179, 8
        %vm1196 = vcmp.lt.s32.totalorder %v1180, 8
        %vm1197 = vcmp.lt.s32.totalorder %v1181, 8
        %vm1198 = vcmp.lt.s32.totalorder %v1182, 8
        %vm1199 = vcmp.lt.s32.totalorder %v1183, 8
        %vm1200 = vcmp.lt.s32.totalorder %v1184, 8
        %vm1201 = vcmp.lt.s32.totalorder %v1185, 8
        %vm1202 = vmand %vm1186, %vm1194
        %vm1203 = vmand %vm1187, %vm1195
        %vm1204 = vmand %vm1188, %vm1196
        %vm1205 = vmand %vm1189, %vm1197
        %vm1206 = vmand %vm1190, %vm1198
        %vm1207 = vmand %vm1191, %vm1199
        %vm1208 = vmand %vm1192, %vm1200
        %vm1209 = vmand %vm1193, %vm1201
        %v1210 = vsel %vm1202, 1, 0
        %v1211 = vsel %vm1203, 1, 0
        %v1212 = vsel %vm1204, 1, 0
        %v1213 = vsel %vm1205, 1, 0
        %v1214 = vsel %vm1206, 1, 0
        %v1215 = vsel %vm1207, 1, 0
        %v1216 = vsel %vm1208, 1, 0
        %v1217 = vsel %vm1209, 1, 0
        %1218 = vset.pattern.permute.xlu0 0
        %1219 = vperm.xlu0 %1218, %v1210
        %v1220 = vpop.permute.xlu0 %1219
        %1221 = vset.pattern.permute.xlu0 0
        %1222 = vperm.xlu0 %1221, %v1211
        %v1223 = vpop.permute.xlu0 %1222
        %1224 = vset.pattern.permute.xlu0 0
        %1225 = vperm.xlu0 %1224, %v1212
        %v1226 = vpop.permute.xlu0 %1225
        %1227 = vset.pattern.permute.xlu0 0
        %1228 = vperm.xlu0 %1227, %v1213
        %v1229 = vpop.permute.xlu0 %1228
        %1230 = vset.pattern.permute.xlu0 0
        %1231 = vperm.xlu0 %1230, %v1214
        %v1232 = vpop.permute.xlu0 %1231
        %1233 = vset.pattern.permute.xlu0 0
        %1234 = vperm.xlu0 %1233, %v1215
        %v1235 = vpop.permute.xlu0 %1234
        %1236 = vset.pattern.permute.xlu0 0
        %1237 = vperm.xlu0 %1236, %v1216
        %v1238 = vpop.permute.xlu0 %1237
        %1239 = vset.pattern.permute.xlu0 0
        %1240 = vperm.xlu0 %1239, %v1217
        %v1241 = vpop.permute.xlu0 %1240
        %vm1242 = vcmp.eq.s32.totalorder %v1220, 1
        %vm1243 = vcmp.eq.s32.totalorder %v1223, 1
        %vm1244 = vcmp.eq.s32.totalorder %v1226, 1
        %vm1245 = vcmp.eq.s32.totalorder %v1229, 1
        %vm1246 = vcmp.eq.s32.totalorder %v1232, 1
        %vm1247 = vcmp.eq.s32.totalorder %v1235, 1
        %vm1248 = vcmp.eq.s32.totalorder %v1238, 1
        %vm1249 = vcmp.eq.s32.totalorder %v1241, 1
        %v1250 = vsel %vm1242, %v1170, 0.0
        %v1251 = vsel %vm1243, %v1171, 0.0
        %v1252 = vsel %vm1244, %v1172, 0.0
        %v1253 = vsel %vm1245, %v1173, 0.0
        %v1254 = vsel %vm1246, %v1174, 0.0
        %v1255 = vsel %vm1247, %v1175, 0.0
        %v1256 = vsel %vm1248, %v1176, 0.0
        %v1257 = vsel %vm1249, %v1177, 0.0
        %v1258 = vpack.c.bf16 %v1251, %v1250
        %v1259 = vpack.c.bf16 %v1253, %v1252
        %v1260 = vpack.c.bf16 %v1255, %v1254
        %v1261 = vpack.c.bf16 %v1257, %v1256
        %v1266 = vunpack.c.l.b16 %v1258
        %v1267 = vunpack.c.h.b16 %v1258
        %v1268 = vunpack.c.l.b16 %v1259
        %v1269 = vunpack.c.h.b16 %v1259
        %v1270 = vunpack.c.l.b16 %v1260
        %v1271 = vunpack.c.h.b16 %v1260
        %v1272 = vunpack.c.l.b16 %v1261
        %v1273 = vunpack.c.h.b16 %v1261
        %v1274 = vpack.c.b16 %v1266, %v1266
        %v1275 = vpack.c.b16 %v1267, %v1267
        %v1276 = vpack.c.b16 %v1268, %v1268
        %v1277 = vpack.c.b16 %v1269, %v1269
        %v1278 = vpack.c.b16 %v1270, %v1270
        %v1279 = vpack.c.b16 %v1271, %v1271
        %v1280 = vpack.c.b16 %v1272, %v1272
        %v1281 = vpack.c.b16 %v1273, %v1273
        %vm1290 = vcmask 27648
        %1291 = vst.msk [vmem:[#allocation3] sm:$0xf] %vm1290, %v1274
        %1292 = vst.msk [vmem:[#allocation3 + $0x4] sm:$0xf] %vm1290, %v1275
        %1293 = vst.msk [vmem:[#allocation3 + $0x8] sm:$0xf] %vm1290, %v1276
        %1294 = vst.msk [vmem:[#allocation3 + $0xc] sm:$0xf] %vm1290, %v1277
        %1295 = vst.msk [vmem:[#allocation3 + $0x10] sm:$0xf] %vm1290, %v1278
        %1296 = vst.msk [vmem:[#allocation3 + $0x14] sm:$0xf] %vm1290, %v1279
        %1297 = vst.msk [vmem:[#allocation3 + $0x18] sm:$0xf] %vm1290, %v1280
        %1298 = vst.msk [vmem:[#allocation3 + $0x1c] sm:$0xf] %vm1290, %v1281
        %v1299 = vld [vmem:[#allocation2 + $0x18] sm:$0xff]
        %v1300 = vld [vmem:[#allocation2 + $0x20] sm:$0xff]
        %v1301 = vld [vmem:[#allocation2 + $0x28] sm:$0xff]
        %v1302 = vld [vmem:[#allocation2 + $0x30] sm:$0xff]
        %v1303 = vld [vmem:[#allocation2 + $0x38] sm:$0xff]
        %v1304 = vld [vmem:[#allocation2 + $0x40] sm:$0xff]
        %v1305 = vld [vmem:[#allocation2 + $0x48] sm:$0xff]
        %v1306 = vld [vmem:[#allocation2 + $0x50] sm:$0xff]
        %v1307 = vpack.c.bf16 %v1300, %v1299
        %v1308 = vpack.c.bf16 %v1302, %v1301
        %v1309 = vpack.c.bf16 %v1304, %v1303
        %v1310 = vpack.c.bf16 %v1306, %v1305
        %v1315 = vunpack.c.l.b16 %v1307
        %v1316 = vunpack.c.h.b16 %v1307
        %v1317 = vunpack.c.l.b16 %v1308
        %v1318 = vunpack.c.h.b16 %v1308
        %v1319 = vunpack.c.l.b16 %v1309
        %v1320 = vunpack.c.h.b16 %v1309
        %v1321 = vunpack.c.l.b16 %v1310
        %v1322 = vunpack.c.h.b16 %v1310
        %v1323 = vpack.c.b16 %v1315, %v1315
        %v1324 = vpack.c.b16 %v1316, %v1316
        %v1325 = vpack.c.b16 %v1317, %v1317
        %v1326 = vpack.c.b16 %v1318, %v1318
        %v1327 = vpack.c.b16 %v1319, %v1319
        %v1328 = vpack.c.b16 %v1320, %v1320
        %v1329 = vpack.c.b16 %v1321, %v1321
        %v1330 = vpack.c.b16 %v1322, %v1322
        %1331 = vrot.lane.b32.xlu0 %v1323, 4
        %v1332 = vpop.permute.xlu0 %1331
        %1333 = vrot.lane.b32.xlu0 %v1324, 4
        %v1334 = vpop.permute.xlu0 %1333
        %1335 = vrot.lane.b32.xlu0 %v1325, 4
        %v1336 = vpop.permute.xlu0 %1335
        %1337 = vrot.lane.b32.xlu0 %v1326, 4
        %v1338 = vpop.permute.xlu0 %1337
        %1339 = vrot.lane.b32.xlu0 %v1327, 4
        %v1340 = vpop.permute.xlu0 %1339
        %1341 = vrot.lane.b32.xlu0 %v1328, 4
        %v1342 = vpop.permute.xlu0 %1341
        %1343 = vrot.lane.b32.xlu0 %v1329, 4
        %v1344 = vpop.permute.xlu0 %1343
        %1345 = vrot.lane.b32.xlu0 %v1330, 4
        %v1346 = vpop.permute.xlu0 %1345
        %vm1355 = vcmask 60448
        %1356 = vst.msk [vmem:[#allocation3] sm:$0xf] %vm1355, %v1332
        %1357 = vst.msk [vmem:[#allocation3 + $0x4] sm:$0xf] %vm1355, %v1334
        %1358 = vst.msk [vmem:[#allocation3 + $0x8] sm:$0xf] %vm1355, %v1336
        %1359 = vst.msk [vmem:[#allocation3 + $0xc] sm:$0xf] %vm1355, %v1338
        %1360 = vst.msk [vmem:[#allocation3 + $0x10] sm:$0xf] %vm1355, %v1340
        %1361 = vst.msk [vmem:[#allocation3 + $0x14] sm:$0xf] %vm1355, %v1342
        %1362 = vst.msk [vmem:[#allocation3 + $0x18] sm:$0xf] %vm1355, %v1344
        %1363 = vst.msk [vmem:[#allocation3 + $0x1c] sm:$0xf] %vm1355, %v1346
        %v1364 = vld [vmem:[#allocation2 + $0x19] sm:$0xff]
        %v1365 = vld [vmem:[#allocation2 + $0x21] sm:$0xff]
        %v1366 = vld [vmem:[#allocation2 + $0x29] sm:$0xff]
        %v1367 = vld [vmem:[#allocation2 + $0x31] sm:$0xff]
        %v1368 = vld [vmem:[#allocation2 + $0x39] sm:$0xff]
        %v1369 = vld [vmem:[#allocation2 + $0x41] sm:$0xff]
        %v1370 = vld [vmem:[#allocation2 + $0x49] sm:$0xff]
        %v1371 = vld [vmem:[#allocation2 + $0x51] sm:$0xff]
        %v1372 = vadd.s32 %v1162, 1
        %v1373 = vadd.s32 %v1163, 1
        %v1374 = vadd.s32 %v1164, 1
        %v1375 = vadd.s32 %v1165, 1
        %v1376 = vadd.s32 %v1166, 1
        %v1377 = vadd.s32 %v1167, 1
        %v1378 = vadd.s32 %v1168, 1
        %v1379 = vadd.s32 %v1169, 1
        %vm1380 = vcmp.ge.s32.totalorder %v1372, 0
        %vm1381 = vcmp.ge.s32.totalorder %v1373, 0
        %vm1382 = vcmp.ge.s32.totalorder %v1374, 0
        %vm1383 = vcmp.ge.s32.totalorder %v1375, 0
        %vm1384 = vcmp.ge.s32.totalorder %v1376, 0
        %vm1385 = vcmp.ge.s32.totalorder %v1377, 0
        %vm1386 = vcmp.ge.s32.totalorder %v1378, 0
        %vm1387 = vcmp.ge.s32.totalorder %v1379, 0
        %vm1388 = vcmp.lt.s32.totalorder %v1372, 8
        %vm1389 = vcmp.lt.s32.totalorder %v1373, 8
        %vm1390 = vcmp.lt.s32.totalorder %v1374, 8
        %vm1391 = vcmp.lt.s32.totalorder %v1375, 8
        %vm1392 = vcmp.lt.s32.totalorder %v1376, 8
        %vm1393 = vcmp.lt.s32.totalorder %v1377, 8
        %vm1394 = vcmp.lt.s32.totalorder %v1378, 8
        %vm1395 = vcmp.lt.s32.totalorder %v1379, 8
        %vm1396 = vmand %vm1380, %vm1388
        %vm1397 = vmand %vm1381, %vm1389
        %vm1398 = vmand %vm1382, %vm1390
        %vm1399 = vmand %vm1383, %vm1391
        %vm1400 = vmand %vm1384, %vm1392
        %vm1401 = vmand %vm1385, %vm1393
        %vm1402 = vmand %vm1386, %vm1394
        %vm1403 = vmand %vm1387, %vm1395
        %v1404 = vsel %vm1396, 1, 0
        %v1405 = vsel %vm1397, 1, 0
        %v1406 = vsel %vm1398, 1, 0
        %v1407 = vsel %vm1399, 1, 0
        %v1408 = vsel %vm1400, 1, 0
        %v1409 = vsel %vm1401, 1, 0
        %v1410 = vsel %vm1402, 1, 0
        %v1411 = vsel %vm1403, 1, 0
        %1412 = vset.pattern.permute.xlu0 0
        %1413 = vperm.xlu0 %1412, %v1404
        %v1414 = vpop.permute.xlu0 %1413
        %1415 = vset.pattern.permute.xlu0 0
        %1416 = vperm.xlu0 %1415, %v1405
        %v1417 = vpop.permute.xlu0 %1416
        %1418 = vset.pattern.permute.xlu0 0
        %1419 = vperm.xlu0 %1418, %v1406
        %v1420 = vpop.permute.xlu0 %1419
        %1421 = vset.pattern.permute.xlu0 0
        %1422 = vperm.xlu0 %1421, %v1407
        %v1423 = vpop.permute.xlu0 %1422
        %1424 = vset.pattern.permute.xlu0 0
        %1425 = vperm.xlu0 %1424, %v1408
        %v1426 = vpop.permute.xlu0 %1425
        %1427 = vset.pattern.permute.xlu0 0
        %1428 = vperm.xlu0 %1427, %v1409
        %v1429 = vpop.permute.xlu0 %1428
        %1430 = vset.pattern.permute.xlu0 0
        %1431 = vperm.xlu0 %1430, %v1410
        %v1432 = vpop.permute.xlu0 %1431
        %1433 = vset.pattern.permute.xlu0 0
        %1434 = vperm.xlu0 %1433, %v1411
        %v1435 = vpop.permute.xlu0 %1434
        %vm1436 = vcmp.eq.s32.totalorder %v1414, 1
        %vm1437 = vcmp.eq.s32.totalorder %v1417, 1
        %vm1438 = vcmp.eq.s32.totalorder %v1420, 1
        %vm1439 = vcmp.eq.s32.totalorder %v1423, 1
        %vm1440 = vcmp.eq.s32.totalorder %v1426, 1
        %vm1441 = vcmp.eq.s32.totalorder %v1429, 1
        %vm1442 = vcmp.eq.s32.totalorder %v1432, 1
        %vm1443 = vcmp.eq.s32.totalorder %v1435, 1
        %v1444 = vsel %vm1436, %v1364, 0.0
        %v1445 = vsel %vm1437, %v1365, 0.0
        %v1446 = vsel %vm1438, %v1366, 0.0
        %v1447 = vsel %vm1439, %v1367, 0.0
        %v1448 = vsel %vm1440, %v1368, 0.0
        %v1449 = vsel %vm1441, %v1369, 0.0
        %v1450 = vsel %vm1442, %v1370, 0.0
        %v1451 = vsel %vm1443, %v1371, 0.0
        %v1452 = vpack.c.bf16 %v1445, %v1444
        %v1453 = vpack.c.bf16 %v1447, %v1446
        %v1454 = vpack.c.bf16 %v1449, %v1448
        %v1455 = vpack.c.bf16 %v1451, %v1450
        %v1460 = vunpack.c.l.b16 %v1452
        %v1461 = vunpack.c.h.b16 %v1452
        %v1462 = vunpack.c.l.b16 %v1453
        %v1463 = vunpack.c.h.b16 %v1453
        %v1464 = vunpack.c.l.b16 %v1454
        %v1465 = vunpack.c.h.b16 %v1454
        %v1466 = vunpack.c.l.b16 %v1455
        %v1467 = vunpack.c.h.b16 %v1455
        %v1468 = vpack.c.b16 %v1460, %v1460
        %v1469 = vpack.c.b16 %v1461, %v1461
        %v1470 = vpack.c.b16 %v1462, %v1462
        %v1471 = vpack.c.b16 %v1463, %v1463
        %v1472 = vpack.c.b16 %v1464, %v1464
        %v1473 = vpack.c.b16 %v1465, %v1465
        %v1474 = vpack.c.b16 %v1466, %v1466
        %v1475 = vpack.c.b16 %v1467, %v1467
        %1476 = vrot.lane.b32.xlu0 %v1468, 8
        %v1477 = vpop.permute.xlu0 %1476
        %1478 = vrot.lane.b32.xlu0 %v1469, 8
        %v1479 = vpop.permute.xlu0 %1478
        %1480 = vrot.lane.b32.xlu0 %v1470, 8
        %v1481 = vpop.permute.xlu0 %1480
        %1482 = vrot.lane.b32.xlu0 %v1471, 8
        %v1483 = vpop.permute.xlu0 %1482
        %1484 = vrot.lane.b32.xlu0 %v1472, 8
        %v1485 = vpop.permute.xlu0 %1484
        %1486 = vrot.lane.b32.xlu0 %v1473, 8
        %v1487 = vpop.permute.xlu0 %1486
        %1488 = vrot.lane.b32.xlu0 %v1474, 8
        %v1489 = vpop.permute.xlu0 %1488
        %1490 = vrot.lane.b32.xlu0 %v1475, 8
        %v1491 = vpop.permute.xlu0 %1490
        %vm1500 = vcmask 93248
        %1501 = vst.msk [vmem:[#allocation3] sm:$0xf] %vm1500, %v1477
        %1502 = vst.msk [vmem:[#allocation3 + $0x4] sm:$0xf] %vm1500, %v1479
        %1503 = vst.msk [vmem:[#allocation3 + $0x8] sm:$0xf] %vm1500, %v1481
        %1504 = vst.msk [vmem:[#allocation3 + $0xc] sm:$0xf] %vm1500, %v1483
        %1505 = vst.msk [vmem:[#allocation3 + $0x10] sm:$0xf] %vm1500, %v1485
        %1506 = vst.msk [vmem:[#allocation3 + $0x14] sm:$0xf] %vm1500, %v1487
        %1507 = vst.msk [vmem:[#allocation3 + $0x18] sm:$0xf] %vm1500, %v1489
        %1508 = vst.msk [vmem:[#allocation3 + $0x1c] sm:$0xf] %vm1500, %v1491
        %v1509 = vld [vmem:[#allocation2 + $0x1f] sm:$0xff]
        %v1510 = vld [vmem:[#allocation2 + $0x27] sm:$0xff]
        %v1511 = vld [vmem:[#allocation2 + $0x2f] sm:$0xff]
        %v1512 = vld [vmem:[#allocation2 + $0x37] sm:$0xff]
        %v1513 = vld [vmem:[#allocation2 + $0x3f] sm:$0xff]
        %v1514 = vld [vmem:[#allocation2 + $0x47] sm:$0xff]
        %v1515 = vld [vmem:[#allocation2 + $0x4f] sm:$0xff]
        %v1516 = vld [vmem:[#allocation2 + $0x57] sm:$0xff]
        %v1517 = vsel %vm1242, %v1509, 0.0
        %v1518 = vsel %vm1243, %v1510, 0.0
        %v1519 = vsel %vm1244, %v1511, 0.0
        %v1520 = vsel %vm1245, %v1512, 0.0
        %v1521 = vsel %vm1246, %v1513, 0.0
        %v1522 = vsel %vm1247, %v1514, 0.0
        %v1523 = vsel %vm1248, %v1515, 0.0
        %v1524 = vsel %vm1249, %v1516, 0.0
        %v1525 = vpack.c.bf16 %v1518, %v1517
        %v1526 = vpack.c.bf16 %v1520, %v1519
        %v1527 = vpack.c.bf16 %v1522, %v1521
        %v1528 = vpack.c.bf16 %v1524, %v1523
        %v1533 = vunpack.c.l.b16 %v1525
        %v1534 = vunpack.c.h.b16 %v1525
        %v1535 = vunpack.c.l.b16 %v1526
        %v1536 = vunpack.c.h.b16 %v1526
        %v1537 = vunpack.c.l.b16 %v1527
        %v1538 = vunpack.c.h.b16 %v1527
        %v1539 = vunpack.c.l.b16 %v1528
        %v1540 = vunpack.c.h.b16 %v1528
        %v1541 = vpack.c.b16 %v1533, %v1533
        %v1542 = vpack.c.b16 %v1534, %v1534
        %v1543 = vpack.c.b16 %v1535, %v1535
        %v1544 = vpack.c.b16 %v1536, %v1536
        %v1545 = vpack.c.b16 %v1537, %v1537
        %v1546 = vpack.c.b16 %v1538, %v1538
        %v1547 = vpack.c.b16 %v1539, %v1539
        %v1548 = vpack.c.b16 %v1540, %v1540
        %1549 = vrot.lane.b32.xlu0 %v1541, 12
        %v1550 = vpop.permute.xlu0 %1549
        %1551 = vrot.lane.b32.xlu0 %v1542, 12
        %v1552 = vpop.permute.xlu0 %1551
        %1553 = vrot.lane.b32.xlu0 %v1543, 12
        %v1554 = vpop.permute.xlu0 %1553
        %1555 = vrot.lane.b32.xlu0 %v1544, 12
        %v1556 = vpop.permute.xlu0 %1555
        %1557 = vrot.lane.b32.xlu0 %v1545, 12
        %v1558 = vpop.permute.xlu0 %1557
        %1559 = vrot.lane.b32.xlu0 %v1546, 12
        %v1560 = vpop.permute.xlu0 %1559
        %1561 = vrot.lane.b32.xlu0 %v1547, 12
        %v1562 = vpop.permute.xlu0 %1561
        %1563 = vrot.lane.b32.xlu0 %v1548, 12
        %v1564 = vpop.permute.xlu0 %1563
        %vm1573 = vcmask 126048
        %1574 = vst.msk [vmem:[#allocation3] sm:$0xf] %vm1573, %v1550
        %1575 = vst.msk [vmem:[#allocation3 + $0x4] sm:$0xf] %vm1573, %v1552
        %1576 = vst.msk [vmem:[#allocation3 + $0x8] sm:$0xf] %vm1573, %v1554
        %1577 = vst.msk [vmem:[#allocation3 + $0xc] sm:$0xf] %vm1573, %v1556
        %1578 = vst.msk [vmem:[#allocation3 + $0x10] sm:$0xf] %vm1573, %v1558
        %1579 = vst.msk [vmem:[#allocation3 + $0x14] sm:$0xf] %vm1573, %v1560
        %1580 = vst.msk [vmem:[#allocation3 + $0x18] sm:$0xf] %vm1573, %v1562
        %1581 = vst.msk [vmem:[#allocation3 + $0x1c] sm:$0xf] %vm1573, %v1564
        %v1582 = vld [vmem:[#allocation2 + $0x20] sm:$0xff]
        %v1583 = vld [vmem:[#allocation2 + $0x28] sm:$0xff]
        %v1584 = vld [vmem:[#allocation2 + $0x30] sm:$0xff]
        %v1585 = vld [vmem:[#allocation2 + $0x38] sm:$0xff]
        %v1586 = vld [vmem:[#allocation2 + $0x40] sm:$0xff]
        %v1587 = vld [vmem:[#allocation2 + $0x48] sm:$0xff]
        %v1588 = vld [vmem:[#allocation2 + $0x50] sm:$0xff]
        %v1589 = vld [vmem:[#allocation2 + $0x58] sm:$0xff]
        %v1590 = vpack.c.bf16 %v1583, %v1582
        %v1591 = vpack.c.bf16 %v1585, %v1584
        %v1592 = vpack.c.bf16 %v1587, %v1586
        %v1593 = vpack.c.bf16 %v1589, %v1588
        %v1598 = vunpack.c.l.b16 %v1590
        %v1599 = vunpack.c.h.b16 %v1590
        %v1600 = vunpack.c.l.b16 %v1591
        %v1601 = vunpack.c.h.b16 %v1591
        %v1602 = vunpack.c.l.b16 %v1592
        %v1603 = vunpack.c.h.b16 %v1592
        %v1604 = vunpack.c.l.b16 %v1593
        %v1605 = vunpack.c.h.b16 %v1593
        %v1606 = vpack.c.b16 %v1598, %v1598
        %v1607 = vpack.c.b16 %v1599, %v1599
        %v1608 = vpack.c.b16 %v1600, %v1600
        %v1609 = vpack.c.b16 %v1601, %v1601
        %v1610 = vpack.c.b16 %v1602, %v1602
        %v1611 = vpack.c.b16 %v1603, %v1603
        %v1612 = vpack.c.b16 %v1604, %v1604
        %v1613 = vpack.c.b16 %v1605, %v1605
        %1614 = vrot.lane.b32.xlu0 %v1606, 16
        %v1615 = vpop.permute.xlu0 %1614
        %1616 = vrot.lane.b32.xlu0 %v1607, 16
        %v1617 = vpop.permute.xlu0 %1616
        %1618 = vrot.lane.b32.xlu0 %v1608, 16
        %v1619 = vpop.permute.xlu0 %1618
        %1620 = vrot.lane.b32.xlu0 %v1609, 16
        %v1621 = vpop.permute.xlu0 %1620
        %1622 = vrot.lane.b32.xlu0 %v1610, 16
        %v1623 = vpop.permute.xlu0 %1622
        %1624 = vrot.lane.b32.xlu0 %v1611, 16
        %v1625 = vpop.permute.xlu0 %1624
        %1626 = vrot.lane.b32.xlu0 %v1612, 16
        %v1627 = vpop.permute.xlu0 %1626
        %1628 = vrot.lane.b32.xlu0 %v1613, 16
        %v1629 = vpop.permute.xlu0 %1628
        %vm1638 = vcmask 158848
        %1639 = vst.msk [vmem:[#allocation3] sm:$0xf] %vm1638, %v1615
        %1640 = vst.msk [vmem:[#allocation3 + $0x4] sm:$0xf] %vm1638, %v1617
        %1641 = vst.msk [vmem:[#allocation3 + $0x8] sm:$0xf] %vm1638, %v1619
        %1642 = vst.msk [vmem:[#allocation3 + $0xc] sm:$0xf] %vm1638, %v1621
        %1643 = vst.msk [vmem:[#allocation3 + $0x10] sm:$0xf] %vm1638, %v1623
        %1644 = vst.msk [vmem:[#allocation3 + $0x14] sm:$0xf] %vm1638, %v1625
        %1645 = vst.msk [vmem:[#allocation3 + $0x18] sm:$0xf] %vm1638, %v1627
        %1646 = vst.msk [vmem:[#allocation3 + $0x1c] sm:$0xf] %vm1638, %v1629
        %v1647 = vld [vmem:[#allocation2 + $0x21] sm:$0xff]
        %v1648 = vld [vmem:[#allocation2 + $0x29] sm:$0xff]
        %v1649 = vld [vmem:[#allocation2 + $0x31] sm:$0xff]
        %v1650 = vld [vmem:[#allocation2 + $0x39] sm:$0xff]
        %v1651 = vld [vmem:[#allocation2 + $0x41] sm:$0xff]
        %v1652 = vld [vmem:[#allocation2 + $0x49] sm:$0xff]
        %v1653 = vld [vmem:[#allocation2 + $0x51] sm:$0xff]
        %v1654 = vld [vmem:[#allocation2 + $0x59] sm:$0xff]
        %v1655 = vsel %vm1436, %v1647, 0.0
        %v1656 = vsel %vm1437, %v1648, 0.0
        %v1657 = vsel %vm1438, %v1649, 0.0
        %v1658 = vsel %vm1439, %v1650, 0.0
        %v1659 = vsel %vm1440, %v1651, 0.0
        %v1660 = vsel %vm1441, %v1652, 0.0
        %v1661 = vsel %vm1442, %v1653, 0.0
        %v1662 = vsel %vm1443, %v1654, 0.0
        %v1663 = vpack.c.bf16 %v1656, %v1655
        %v1664 = vpack.c.bf16 %v1658, %v1657
        %v1665 = vpack.c.bf16 %v1660, %v1659
        %v1666 = vpack.c.bf16 %v1662, %v1661
        %v1671 = vunpack.c.l.b16 %v1663
        %v1672 = vunpack.c.h.b16 %v1663
        %v1673 = vunpack.c.l.b16 %v1664
        %v1674 = vunpack.c.h.b16 %v1664
        %v1675 = vunpack.c.l.b16 %v1665
        %v1676 = vunpack.c.h.b16 %v1665
        %v1677 = vunpack.c.l.b16 %v1666
        %v1678 = vunpack.c.h.b16 %v1666
        %v1679 = vpack.c.b16 %v1671, %v1671
        %v1680 = vpack.c.b16 %v1672, %v1672
        %v1681 = vpack.c.b16 %v1673, %v1673
        %v1682 = vpack.c.b16 %v1674, %v1674
        %v1683 = vpack.c.b16 %v1675, %v1675
        %v1684 = vpack.c.b16 %v1676, %v1676
        %v1685 = vpack.c.b16 %v1677, %v1677
        %v1686 = vpack.c.b16 %v1678, %v1678
        %1687 = vrot.lane.b32.xlu0 %v1679, 20
        %v1688 = vpop.permute.xlu0 %1687
        %1689 = vrot.lane.b32.xlu0 %v1680, 20
        %v1690 = vpop.permute.xlu0 %1689
        %1691 = vrot.lane.b32.xlu0 %v1681, 20
        %v1692 = vpop.permute.xlu0 %1691
        %1693 = vrot.lane.b32.xlu0 %v1682, 20
        %v1694 = vpop.permute.xlu0 %1693
        %1695 = vrot.lane.b32.xlu0 %v1683, 20
        %v1696 = vpop.permute.xlu0 %1695
        %1697 = vrot.lane.b32.xlu0 %v1684, 20
        %v1698 = vpop.permute.xlu0 %1697
        %1699 = vrot.lane.b32.xlu0 %v1685, 20
        %v1700 = vpop.permute.xlu0 %1699
        %1701 = vrot.lane.b32.xlu0 %v1686, 20
        %v1702 = vpop.permute.xlu0 %1701
        %vm1711 = vcmask 191648
        %1712 = vst.msk [vmem:[#allocation3] sm:$0xf] %vm1711, %v1688
        %1713 = vst.msk [vmem:[#allocation3 + $0x4] sm:$0xf] %vm1711, %v1690
        %1714 = vst.msk [vmem:[#allocation3 + $0x8] sm:$0xf] %vm1711, %v1692
        %1715 = vst.msk [vmem:[#allocation3 + $0xc] sm:$0xf] %vm1711, %v1694
        %1716 = vst.msk [vmem:[#allocation3 + $0x10] sm:$0xf] %vm1711, %v1696
        %1717 = vst.msk [vmem:[#allocation3 + $0x14] sm:$0xf] %vm1711, %v1698
        %1718 = vst.msk [vmem:[#allocation3 + $0x18] sm:$0xf] %vm1711, %v1700
        %1719 = vst.msk [vmem:[#allocation3 + $0x1c] sm:$0xf] %vm1711, %v1702
        %v1720 = vld [vmem:[#allocation2 + $0x27] sm:$0xff]
        %v1721 = vld [vmem:[#allocation2 + $0x2f] sm:$0xff]
        %v1722 = vld [vmem:[#allocation2 + $0x37] sm:$0xff]
        %v1723 = vld [vmem:[#allocation2 + $0x3f] sm:$0xff]
        %v1724 = vld [vmem:[#allocation2 + $0x47] sm:$0xff]
        %v1725 = vld [vmem:[#allocation2 + $0x4f] sm:$0xff]
        %v1726 = vld [vmem:[#allocation2 + $0x57] sm:$0xff]
        %v1727 = vld [vmem:[#allocation2 + $0x5f] sm:$0xff]
        %v1728 = vsel %vm1242, %v1720, 0.0
        %v1729 = vsel %vm1243, %v1721, 0.0
        %v1730 = vsel %vm1244, %v1722, 0.0
        %v1731 = vsel %vm1245, %v1723, 0.0
        %v1732 = vsel %vm1246, %v1724, 0.0
        %v1733 = vsel %vm1247, %v1725, 0.0
        %v1734 = vsel %vm1248, %v1726, 0.0
        %v1735 = vsel %vm1249, %v1727, 0.0
        %v1736 = vpack.c.bf16 %v1729, %v1728
        %v1737 = vpack.c.bf16 %v1731, %v1730
        %v1738 = vpack.c.bf16 %v1733, %v1732
        %v1739 = vpack.c.bf16 %v1735, %v1734
        %v1744 = vunpack.c.l.b16 %v1736
        %v1745 = vunpack.c.h.b16 %v1736
        %v1746 = vunpack.c.l.b16 %v1737
        %v1747 = vunpack.c.h.b16 %v1737
        %v1748 = vunpack.c.l.b16 %v1738
        %v1749 = vunpack.c.h.b16 %v1738
        %v1750 = vunpack.c.l.b16 %v1739
        %v1751 = vunpack.c.h.b16 %v1739
        %v1752 = vpack.c.b16 %v1744, %v1744
        %v1753 = vpack.c.b16 %v1745, %v1745
        %v1754 = vpack.c.b16 %v1746, %v1746
        %v1755 = vpack.c.b16 %v1747, %v1747
        %v1756 = vpack.c.b16 %v1748, %v1748
        %v1757 = vpack.c.b16 %v1749, %v1749
        %v1758 = vpack.c.b16 %v1750, %v1750
        %v1759 = vpack.c.b16 %v1751, %v1751
        %1760 = vrot.lane.b32.xlu0 %v1752, 24
        %v1761 = vpop.permute.xlu0 %1760
        %1762 = vrot.lane.b32.xlu0 %v1753, 24
        %v1763 = vpop.permute.xlu0 %1762
        %1764 = vrot.lane.b32.xlu0 %v1754, 24
        %v1765 = vpop.permute.xlu0 %1764
        %1766 = vrot.lane.b32.xlu0 %v1755, 24
        %v1767 = vpop.permute.xlu0 %1766
        %1768 = vrot.lane.b32.xlu0 %v1756, 24
        %v1769 = vpop.permute.xlu0 %1768
        %1770 = vrot.lane.b32.xlu0 %v1757, 24
        %v1771 = vpop.permute.xlu0 %1770
        %1772 = vrot.lane.b32.xlu0 %v1758, 24
        %v1773 = vpop.permute.xlu0 %1772
        %1774 = vrot.lane.b32.xlu0 %v1759, 24
        %v1775 = vpop.permute.xlu0 %1774
        %vm1784 = vcmask 224448
        %1785 = vst.msk [vmem:[#allocation3] sm:$0xf] %vm1784, %v1761
        %1786 = vst.msk [vmem:[#allocation3 + $0x4] sm:$0xf] %vm1784, %v1763
        %1787 = vst.msk [vmem:[#allocation3 + $0x8] sm:$0xf] %vm1784, %v1765
        %1788 = vst.msk [vmem:[#allocation3 + $0xc] sm:$0xf] %vm1784, %v1767
        %1789 = vst.msk [vmem:[#allocation3 + $0x10] sm:$0xf] %vm1784, %v1769
        %1790 = vst.msk [vmem:[#allocation3 + $0x14] sm:$0xf] %vm1784, %v1771
        %1791 = vst.msk [vmem:[#allocation3 + $0x18] sm:$0xf] %vm1784, %v1773
        %1792 = vst.msk [vmem:[#allocation3 + $0x1c] sm:$0xf] %vm1784, %v1775
        %v1793 = vld [vmem:[#allocation2 + $0x28] sm:$0xff]
        %v1794 = vld [vmem:[#allocation2 + $0x30] sm:$0xff]
        %v1795 = vld [vmem:[#allocation2 + $0x38] sm:$0xff]
        %v1796 = vld [vmem:[#allocation2 + $0x40] sm:$0xff]
        %v1797 = vld [vmem:[#allocation2 + $0x48] sm:$0xff]
        %v1798 = vld [vmem:[#allocation2 + $0x50] sm:$0xff]
        %v1799 = vld [vmem:[#allocation2 + $0x58] sm:$0xff]
        %v1800 = vld [vmem:[#allocation2 + $0x60] sm:$0xff]
        %v1801 = vpack.c.bf16 %v1794, %v1793
        %v1802 = vpack.c.bf16 %v1796, %v1795
        %v1803 = vpack.c.bf16 %v1798, %v1797
        %v1804 = vpack.c.bf16 %v1800, %v1799
        %v1809 = vunpack.c.l.b16 %v1801
        %v1810 = vunpack.c.h.b16 %v1801
        %v1811 = vunpack.c.l.b16 %v1802
        %v1812 = vunpack.c.h.b16 %v1802
        %v1813 = vunpack.c.l.b16 %v1803
        %v1814 = vunpack.c.h.b16 %v1803
        %v1815 = vunpack.c.l.b16 %v1804
        %v1816 = vunpack.c.h.b16 %v1804
        %v1817 = vpack.c.b16 %v1809, %v1809
        %v1818 = vpack.c.b16 %v1810, %v1810
        %v1819 = vpack.c.b16 %v1811, %v1811
        %v1820 = vpack.c.b16 %v1812, %v1812
        %v1821 = vpack.c.b16 %v1813, %v1813
        %v1822 = vpack.c.b16 %v1814, %v1814
        %v1823 = vpack.c.b16 %v1815, %v1815
        %v1824 = vpack.c.b16 %v1816, %v1816
        %1825 = vrot.lane.b32.xlu0 %v1817, 28
        %v1826 = vpop.permute.xlu0 %1825
        %1827 = vrot.lane.b32.xlu0 %v1818, 28
        %v1828 = vpop.permute.xlu0 %1827
        %1829 = vrot.lane.b32.xlu0 %v1819, 28
        %v1830 = vpop.permute.xlu0 %1829
        %1831 = vrot.lane.b32.xlu0 %v1820, 28
        %v1832 = vpop.permute.xlu0 %1831
        %1833 = vrot.lane.b32.xlu0 %v1821, 28
        %v1834 = vpop.permute.xlu0 %1833
        %1835 = vrot.lane.b32.xlu0 %v1822, 28
        %v1836 = vpop.permute.xlu0 %1835
        %1837 = vrot.lane.b32.xlu0 %v1823, 28
        %v1838 = vpop.permute.xlu0 %1837
        %1839 = vrot.lane.b32.xlu0 %v1824, 28
        %v1840 = vpop.permute.xlu0 %1839
        %vm1849 = vcmask 257248
        %1850 = vst.msk [vmem:[#allocation3] sm:$0xf] %vm1849, %v1826
        %1851 = vst.msk [vmem:[#allocation3 + $0x4] sm:$0xf] %vm1849, %v1828
        %1852 = vst.msk [vmem:[#allocation3 + $0x8] sm:$0xf] %vm1849, %v1830
        %1853 = vst.msk [vmem:[#allocation3 + $0xc] sm:$0xf] %vm1849, %v1832
        %1854 = vst.msk [vmem:[#allocation3 + $0x10] sm:$0xf] %vm1849, %v1834
        %1855 = vst.msk [vmem:[#allocation3 + $0x14] sm:$0xf] %vm1849, %v1836
        %1856 = vst.msk [vmem:[#allocation3 + $0x18] sm:$0xf] %vm1849, %v1838
        %1857 = vst.msk [vmem:[#allocation3 + $0x1c] sm:$0xf] %vm1849, %v1840
        %v1858 = vld [vmem:[#allocation2 + $0x29] sm:$0xff]
        %v1859 = vld [vmem:[#allocation2 + $0x31] sm:$0xff]
        %v1860 = vld [vmem:[#allocation2 + $0x39] sm:$0xff]
        %v1861 = vld [vmem:[#allocation2 + $0x41] sm:$0xff]
        %v1862 = vld [vmem:[#allocation2 + $0x49] sm:$0xff]
        %v1863 = vld [vmem:[#allocation2 + $0x51] sm:$0xff]
        %v1864 = vld [vmem:[#allocation2 + $0x59] sm:$0xff]
        %v1865 = vld [vmem:[#allocation2 + $0x61] sm:$0xff]
        %v1866 = vsel %vm1436, %v1858, 0.0
        %v1867 = vsel %vm1437, %v1859, 0.0
        %v1868 = vsel %vm1438, %v1860, 0.0
        %v1869 = vsel %vm1439, %v1861, 0.0
        %v1870 = vsel %vm1440, %v1862, 0.0
        %v1871 = vsel %vm1441, %v1863, 0.0
        %v1872 = vsel %vm1442, %v1864, 0.0
        %v1873 = vsel %vm1443, %v1865, 0.0
        %v1874 = vpack.c.bf16 %v1867, %v1866
        %v1875 = vpack.c.bf16 %v1869, %v1868
        %v1876 = vpack.c.bf16 %v1871, %v1870
        %v1877 = vpack.c.bf16 %v1873, %v1872
        %v1882 = vunpack.c.l.b16 %v1874
        %v1883 = vunpack.c.h.b16 %v1874
        %v1884 = vunpack.c.l.b16 %v1875
        %v1885 = vunpack.c.h.b16 %v1875
        %v1886 = vunpack.c.l.b16 %v1876
        %v1887 = vunpack.c.h.b16 %v1876
        %v1888 = vunpack.c.l.b16 %v1877
        %v1889 = vunpack.c.h.b16 %v1877
        %v1890 = vpack.c.b16 %v1882, %v1882
        %v1891 = vpack.c.b16 %v1883, %v1883
        %v1892 = vpack.c.b16 %v1884, %v1884
        %v1893 = vpack.c.b16 %v1885, %v1885
        %v1894 = vpack.c.b16 %v1886, %v1886
        %v1895 = vpack.c.b16 %v1887, %v1887
        %v1896 = vpack.c.b16 %v1888, %v1888
        %v1897 = vpack.c.b16 %v1889, %v1889
        %1898 = vrot.lane.b32.xlu0 %v1890, 32
        %v1899 = vpop.permute.xlu0 %1898
        %1900 = vrot.lane.b32.xlu0 %v1891, 32
        %v1901 = vpop.permute.xlu0 %1900
        %1902 = vrot.lane.b32.xlu0 %v1892, 32
        %v1903 = vpop.permute.xlu0 %1902
        %1904 = vrot.lane.b32.xlu0 %v1893, 32
        %v1905 = vpop.permute.xlu0 %1904
        %1906 = vrot.lane.b32.xlu0 %v1894, 32
        %v1907 = vpop.permute.xlu0 %1906
        %1908 = vrot.lane.b32.xlu0 %v1895, 32
        %v1909 = vpop.permute.xlu0 %1908
        %1910 = vrot.lane.b32.xlu0 %v1896, 32
        %v1911 = vpop.permute.xlu0 %1910
        %1912 = vrot.lane.b32.xlu0 %v1897, 32
        %v1913 = vpop.permute.xlu0 %1912
        %vm1922 = vcmask 290048
        %1923 = vst.msk [vmem:[#allocation3] sm:$0xf] %vm1922, %v1899
        %1924 = vst.msk [vmem:[#allocation3 + $0x4] sm:$0xf] %vm1922, %v1901
        %1925 = vst.msk [vmem:[#allocation3 + $0x8] sm:$0xf] %vm1922, %v1903
        %1926 = vst.msk [vmem:[#allocation3 + $0xc] sm:$0xf] %vm1922, %v1905
        %1927 = vst.msk [vmem:[#allocation3 + $0x10] sm:$0xf] %vm1922, %v1907
        %1928 = vst.msk [vmem:[#allocation3 + $0x14] sm:$0xf] %vm1922, %v1909
        %1929 = vst.msk [vmem:[#allocation3 + $0x18] sm:$0xf] %vm1922, %v1911
        %1930 = vst.msk [vmem:[#allocation3 + $0x1c] sm:$0xf] %vm1922, %v1913
        %v1931 = vld [vmem:[#allocation2 + $0xe] sm:$0xff]
        %v1932 = vld [vmem:[#allocation2 + $0x16] sm:$0xff]
        %v1933 = vld [vmem:[#allocation2 + $0x1e] sm:$0xff]
        %v1934 = vld [vmem:[#allocation2 + $0x26] sm:$0xff]
        %v1935 = vld [vmem:[#allocation2 + $0x2e] sm:$0xff]
        %v1936 = vld [vmem:[#allocation2 + $0x36] sm:$0xff]
        %v1937 = vld [vmem:[#allocation2 + $0x3e] sm:$0xff]
        %v1938 = vld [vmem:[#allocation2 + $0x46] sm:$0xff]
        %v1939 = vadd.s32 %v1162, 4294967294
        %v1940 = vadd.s32 %v1163, 4294967294
        %v1941 = vadd.s32 %v1164, 4294967294
        %v1942 = vadd.s32 %v1165, 4294967294
        %v1943 = vadd.s32 %v1166, 4294967294
        %v1944 = vadd.s32 %v1167, 4294967294
        %v1945 = vadd.s32 %v1168, 4294967294
        %v1946 = vadd.s32 %v1169, 4294967294
        %vm1947 = vcmp.ge.s32.totalorder %v1939, 0
        %vm1948 = vcmp.ge.s32.totalorder %v1940, 0
        %vm1949 = vcmp.ge.s32.totalorder %v1941, 0
        %vm1950 = vcmp.ge.s32.totalorder %v1942, 0
        %vm1951 = vcmp.ge.s32.totalorder %v1943, 0
        %vm1952 = vcmp.ge.s32.totalorder %v1944, 0
        %vm1953 = vcmp.ge.s32.totalorder %v1945, 0
        %vm1954 = vcmp.ge.s32.totalorder %v1946, 0
        %vm1955 = vcmp.lt.s32.totalorder %v1939, 8
        %vm1956 = vcmp.lt.s32.totalorder %v1940, 8
        %vm1957 = vcmp.lt.s32.totalorder %v1941, 8
        %vm1958 = vcmp.lt.s32.totalorder %v1942, 8
        %vm1959 = vcmp.lt.s32.totalorder %v1943, 8
        %vm1960 = vcmp.lt.s32.totalorder %v1944, 8
        %vm1961 = vcmp.lt.s32.totalorder %v1945, 8
        %vm1962 = vcmp.lt.s32.totalorder %v1946, 8
        %vm1963 = vmand %vm1947, %vm1955
        %vm1964 = vmand %vm1948, %vm1956
        %vm1965 = vmand %vm1949, %vm1957
        %vm1966 = vmand %vm1950, %vm1958
        %vm1967 = vmand %vm1951, %vm1959
        %vm1968 = vmand %vm1952, %vm1960
        %vm1969 = vmand %vm1953, %vm1961
        %vm1970 = vmand %vm1954, %vm1962
        %v1971 = vsel %vm1963, 1, 0
        %v1972 = vsel %vm1964, 1, 0
        %v1973 = vsel %vm1965, 1, 0
        %v1974 = vsel %vm1966, 1, 0
        %v1975 = vsel %vm1967, 1, 0
        %v1976 = vsel %vm1968, 1, 0
        %v1977 = vsel %vm1969, 1, 0
        %v1978 = vsel %vm1970, 1, 0
        %1979 = vset.pattern.permute.xlu0 0
        %1980 = vperm.xlu0 %1979, %v1971
        %v1981 = vpop.permute.xlu0 %1980
        %1982 = vset.pattern.permute.xlu0 0
        %1983 = vperm.xlu0 %1982, %v1972
        %v1984 = vpop.permute.xlu0 %1983
        %1985 = vset.pattern.permute.xlu0 0
        %1986 = vperm.xlu0 %1985, %v1973
        %v1987 = vpop.permute.xlu0 %1986
        %1988 = vset.pattern.permute.xlu0 0
        %1989 = vperm.xlu0 %1988, %v1974
        %v1990 = vpop.permute.xlu0 %1989
        %1991 = vset.pattern.permute.xlu0 0
        %1992 = vperm.xlu0 %1991, %v1975
        %v1993 = vpop.permute.xlu0 %1992
        %1994 = vset.pattern.permute.xlu0 0
        %1995 = vperm.xlu0 %1994, %v1976
        %v1996 = vpop.permute.xlu0 %1995
        %1997 = vset.pattern.permute.xlu0 0
        %1998 = vperm.xlu0 %1997, %v1977
        %v1999 = vpop.permute.xlu0 %1998
        %2000 = vset.pattern.permute.xlu0 0
        %2001 = vperm.xlu0 %2000, %v1978
        %v2002 = vpop.permute.xlu0 %2001
        %vm2003 = vcmp.eq.s32.totalorder %v1981, 1
        %vm2004 = vcmp.eq.s32.totalorder %v1984, 1
        %vm2005 = vcmp.eq.s32.totalorder %v1987, 1
        %vm2006 = vcmp.eq.s32.totalorder %v1990, 1
        %vm2007 = vcmp.eq.s32.totalorder %v1993, 1
        %vm2008 = vcmp.eq.s32.totalorder %v1996, 1
        %vm2009 = vcmp.eq.s32.totalorder %v1999, 1
        %vm2010 = vcmp.eq.s32.totalorder %v2002, 1
        %v2011 = vsel %vm2003, %v1931, 0.0
        %v2012 = vsel %vm2004, %v1932, 0.0
        %v2013 = vsel %vm2005, %v1933, 0.0
        %v2014 = vsel %vm2006, %v1934, 0.0
        %v2015 = vsel %vm2007, %v1935, 0.0
        %v2016 = vsel %vm2008, %v1936, 0.0
        %v2017 = vsel %vm2009, %v1937, 0.0
        %v2018 = vsel %vm2010, %v1938, 0.0
        %v2019 = vpack.c.bf16 %v2012, %v2011
        %v2020 = vpack.c.bf16 %v2014, %v2013
        %v2021 = vpack.c.bf16 %v2016, %v2015
        %v2022 = vpack.c.bf16 %v2018, %v2017
        %v2027 = vunpack.c.l.b16 %v2019
        %v2028 = vunpack.c.h.b16 %v2019
        %v2029 = vunpack.c.l.b16 %v2020
        %v2030 = vunpack.c.h.b16 %v2020
        %v2031 = vunpack.c.l.b16 %v2021
        %v2032 = vunpack.c.h.b16 %v2021
        %v2033 = vunpack.c.l.b16 %v2022
        %v2034 = vunpack.c.h.b16 %v2022
        %v2035 = vpack.c.b16 %v2027, %v2027
        %v2036 = vpack.c.b16 %v2028, %v2028
        %v2037 = vpack.c.b16 %v2029, %v2029
        %v2038 = vpack.c.b16 %v2030, %v2030
        %v2039 = vpack.c.b16 %v2031, %v2031
        %v2040 = vpack.c.b16 %v2032, %v2032
        %v2041 = vpack.c.b16 %v2033, %v2033
        %v2042 = vpack.c.b16 %v2034, %v2034
        %2043 = vrot.lane.b32.xlu0 %v2035, 36
        %v2044 = vpop.permute.xlu0 %2043
        %2045 = vrot.lane.b32.xlu0 %v2036, 36
        %v2046 = vpop.permute.xlu0 %2045
        %2047 = vrot.lane.b32.xlu0 %v2037, 36
        %v2048 = vpop.permute.xlu0 %2047
        %2049 = vrot.lane.b32.xlu0 %v2038, 36
        %v2050 = vpop.permute.xlu0 %2049
        %2051 = vrot.lane.b32.xlu0 %v2039, 36
        %v2052 = vpop.permute.xlu0 %2051
        %2053 = vrot.lane.b32.xlu0 %v2040, 36
        %v2054 = vpop.permute.xlu0 %2053
        %2055 = vrot.lane.b32.xlu0 %v2041, 36
        %v2056 = vpop.permute.xlu0 %2055
        %2057 = vrot.lane.b32.xlu0 %v2042, 36
        %v2058 = vpop.permute.xlu0 %2057
        %vm2067 = vcmask 322848
        %2068 = vst.msk [vmem:[#allocation3] sm:$0xf] %vm2067, %v2044
        %2069 = vst.msk [vmem:[#allocation3 + $0x4] sm:$0xf] %vm2067, %v2046
        %2070 = vst.msk [vmem:[#allocation3 + $0x8] sm:$0xf] %vm2067, %v2048
        %2071 = vst.msk [vmem:[#allocation3 + $0xc] sm:$0xf] %vm2067, %v2050
        %2072 = vst.msk [vmem:[#allocation3 + $0x10] sm:$0xf] %vm2067, %v2052
        %2073 = vst.msk [vmem:[#allocation3 + $0x14] sm:$0xf] %vm2067, %v2054
        %2074 = vst.msk [vmem:[#allocation3 + $0x18] sm:$0xf] %vm2067, %v2056
        %2075 = vst.msk [vmem:[#allocation3 + $0x1c] sm:$0xf] %vm2067, %v2058
        %v2076 = vld [vmem:[#allocation2 + $0x10] sm:$0xff]
        %v2077 = vld [vmem:[#allocation2 + $0x18] sm:$0xff]
        %v2078 = vld [vmem:[#allocation2 + $0x20] sm:$0xff]
        %v2079 = vld [vmem:[#allocation2 + $0x28] sm:$0xff]
        %v2080 = vld [vmem:[#allocation2 + $0x30] sm:$0xff]
        %v2081 = vld [vmem:[#allocation2 + $0x38] sm:$0xff]
        %v2082 = vld [vmem:[#allocation2 + $0x40] sm:$0xff]
        %v2083 = vld [vmem:[#allocation2 + $0x48] sm:$0xff]
        %v2084 = vpack.c.bf16 %v2077, %v2076
        %v2085 = vpack.c.bf16 %v2079, %v2078
        %v2086 = vpack.c.bf16 %v2081, %v2080
        %v2087 = vpack.c.bf16 %v2083, %v2082
        %v2092 = vunpack.c.l.b16 %v2084
        %v2093 = vunpack.c.h.b16 %v2084
        %v2094 = vunpack.c.l.b16 %v2085
        %v2095 = vunpack.c.h.b16 %v2085
        %v2096 = vunpack.c.l.b16 %v2086
        %v2097 = vunpack.c.h.b16 %v2086
        %v2098 = vunpack.c.l.b16 %v2087
        %v2099 = vunpack.c.h.b16 %v2087
        %v2100 = vpack.c.b16 %v2092, %v2092
        %v2101 = vpack.c.b16 %v2093, %v2093
        %v2102 = vpack.c.b16 %v2094, %v2094
        %v2103 = vpack.c.b16 %v2095, %v2095
        %v2104 = vpack.c.b16 %v2096, %v2096
        %v2105 = vpack.c.b16 %v2097, %v2097
        %v2106 = vpack.c.b16 %v2098, %v2098
        %v2107 = vpack.c.b16 %v2099, %v2099
        %2108 = vrot.lane.b32.xlu0 %v2100, 40
        %v2109 = vpop.permute.xlu0 %2108
        %2110 = vrot.lane.b32.xlu0 %v2101, 40
        %v2111 = vpop.permute.xlu0 %2110
        %2112 = vrot.lane.b32.xlu0 %v2102, 40
        %v2113 = vpop.permute.xlu0 %2112
        %2114 = vrot.lane.b32.xlu0 %v2103, 40
        %v2115 = vpop.permute.xlu0 %2114
        %2116 = vrot.lane.b32.xlu0 %v2104, 40
        %v2117 = vpop.permute.xlu0 %2116
        %2118 = vrot.lane.b32.xlu0 %v2105, 40
        %v2119 = vpop.permute.xlu0 %2118
        %2120 = vrot.lane.b32.xlu0 %v2106, 40
        %v2121 = vpop.permute.xlu0 %2120
        %2122 = vrot.lane.b32.xlu0 %v2107, 40
        %v2123 = vpop.permute.xlu0 %2122
        %vm2132 = vcmask 355648
        %2133 = vst.msk [vmem:[#allocation3] sm:$0xf] %vm2132, %v2109
        %2134 = vst.msk [vmem:[#allocation3 + $0x4] sm:$0xf] %vm2132, %v2111
        %2135 = vst.msk [vmem:[#allocation3 + $0x8] sm:$0xf] %vm2132, %v2113
        %2136 = vst.msk [vmem:[#allocation3 + $0xc] sm:$0xf] %vm2132, %v2115
        %2137 = vst.msk [vmem:[#allocation3 + $0x10] sm:$0xf] %vm2132, %v2117
        %2138 = vst.msk [vmem:[#allocation3 + $0x14] sm:$0xf] %vm2132, %v2119
        %2139 = vst.msk [vmem:[#allocation3 + $0x18] sm:$0xf] %vm2132, %v2121
        %2140 = vst.msk [vmem:[#allocation3 + $0x1c] sm:$0xf] %vm2132, %v2123
        %v2141 = vld [vmem:[#allocation2 + $0x12] sm:$0xff]
        %v2142 = vld [vmem:[#allocation2 + $0x1a] sm:$0xff]
        %v2143 = vld [vmem:[#allocation2 + $0x22] sm:$0xff]
        %v2144 = vld [vmem:[#allocation2 + $0x2a] sm:$0xff]
        %v2145 = vld [vmem:[#allocation2 + $0x32] sm:$0xff]
        %v2146 = vld [vmem:[#allocation2 + $0x3a] sm:$0xff]
        %v2147 = vld [vmem:[#allocation2 + $0x42] sm:$0xff]
        %v2148 = vld [vmem:[#allocation2 + $0x4a] sm:$0xff]
        %v2149 = vadd.s32 %v1162, 2
        %v2150 = vadd.s32 %v1163, 2
        %v2151 = vadd.s32 %v1164, 2
        %v2152 = vadd.s32 %v1165, 2
        %v2153 = vadd.s32 %v1166, 2
        %v2154 = vadd.s32 %v1167, 2
        %v2155 = vadd.s32 %v1168, 2
        %v2156 = vadd.s32 %v1169, 2
        %vm2157 = vcmp.ge.s32.totalorder %v2149, 0
        %vm2158 = vcmp.ge.s32.totalorder %v2150, 0
        %vm2159 = vcmp.ge.s32.totalorder %v2151, 0
        %vm2160 = vcmp.ge.s32.totalorder %v2152, 0
        %vm2161 = vcmp.ge.s32.totalorder %v2153, 0
        %vm2162 = vcmp.ge.s32.totalorder %v2154, 0
        %vm2163 = vcmp.ge.s32.totalorder %v2155, 0
        %vm2164 = vcmp.ge.s32.totalorder %v2156, 0
        %vm2165 = vcmp.lt.s32.totalorder %v2149, 8
        %vm2166 = vcmp.lt.s32.totalorder %v2150, 8
        %vm2167 = vcmp.lt.s32.totalorder %v2151, 8
        %vm2168 = vcmp.lt.s32.totalorder %v2152, 8
        %vm2169 = vcmp.lt.s32.totalorder %v2153, 8
        %vm2170 = vcmp.lt.s32.totalorder %v2154, 8
        %vm2171 = vcmp.lt.s32.totalorder %v2155, 8
        %vm2172 = vcmp.lt.s32.totalorder %v2156, 8
        %vm2173 = vmand %vm2157, %vm2165
        %vm2174 = vmand %vm2158, %vm2166
        %vm2175 = vmand %vm2159, %vm2167
        %vm2176 = vmand %vm2160, %vm2168
        %vm2177 = vmand %vm2161, %vm2169
        %vm2178 = vmand %vm2162, %vm2170
        %vm2179 = vmand %vm2163, %vm2171
        %vm2180 = vmand %vm2164, %vm2172
        %v2181 = vsel %vm2173, 1, 0
        %v2182 = vsel %vm2174, 1, 0
        %v2183 = vsel %vm2175, 1, 0
        %v2184 = vsel %vm2176, 1, 0
        %v2185 = vsel %vm2177, 1, 0
        %v2186 = vsel %vm2178, 1, 0
        %v2187 = vsel %vm2179, 1, 0
        %v2188 = vsel %vm2180, 1, 0
        %2189 = vset.pattern.permute.xlu0 0
        %2190 = vperm.xlu0 %2189, %v2181
        %v2191 = vpop.permute.xlu0 %2190
        %2192 = vset.pattern.permute.xlu0 0
        %2193 = vperm.xlu0 %2192, %v2182
        %v2194 = vpop.permute.xlu0 %2193
        %2195 = vset.pattern.permute.xlu0 0
        %2196 = vperm.xlu0 %2195, %v2183
        %v2197 = vpop.permute.xlu0 %2196
        %2198 = vset.pattern.permute.xlu0 0
        %2199 = vperm.xlu0 %2198, %v2184
        %v2200 = vpop.permute.xlu0 %2199
        %2201 = vset.pattern.permute.xlu0 0
        %2202 = vperm.xlu0 %2201, %v2185
        %v2203 = vpop.permute.xlu0 %2202
        %2204 = vset.pattern.permute.xlu0 0
        %2205 = vperm.xlu0 %2204, %v2186
        %v2206 = vpop.permute.xlu0 %2205
        %2207 = vset.pattern.permute.xlu0 0
        %2208 = vperm.xlu0 %2207, %v2187
        %v2209 = vpop.permute.xlu0 %2208
        %2210 = vset.pattern.permute.xlu0 0
        %2211 = vperm.xlu0 %2210, %v2188
        %v2212 = vpop.permute.xlu0 %2211
        %vm2213 = vcmp.eq.s32.totalorder %v2191, 1
        %vm2214 = vcmp.eq.s32.totalorder %v2194, 1
        %vm2215 = vcmp.eq.s32.totalorder %v2197, 1
        %vm2216 = vcmp.eq.s32.totalorder %v2200, 1
        %vm2217 = vcmp.eq.s32.totalorder %v2203, 1
        %vm2218 = vcmp.eq.s32.totalorder %v2206, 1
        %vm2219 = vcmp.eq.s32.totalorder %v2209, 1
        %vm2220 = vcmp.eq.s32.totalorder %v2212, 1
        %v2221 = vsel %vm2213, %v2141, 0.0
        %v2222 = vsel %vm2214, %v2142, 0.0
        %v2223 = vsel %vm2215, %v2143, 0.0
        %v2224 = vsel %vm2216, %v2144, 0.0
        %v2225 = vsel %vm2217, %v2145, 0.0
        %v2226 = vsel %vm2218, %v2146, 0.0
        %v2227 = vsel %vm2219, %v2147, 0.0
        %v2228 = vsel %vm2220, %v2148, 0.0
        %v2229 = vpack.c.bf16 %v2222, %v2221
        %v2230 = vpack.c.bf16 %v2224, %v2223
        %v2231 = vpack.c.bf16 %v2226, %v2225
        %v2232 = vpack.c.bf16 %v2228, %v2227
        %v2237 = vunpack.c.l.b16 %v2229
        %v2238 = vunpack.c.h.b16 %v2229
        %v2239 = vunpack.c.l.b16 %v2230
        %v2240 = vunpack.c.h.b16 %v2230
        %v2241 = vunpack.c.l.b16 %v2231
        %v2242 = vunpack.c.h.b16 %v2231
        %v2243 = vunpack.c.l.b16 %v2232
        %v2244 = vunpack.c.h.b16 %v2232
        %v2245 = vpack.c.b16 %v2237, %v2237
        %v2246 = vpack.c.b16 %v2238, %v2238
        %v2247 = vpack.c.b16 %v2239, %v2239
        %v2248 = vpack.c.b16 %v2240, %v2240
        %v2249 = vpack.c.b16 %v2241, %v2241
        %v2250 = vpack.c.b16 %v2242, %v2242
        %v2251 = vpack.c.b16 %v2243, %v2243
        %v2252 = vpack.c.b16 %v2244, %v2244
        %2253 = vrot.lane.b32.xlu0 %v2245, 44
        %v2254 = vpop.permute.xlu0 %2253
        %2255 = vrot.lane.b32.xlu0 %v2246, 44
        %v2256 = vpop.permute.xlu0 %2255
        %2257 = vrot.lane.b32.xlu0 %v2247, 44
        %v2258 = vpop.permute.xlu0 %2257
        %2259 = vrot.lane.b32.xlu0 %v2248, 44
        %v2260 = vpop.permute.xlu0 %2259
        %2261 = vrot.lane.b32.xlu0 %v2249, 44
        %v2262 = vpop.permute.xlu0 %2261
        %2263 = vrot.lane.b32.xlu0 %v2250, 44
        %v2264 = vpop.permute.xlu0 %2263
        %2265 = vrot.lane.b32.xlu0 %v2251, 44
        %v2266 = vpop.permute.xlu0 %2265
        %2267 = vrot.lane.b32.xlu0 %v2252, 44
        %v2268 = vpop.permute.xlu0 %2267
        %vm2277 = vcmask 388448
        %2278 = vst.msk [vmem:[#allocation3] sm:$0xf] %vm2277, %v2254
        %2279 = vst.msk [vmem:[#allocation3 + $0x4] sm:$0xf] %vm2277, %v2256
        %2280 = vst.msk [vmem:[#allocation3 + $0x8] sm:$0xf] %vm2277, %v2258
        %2281 = vst.msk [vmem:[#allocation3 + $0xc] sm:$0xf] %vm2277, %v2260
        %2282 = vst.msk [vmem:[#allocation3 + $0x10] sm:$0xf] %vm2277, %v2262
        %2283 = vst.msk [vmem:[#allocation3 + $0x14] sm:$0xf] %vm2277, %v2264
        %2284 = vst.msk [vmem:[#allocation3 + $0x18] sm:$0xf] %vm2277, %v2266
        %2285 = vst.msk [vmem:[#allocation3 + $0x1c] sm:$0xf] %vm2277, %v2268
        %v2286 = vld [vmem:[#allocation2 + $0x1e] sm:$0xff]
        %v2287 = vld [vmem:[#allocation2 + $0x26] sm:$0xff]
        %v2288 = vld [vmem:[#allocation2 + $0x2e] sm:$0xff]
        %v2289 = vld [vmem:[#allocation2 + $0x36] sm:$0xff]
        %v2290 = vld [vmem:[#allocation2 + $0x3e] sm:$0xff]
        %v2291 = vld [vmem:[#allocation2 + $0x46] sm:$0xff]
        %v2292 = vld [vmem:[#allocation2 + $0x4e] sm:$0xff]
        %v2293 = vld [vmem:[#allocation2 + $0x56] sm:$0xff]
        %v2294 = vsel %vm2003, %v2286, 0.0
        %v2295 = vsel %vm2004, %v2287, 0.0
        %v2296 = vsel %vm2005, %v2288, 0.0
        %v2297 = vsel %vm2006, %v2289, 0.0
        %v2298 = vsel %vm2007, %v2290, 0.0
        %v2299 = vsel %vm2008, %v2291, 0.0
        %v2300 = vsel %vm2009, %v2292, 0.0
        %v2301 = vsel %vm2010, %v2293, 0.0
        %v2302 = vpack.c.bf16 %v2295, %v2294
        %v2303 = vpack.c.bf16 %v2297, %v2296
        %v2304 = vpack.c.bf16 %v2299, %v2298
        %v2305 = vpack.c.bf16 %v2301, %v2300
        %v2310 = vunpack.c.l.b16 %v2302
        %v2311 = vunpack.c.h.b16 %v2302
        %v2312 = vunpack.c.l.b16 %v2303
        %v2313 = vunpack.c.h.b16 %v2303
        %v2314 = vunpack.c.l.b16 %v2304
        %v2315 = vunpack.c.h.b16 %v2304
        %v2316 = vunpack.c.l.b16 %v2305
        %v2317 = vunpack.c.h.b16 %v2305
        %v2318 = vpack.c.b16 %v2310, %v2310
        %v2319 = vpack.c.b16 %v2311, %v2311
        %v2320 = vpack.c.b16 %v2312, %v2312
        %v2321 = vpack.c.b16 %v2313, %v2313
        %v2322 = vpack.c.b16 %v2314, %v2314
        %v2323 = vpack.c.b16 %v2315, %v2315
        %v2324 = vpack.c.b16 %v2316, %v2316
        %v2325 = vpack.c.b16 %v2317, %v2317
        %2326 = vrot.lane.b32.xlu0 %v2318, 48
        %v2327 = vpop.permute.xlu0 %2326
        %2328 = vrot.lane.b32.xlu0 %v2319, 48
        %v2329 = vpop.permute.xlu0 %2328
        %2330 = vrot.lane.b32.xlu0 %v2320, 48
        %v2331 = vpop.permute.xlu0 %2330
        %2332 = vrot.lane.b32.xlu0 %v2321, 48
        %v2333 = vpop.permute.xlu0 %2332
        %2334 = vrot.lane.b32.xlu0 %v2322, 48
        %v2335 = vpop.permute.xlu0 %2334
        %2336 = vrot.lane.b32.xlu0 %v2323, 48
        %v2337 = vpop.permute.xlu0 %2336
        %2338 = vrot.lane.b32.xlu0 %v2324, 48
        %v2339 = vpop.permute.xlu0 %2338
        %2340 = vrot.lane.b32.xlu0 %v2325, 48
        %v2341 = vpop.permute.xlu0 %2340
        %vm2350 = vcmask 421248
        %2351 = vst.msk [vmem:[#allocation3] sm:$0xf] %vm2350, %v2327
        %2352 = vst.msk [vmem:[#allocation3 + $0x4] sm:$0xf] %vm2350, %v2329
        %2353 = vst.msk [vmem:[#allocation3 + $0x8] sm:$0xf] %vm2350, %v2331
        %2354 = vst.msk [vmem:[#allocation3 + $0xc] sm:$0xf] %vm2350, %v2333
        %2355 = vst.msk [vmem:[#allocation3 + $0x10] sm:$0xf] %vm2350, %v2335
        %2356 = vst.msk [vmem:[#allocation3 + $0x14] sm:$0xf] %vm2350, %v2337
        %2357 = vst.msk [vmem:[#allocation3 + $0x18] sm:$0xf] %vm2350, %v2339
        %2358 = vst.msk [vmem:[#allocation3 + $0x1c] sm:$0xf] %vm2350, %v2341
        %v2359 = vld [vmem:[#allocation2 + $0x20] sm:$0xff]
        %v2360 = vld [vmem:[#allocation2 + $0x28] sm:$0xff]
        %v2361 = vld [vmem:[#allocation2 + $0x30] sm:$0xff]
        %v2362 = vld [vmem:[#allocation2 + $0x38] sm:$0xff]
        %v2363 = vld [vmem:[#allocation2 + $0x40] sm:$0xff]
        %v2364 = vld [vmem:[#allocation2 + $0x48] sm:$0xff]
        %v2365 = vld [vmem:[#allocation2 + $0x50] sm:$0xff]
        %v2366 = vld [vmem:[#allocation2 + $0x58] sm:$0xff]
        %v2367 = vpack.c.bf16 %v2360, %v2359
        %v2368 = vpack.c.bf16 %v2362, %v2361
        %v2369 = vpack.c.bf16 %v2364, %v2363
        %v2370 = vpack.c.bf16 %v2366, %v2365
        %v2375 = vunpack.c.l.b16 %v2367
        %v2376 = vunpack.c.h.b16 %v2367
        %v2377 = vunpack.c.l.b16 %v2368
        %v2378 = vunpack.c.h.b16 %v2368
        %v2379 = vunpack.c.l.b16 %v2369
        %v2380 = vunpack.c.h.b16 %v2369
        %v2381 = vunpack.c.l.b16 %v2370
        %v2382 = vunpack.c.h.b16 %v2370
        %v2383 = vpack.c.b16 %v2375, %v2375
        %v2384 = vpack.c.b16 %v2376, %v2376
        %v2385 = vpack.c.b16 %v2377, %v2377
        %v2386 = vpack.c.b16 %v2378, %v2378
        %v2387 = vpack.c.b16 %v2379, %v2379
        %v2388 = vpack.c.b16 %v2380, %v2380
        %v2389 = vpack.c.b16 %v2381, %v2381
        %v2390 = vpack.c.b16 %v2382, %v2382
        %2391 = vrot.lane.b32.xlu0 %v2383, 52
        %v2392 = vpop.permute.xlu0 %2391
        %2393 = vrot.lane.b32.xlu0 %v2384, 52
        %v2394 = vpop.permute.xlu0 %2393
        %2395 = vrot.lane.b32.xlu0 %v2385, 52
        %v2396 = vpop.permute.xlu0 %2395
        %2397 = vrot.lane.b32.xlu0 %v2386, 52
        %v2398 = vpop.permute.xlu0 %2397
        %2399 = vrot.lane.b32.xlu0 %v2387, 52
        %v2400 = vpop.permute.xlu0 %2399
        %2401 = vrot.lane.b32.xlu0 %v2388, 52
        %v2402 = vpop.permute.xlu0 %2401
        %2403 = vrot.lane.b32.xlu0 %v2389, 52
        %v2404 = vpop.permute.xlu0 %2403
        %2405 = vrot.lane.b32.xlu0 %v2390, 52
        %v2406 = vpop.permute.xlu0 %2405
        %vm2415 = vcmask 454048
        %2416 = vst.msk [vmem:[#allocation3] sm:$0xf] %vm2415, %v2392
        %2417 = vst.msk [vmem:[#allocation3 + $0x4] sm:$0xf] %vm2415, %v2394
        %2418 = vst.msk [vmem:[#allocation3 + $0x8] sm:$0xf] %vm2415, %v2396
        %2419 = vst.msk [vmem:[#allocation3 + $0xc] sm:$0xf] %vm2415, %v2398
        %2420 = vst.msk [vmem:[#allocation3 + $0x10] sm:$0xf] %vm2415, %v2400
        %2421 = vst.msk [vmem:[#allocation3 + $0x14] sm:$0xf] %vm2415, %v2402
        %2422 = vst.msk [vmem:[#allocation3 + $0x18] sm:$0xf] %vm2415, %v2404
        %2423 = vst.msk [vmem:[#allocation3 + $0x1c] sm:$0xf] %vm2415, %v2406
        %v2424 = vld [vmem:[#allocation2 + $0x22] sm:$0xff]
        %v2425 = vld [vmem:[#allocation2 + $0x2a] sm:$0xff]
        %v2426 = vld [vmem:[#allocation2 + $0x32] sm:$0xff]
        %v2427 = vld [vmem:[#allocation2 + $0x3a] sm:$0xff]
        %v2428 = vld [vmem:[#allocation2 + $0x42] sm:$0xff]
        %v2429 = vld [vmem:[#allocation2 + $0x4a] sm:$0xff]
        %v2430 = vld [vmem:[#allocation2 + $0x52] sm:$0xff]
        %v2431 = vld [vmem:[#allocation2 + $0x5a] sm:$0xff]
        %v2432 = vsel %vm2213, %v2424, 0.0
        %v2433 = vsel %vm2214, %v2425, 0.0
        %v2434 = vsel %vm2215, %v2426, 0.0
        %v2435 = vsel %vm2216, %v2427, 0.0
        %v2436 = vsel %vm2217, %v2428, 0.0
        %v2437 = vsel %vm2218, %v2429, 0.0
        %v2438 = vsel %vm2219, %v2430, 0.0
        %v2439 = vsel %vm2220, %v2431, 0.0
        %v2440 = vpack.c.bf16 %v2433, %v2432
        %v2441 = vpack.c.bf16 %v2435, %v2434
        %v2442 = vpack.c.bf16 %v2437, %v2436
        %v2443 = vpack.c.bf16 %v2439, %v2438
        %v2448 = vunpack.c.l.b16 %v2440
        %v2449 = vunpack.c.h.b16 %v2440
        %v2450 = vunpack.c.l.b16 %v2441
        %v2451 = vunpack.c.h.b16 %v2441
        %v2452 = vunpack.c.l.b16 %v2442
        %v2453 = vunpack.c.h.b16 %v2442
        %v2454 = vunpack.c.l.b16 %v2443
        %v2455 = vunpack.c.h.b16 %v2443
        %v2456 = vpack.c.b16 %v2448, %v2448
        %v2457 = vpack.c.b16 %v2449, %v2449
        %v2458 = vpack.c.b16 %v2450, %v2450
        %v2459 = vpack.c.b16 %v2451, %v2451
        %v2460 = vpack.c.b16 %v2452, %v2452
        %v2461 = vpack.c.b16 %v2453, %v2453
        %v2462 = vpack.c.b16 %v2454, %v2454
        %v2463 = vpack.c.b16 %v2455, %v2455
        %2464 = vrot.lane.b32.xlu0 %v2456, 56
        %v2465 = vpop.permute.xlu0 %2464
        %2466 = vrot.lane.b32.xlu0 %v2457, 56
        %v2467 = vpop.permute.xlu0 %2466
        %2468 = vrot.lane.b32.xlu0 %v2458, 56
        %v2469 = vpop.permute.xlu0 %2468
        %2470 = vrot.lane.b32.xlu0 %v2459, 56
        %v2471 = vpop.permute.xlu0 %2470
        %2472 = vrot.lane.b32.xlu0 %v2460, 56
        %v2473 = vpop.permute.xlu0 %2472
        %2474 = vrot.lane.b32.xlu0 %v2461, 56
        %v2475 = vpop.permute.xlu0 %2474
        %2476 = vrot.lane.b32.xlu0 %v2462, 56
        %v2477 = vpop.permute.xlu0 %2476
        %2478 = vrot.lane.b32.xlu0 %v2463, 56
        %v2479 = vpop.permute.xlu0 %2478
        %vm2488 = vcmask 486848
        %2489 = vst.msk [vmem:[#allocation3] sm:$0xf] %vm2488, %v2465
        %2490 = vst.msk [vmem:[#allocation3 + $0x4] sm:$0xf] %vm2488, %v2467
        %2491 = vst.msk [vmem:[#allocation3 + $0x8] sm:$0xf] %vm2488, %v2469
        %2492 = vst.msk [vmem:[#allocation3 + $0xc] sm:$0xf] %vm2488, %v2471
        %2493 = vst.msk [vmem:[#allocation3 + $0x10] sm:$0xf] %vm2488, %v2473
        %2494 = vst.msk [vmem:[#allocation3 + $0x14] sm:$0xf] %vm2488, %v2475
        %2495 = vst.msk [vmem:[#allocation3 + $0x18] sm:$0xf] %vm2488, %v2477
        %2496 = vst.msk [vmem:[#allocation3 + $0x1c] sm:$0xf] %vm2488, %v2479
        %v2497 = vld [vmem:[#allocation2 + $0x2e] sm:$0xff]
        %v2498 = vld [vmem:[#allocation2 + $0x36] sm:$0xff]
        %v2499 = vld [vmem:[#allocation2 + $0x3e] sm:$0xff]
        %v2500 = vld [vmem:[#allocation2 + $0x46] sm:$0xff]
        %v2501 = vld [vmem:[#allocation2 + $0x4e] sm:$0xff]
        %v2502 = vld [vmem:[#allocation2 + $0x56] sm:$0xff]
        %v2503 = vld [vmem:[#allocation2 + $0x5e] sm:$0xff]
        %v2504 = vld [vmem:[#allocation2 + $0x66] sm:$0xff]
        %v2505 = vsel %vm2003, %v2497, 0.0
        %v2506 = vsel %vm2004, %v2498, 0.0
        %v2507 = vsel %vm2005, %v2499, 0.0
        %v2508 = vsel %vm2006, %v2500, 0.0
        %v2509 = vsel %vm2007, %v2501, 0.0
        %v2510 = vsel %vm2008, %v2502, 0.0
        %v2511 = vsel %vm2009, %v2503, 0.0
        %v2512 = vsel %vm2010, %v2504, 0.0
        %v2513 = vpack.c.bf16 %v2506, %v2505
        %v2514 = vpack.c.bf16 %v2508, %v2507
        %v2515 = vpack.c.bf16 %v2510, %v2509
        %v2516 = vpack.c.bf16 %v2512, %v2511
        %v2521 = vunpack.c.l.b16 %v2513
        %v2522 = vunpack.c.h.b16 %v2513
        %v2523 = vunpack.c.l.b16 %v2514
        %v2524 = vunpack.c.h.b16 %v2514
        %v2525 = vunpack.c.l.b16 %v2515
        %v2526 = vunpack.c.h.b16 %v2515
        %v2527 = vunpack.c.l.b16 %v2516
        %v2528 = vunpack.c.h.b16 %v2516
        %v2529 = vpack.c.b16 %v2521, %v2521
        %v2530 = vpack.c.b16 %v2522, %v2522
        %v2531 = vpack.c.b16 %v2523, %v2523
        %v2532 = vpack.c.b16 %v2524, %v2524
        %v2533 = vpack.c.b16 %v2525, %v2525
        %v2534 = vpack.c.b16 %v2526, %v2526
        %v2535 = vpack.c.b16 %v2527, %v2527
        %v2536 = vpack.c.b16 %v2528, %v2528
        %2537 = vrot.lane.b32.xlu0 %v2529, 60
        %v2538 = vpop.permute.xlu0 %2537
        %2539 = vrot.lane.b32.xlu0 %v2530, 60
        %v2540 = vpop.permute.xlu0 %2539
        %2541 = vrot.lane.b32.xlu0 %v2531, 60
        %v2542 = vpop.permute.xlu0 %2541
        %2543 = vrot.lane.b32.xlu0 %v2532, 60
        %v2544 = vpop.permute.xlu0 %2543
        %2545 = vrot.lane.b32.xlu0 %v2533, 60
        %v2546 = vpop.permute.xlu0 %2545
        %2547 = vrot.lane.b32.xlu0 %v2534, 60
        %v2548 = vpop.permute.xlu0 %2547
        %2549 = vrot.lane.b32.xlu0 %v2535, 60
        %v2550 = vpop.permute.xlu0 %2549
        %2551 = vrot.lane.b32.xlu0 %v2536, 60
        %v2552 = vpop.permute.xlu0 %2551
        %vm2561 = vcmask 519648
        %2562 = vst.msk [vmem:[#allocation3] sm:$0xf] %vm2561, %v2538
        %2563 = vst.msk [vmem:[#allocation3 + $0x4] sm:$0xf] %vm2561, %v2540
        %2564 = vst.msk [vmem:[#allocation3 + $0x8] sm:$0xf] %vm2561, %v2542
        %2565 = vst.msk [vmem:[#allocation3 + $0xc] sm:$0xf] %vm2561, %v2544
        %2566 = vst.msk [vmem:[#allocation3 + $0x10] sm:$0xf] %vm2561, %v2546
        %2567 = vst.msk [vmem:[#allocation3 + $0x14] sm:$0xf] %vm2561, %v2548
        %2568 = vst.msk [vmem:[#allocation3 + $0x18] sm:$0xf] %vm2561, %v2550
        %2569 = vst.msk [vmem:[#allocation3 + $0x1c] sm:$0xf] %vm2561, %v2552
        %v2570 = vld [vmem:[#allocation2 + $0x30] sm:$0xff]
        %v2571 = vld [vmem:[#allocation2 + $0x38] sm:$0xff]
        %v2572 = vld [vmem:[#allocation2 + $0x40] sm:$0xff]
        %v2573 = vld [vmem:[#allocation2 + $0x48] sm:$0xff]
        %v2574 = vld [vmem:[#allocation2 + $0x50] sm:$0xff]
        %v2575 = vld [vmem:[#allocation2 + $0x58] sm:$0xff]
        %v2576 = vld [vmem:[#allocation2 + $0x60] sm:$0xff]
        %v2577 = vld [vmem:[#allocation2 + $0x68] sm:$0xff]
        %v2578 = vpack.c.bf16 %v2571, %v2570
        %v2579 = vpack.c.bf16 %v2573, %v2572
        %v2580 = vpack.c.bf16 %v2575, %v2574
        %v2581 = vpack.c.bf16 %v2577, %v2576
        %v2586 = vunpack.c.l.b16 %v2578
        %v2587 = vunpack.c.h.b16 %v2578
        %v2588 = vunpack.c.l.b16 %v2579
        %v2589 = vunpack.c.h.b16 %v2579
        %v2590 = vunpack.c.l.b16 %v2580
        %v2591 = vunpack.c.h.b16 %v2580
        %v2592 = vunpack.c.l.b16 %v2581
        %v2593 = vunpack.c.h.b16 %v2581
        %v2594 = vpack.c.b16 %v2586, %v2586
        %v2595 = vpack.c.b16 %v2587, %v2587
        %v2596 = vpack.c.b16 %v2588, %v2588
        %v2597 = vpack.c.b16 %v2589, %v2589
        %v2598 = vpack.c.b16 %v2590, %v2590
        %v2599 = vpack.c.b16 %v2591, %v2591
        %v2600 = vpack.c.b16 %v2592, %v2592
        %v2601 = vpack.c.b16 %v2593, %v2593
        %2602 = vrot.lane.b32.xlu0 %v2594, 64
        %v2603 = vpop.permute.xlu0 %2602
        %2604 = vrot.lane.b32.xlu0 %v2595, 64
        %v2605 = vpop.permute.xlu0 %2604
        %2606 = vrot.lane.b32.xlu0 %v2596, 64
        %v2607 = vpop.permute.xlu0 %2606
        %2608 = vrot.lane.b32.xlu0 %v2597, 64
        %v2609 = vpop.permute.xlu0 %2608
        %2610 = vrot.lane.b32.xlu0 %v2598, 64
        %v2611 = vpop.permute.xlu0 %2610
        %2612 = vrot.lane.b32.xlu0 %v2599, 64
        %v2613 = vpop.permute.xlu0 %2612
        %2614 = vrot.lane.b32.xlu0 %v2600, 64
        %v2615 = vpop.permute.xlu0 %2614
        %2616 = vrot.lane.b32.xlu0 %v2601, 64
        %v2617 = vpop.permute.xlu0 %2616
        %vm2626 = vcmask 552448
        %2627 = vst.msk [vmem:[#allocation3] sm:$0xf] %vm2626, %v2603
        %2628 = vst.msk [vmem:[#allocation3 + $0x4] sm:$0xf] %vm2626, %v2605
        %2629 = vst.msk [vmem:[#allocation3 + $0x8] sm:$0xf] %vm2626, %v2607
        %2630 = vst.msk [vmem:[#allocation3 + $0xc] sm:$0xf] %vm2626, %v2609
        %2631 = vst.msk [vmem:[#allocation3 + $0x10] sm:$0xf] %vm2626, %v2611
        %2632 = vst.msk [vmem:[#allocation3 + $0x14] sm:$0xf] %vm2626, %v2613
        %2633 = vst.msk [vmem:[#allocation3 + $0x18] sm:$0xf] %vm2626, %v2615
        %2634 = vst.msk [vmem:[#allocation3 + $0x1c] sm:$0xf] %vm2626, %v2617
        %v2635 = vld [vmem:[#allocation2 + $0x32] sm:$0xff]
        %v2636 = vld [vmem:[#allocation2 + $0x3a] sm:$0xff]
        %v2637 = vld [vmem:[#allocation2 + $0x42] sm:$0xff]
        %v2638 = vld [vmem:[#allocation2 + $0x4a] sm:$0xff]
        %v2639 = vld [vmem:[#allocation2 + $0x52] sm:$0xff]
        %v2640 = vld [vmem:[#allocation2 + $0x5a] sm:$0xff]
        %v2641 = vld [vmem:[#allocation2 + $0x62] sm:$0xff]
        %v2642 = vld [vmem:[#allocation2 + $0x6a] sm:$0xff]
        %v2643 = vsel %vm2213, %v2635, 0.0
        %v2644 = vsel %vm2214, %v2636, 0.0
        %v2645 = vsel %vm2215, %v2637, 0.0
        %v2646 = vsel %vm2216, %v2638, 0.0
        %v2647 = vsel %vm2217, %v2639, 0.0
        %v2648 = vsel %vm2218, %v2640, 0.0
        %v2649 = vsel %vm2219, %v2641, 0.0
        %v2650 = vsel %vm2220, %v2642, 0.0
        %v2651 = vpack.c.bf16 %v2644, %v2643
        %v2652 = vpack.c.bf16 %v2646, %v2645
        %v2653 = vpack.c.bf16 %v2648, %v2647
        %v2654 = vpack.c.bf16 %v2650, %v2649
        %v2659 = vunpack.c.l.b16 %v2651
        %v2660 = vunpack.c.h.b16 %v2651
        %v2661 = vunpack.c.l.b16 %v2652
        %v2662 = vunpack.c.h.b16 %v2652
        %v2663 = vunpack.c.l.b16 %v2653
        %v2664 = vunpack.c.h.b16 %v2653
        %v2665 = vunpack.c.l.b16 %v2654
        %v2666 = vunpack.c.h.b16 %v2654
        %v2667 = vpack.c.b16 %v2659, %v2659
        %v2668 = vpack.c.b16 %v2660, %v2660
        %v2669 = vpack.c.b16 %v2661, %v2661
        %v2670 = vpack.c.b16 %v2662, %v2662
        %v2671 = vpack.c.b16 %v2663, %v2663
        %v2672 = vpack.c.b16 %v2664, %v2664
        %v2673 = vpack.c.b16 %v2665, %v2665
        %v2674 = vpack.c.b16 %v2666, %v2666
        %2675 = vrot.lane.b32.xlu0 %v2667, 68
        %v2676 = vpop.permute.xlu0 %2675
        %2677 = vrot.lane.b32.xlu0 %v2668, 68
        %v2678 = vpop.permute.xlu0 %2677
        %2679 = vrot.lane.b32.xlu0 %v2669, 68
        %v2680 = vpop.permute.xlu0 %2679
        %2681 = vrot.lane.b32.xlu0 %v2670, 68
        %v2682 = vpop.permute.xlu0 %2681
        %2683 = vrot.lane.b32.xlu0 %v2671, 68
        %v2684 = vpop.permute.xlu0 %2683
        %2685 = vrot.lane.b32.xlu0 %v2672, 68
        %v2686 = vpop.permute.xlu0 %2685
        %2687 = vrot.lane.b32.xlu0 %v2673, 68
        %v2688 = vpop.permute.xlu0 %2687
        %2689 = vrot.lane.b32.xlu0 %v2674, 68
        %v2690 = vpop.permute.xlu0 %2689
        %vm2699 = vcmask 585248
        %2700 = vst.msk [vmem:[#allocation3] sm:$0xf] %vm2699, %v2676
        %2701 = vst.msk [vmem:[#allocation3 + $0x4] sm:$0xf] %vm2699, %v2678
        %2702 = vst.msk [vmem:[#allocation3 + $0x8] sm:$0xf] %vm2699, %v2680
        %2703 = vst.msk [vmem:[#allocation3 + $0xc] sm:$0xf] %vm2699, %v2682
        %2704 = vst.msk [vmem:[#allocation3 + $0x10] sm:$0xf] %vm2699, %v2684
        %2705 = vst.msk [vmem:[#allocation3 + $0x14] sm:$0xf] %vm2699, %v2686
        %2706 = vst.msk [vmem:[#allocation3 + $0x18] sm:$0xf] %vm2699, %v2688
        %2707 = vst.msk [vmem:[#allocation3 + $0x1c] sm:$0xf] %vm2699, %v2690
        %v2708 = vld [vmem:[#allocation2 + $0x5] sm:$0xff]
        %v2709 = vld [vmem:[#allocation2 + $0xd] sm:$0xff]
        %v2710 = vld [vmem:[#allocation2 + $0x15] sm:$0xff]
        %v2711 = vld [vmem:[#allocation2 + $0x1d] sm:$0xff]
        %v2712 = vld [vmem:[#allocation2 + $0x25] sm:$0xff]
        %v2713 = vld [vmem:[#allocation2 + $0x2d] sm:$0xff]
        %v2714 = vld [vmem:[#allocation2 + $0x35] sm:$0xff]
        %v2715 = vld [vmem:[#allocation2 + $0x3d] sm:$0xff]
        %v2716 = vadd.s32 %v1162, 4294967293
        %v2717 = vadd.s32 %v1163, 4294967293
        %v2718 = vadd.s32 %v1164, 4294967293
        %v2719 = vadd.s32 %v1165, 4294967293
        %v2720 = vadd.s32 %v1166, 4294967293
        %v2721 = vadd.s32 %v1167, 4294967293
        %v2722 = vadd.s32 %v1168, 4294967293
        %v2723 = vadd.s32 %v1169, 4294967293
        %vm2724 = vcmp.ge.s32.totalorder %v2716, 0
        %vm2725 = vcmp.ge.s32.totalorder %v2717, 0
        %vm2726 = vcmp.ge.s32.totalorder %v2718, 0
        %vm2727 = vcmp.ge.s32.totalorder %v2719, 0
        %vm2728 = vcmp.ge.s32.totalorder %v2720, 0
        %vm2729 = vcmp.ge.s32.totalorder %v2721, 0
        %vm2730 = vcmp.ge.s32.totalorder %v2722, 0
        %vm2731 = vcmp.ge.s32.totalorder %v2723, 0
        %vm2732 = vcmp.lt.s32.totalorder %v2716, 8
        %vm2733 = vcmp.lt.s32.totalorder %v2717, 8
        %vm2734 = vcmp.lt.s32.totalorder %v2718, 8
        %vm2735 = vcmp.lt.s32.totalorder %v2719, 8
        %vm2736 = vcmp.lt.s32.totalorder %v2720, 8
        %vm2737 = vcmp.lt.s32.totalorder %v2721, 8
        %vm2738 = vcmp.lt.s32.totalorder %v2722, 8
        %vm2739 = vcmp.lt.s32.totalorder %v2723, 8
        %vm2740 = vmand %vm2724, %vm2732
        %vm2741 = vmand %vm2725, %vm2733
        %vm2742 = vmand %vm2726, %vm2734
        %vm2743 = vmand %vm2727, %vm2735
        %vm2744 = vmand %vm2728, %vm2736
        %vm2745 = vmand %vm2729, %vm2737
        %vm2746 = vmand %vm2730, %vm2738
        %vm2747 = vmand %vm2731, %vm2739
        %v2748 = vsel %vm2740, 1, 0
        %v2749 = vsel %vm2741, 1, 0
        %v2750 = vsel %vm2742, 1, 0
        %v2751 = vsel %vm2743, 1, 0
        %v2752 = vsel %vm2744, 1, 0
        %v2753 = vsel %vm2745, 1, 0
        %v2754 = vsel %vm2746, 1, 0
        %v2755 = vsel %vm2747, 1, 0
        %2756 = vset.pattern.permute.xlu0 0
        %2757 = vperm.xlu0 %2756, %v2748
        %v2758 = vpop.permute.xlu0 %2757
        %2759 = vset.pattern.permute.xlu0 0
        %2760 = vperm.xlu0 %2759, %v2749
        %v2761 = vpop.permute.xlu0 %2760
        %2762 = vset.pattern.permute.xlu0 0
        %2763 = vperm.xlu0 %2762, %v2750
        %v2764 = vpop.permute.xlu0 %2763
        %2765 = vset.pattern.permute.xlu0 0
        %2766 = vperm.xlu0 %2765, %v2751
        %v2767 = vpop.permute.xlu0 %2766
        %2768 = vset.pattern.permute.xlu0 0
        %2769 = vperm.xlu0 %2768, %v2752
        %v2770 = vpop.permute.xlu0 %2769
        %2771 = vset.pattern.permute.xlu0 0
        %2772 = vperm.xlu0 %2771, %v2753
        %v2773 = vpop.permute.xlu0 %2772
        %2774 = vset.pattern.permute.xlu0 0
        %2775 = vperm.xlu0 %2774, %v2754
        %v2776 = vpop.permute.xlu0 %2775
        %2777 = vset.pattern.permute.xlu0 0
        %2778 = vperm.xlu0 %2777, %v2755
        %v2779 = vpop.permute.xlu0 %2778
        %vm2780 = vcmp.eq.s32.totalorder %v2758, 1
        %vm2781 = vcmp.eq.s32.totalorder %v2761, 1
        %vm2782 = vcmp.eq.s32.totalorder %v2764, 1
        %vm2783 = vcmp.eq.s32.totalorder %v2767, 1
        %vm2784 = vcmp.eq.s32.totalorder %v2770, 1
        %vm2785 = vcmp.eq.s32.totalorder %v2773, 1
        %vm2786 = vcmp.eq.s32.totalorder %v2776, 1
        %vm2787 = vcmp.eq.s32.totalorder %v2779, 1
        %v2788 = vsel %vm2780, %v2708, 0.0
        %v2789 = vsel %vm2781, %v2709, 0.0
        %v2790 = vsel %vm2782, %v2710, 0.0
        %v2791 = vsel %vm2783, %v2711, 0.0
        %v2792 = vsel %vm2784, %v2712, 0.0
        %v2793 = vsel %vm2785, %v2713, 0.0
        %v2794 = vsel %vm2786, %v2714, 0.0
        %v2795 = vsel %vm2787, %v2715, 0.0
        %v2796 = vpack.c.bf16 %v2789, %v2788
        %v2797 = vpack.c.bf16 %v2791, %v2790
        %v2798 = vpack.c.bf16 %v2793, %v2792
        %v2799 = vpack.c.bf16 %v2795, %v2794
        %v2804 = vunpack.c.l.b16 %v2796
        %v2805 = vunpack.c.h.b16 %v2796
        %v2806 = vunpack.c.l.b16 %v2797
        %v2807 = vunpack.c.h.b16 %v2797
        %v2808 = vunpack.c.l.b16 %v2798
        %v2809 = vunpack.c.h.b16 %v2798
        %v2810 = vunpack.c.l.b16 %v2799
        %v2811 = vunpack.c.h.b16 %v2799
        %v2812 = vpack.c.b16 %v2804, %v2804
        %v2813 = vpack.c.b16 %v2805, %v2805
        %v2814 = vpack.c.b16 %v2806, %v2806
        %v2815 = vpack.c.b16 %v2807, %v2807
        %v2816 = vpack.c.b16 %v2808, %v2808
        %v2817 = vpack.c.b16 %v2809, %v2809
        %v2818 = vpack.c.b16 %v2810, %v2810
        %v2819 = vpack.c.b16 %v2811, %v2811
        %2820 = vrot.lane.b32.xlu0 %v2812, 72
        %v2821 = vpop.permute.xlu0 %2820
        %2822 = vrot.lane.b32.xlu0 %v2813, 72
        %v2823 = vpop.permute.xlu0 %2822
        %2824 = vrot.lane.b32.xlu0 %v2814, 72
        %v2825 = vpop.permute.xlu0 %2824
        %2826 = vrot.lane.b32.xlu0 %v2815, 72
        %v2827 = vpop.permute.xlu0 %2826
        %2828 = vrot.lane.b32.xlu0 %v2816, 72
        %v2829 = vpop.permute.xlu0 %2828
        %2830 = vrot.lane.b32.xlu0 %v2817, 72
        %v2831 = vpop.permute.xlu0 %2830
        %2832 = vrot.lane.b32.xlu0 %v2818, 72
        %v2833 = vpop.permute.xlu0 %2832
        %2834 = vrot.lane.b32.xlu0 %v2819, 72
        %v2835 = vpop.permute.xlu0 %2834
        %vm2844 = vcmask 618048
        %2845 = vst.msk [vmem:[#allocation3] sm:$0xf] %vm2844, %v2821
        %2846 = vst.msk [vmem:[#allocation3 + $0x4] sm:$0xf] %vm2844, %v2823
        %2847 = vst.msk [vmem:[#allocation3 + $0x8] sm:$0xf] %vm2844, %v2825
        %2848 = vst.msk [vmem:[#allocation3 + $0xc] sm:$0xf] %vm2844, %v2827
        %2849 = vst.msk [vmem:[#allocation3 + $0x10] sm:$0xf] %vm2844, %v2829
        %2850 = vst.msk [vmem:[#allocation3 + $0x14] sm:$0xf] %vm2844, %v2831
        %2851 = vst.msk [vmem:[#allocation3 + $0x18] sm:$0xf] %vm2844, %v2833
        %2852 = vst.msk [vmem:[#allocation3 + $0x1c] sm:$0xf] %vm2844, %v2835
        %v2853 = vld [vmem:[#allocation2 + $0x8] sm:$0xff]
        %v2854 = vld [vmem:[#allocation2 + $0x10] sm:$0xff]
        %v2855 = vld [vmem:[#allocation2 + $0x18] sm:$0xff]
        %v2856 = vld [vmem:[#allocation2 + $0x20] sm:$0xff]
        %v2857 = vld [vmem:[#allocation2 + $0x28] sm:$0xff]
        %v2858 = vld [vmem:[#allocation2 + $0x30] sm:$0xff]
        %v2859 = vld [vmem:[#allocation2 + $0x38] sm:$0xff]
        %v2860 = vld [vmem:[#allocation2 + $0x40] sm:$0xff]
        %v2861 = vpack.c.bf16 %v2854, %v2853
        %v2862 = vpack.c.bf16 %v2856, %v2855
        %v2863 = vpack.c.bf16 %v2858, %v2857
        %v2864 = vpack.c.bf16 %v2860, %v2859
        %v2869 = vunpack.c.l.b16 %v2861
        %v2870 = vunpack.c.h.b16 %v2861
        %v2871 = vunpack.c.l.b16 %v2862
        %v2872 = vunpack.c.h.b16 %v2862
        %v2873 = vunpack.c.l.b16 %v2863
        %v2874 = vunpack.c.h.b16 %v2863
        %v2875 = vunpack.c.l.b16 %v2864
        %v2876 = vunpack.c.h.b16 %v2864
        %v2877 = vpack.c.b16 %v2869, %v2869
        %v2878 = vpack.c.b16 %v2870, %v2870
        %v2879 = vpack.c.b16 %v2871, %v2871
        %v2880 = vpack.c.b16 %v2872, %v2872
        %v2881 = vpack.c.b16 %v2873, %v2873
        %v2882 = vpack.c.b16 %v2874, %v2874
        %v2883 = vpack.c.b16 %v2875, %v2875
        %v2884 = vpack.c.b16 %v2876, %v2876
        %2885 = vrot.lane.b32.xlu0 %v2877, 76
        %v2886 = vpop.permute.xlu0 %2885
        %2887 = vrot.lane.b32.xlu0 %v2878, 76
        %v2888 = vpop.permute.xlu0 %2887
        %2889 = vrot.lane.b32.xlu0 %v2879, 76
        %v2890 = vpop.permute.xlu0 %2889
        %2891 = vrot.lane.b32.xlu0 %v2880, 76
        %v2892 = vpop.permute.xlu0 %2891
        %2893 = vrot.lane.b32.xlu0 %v2881, 76
        %v2894 = vpop.permute.xlu0 %2893
        %2895 = vrot.lane.b32.xlu0 %v2882, 76
        %v2896 = vpop.permute.xlu0 %2895
        %2897 = vrot.lane.b32.xlu0 %v2883, 76
        %v2898 = vpop.permute.xlu0 %2897
        %2899 = vrot.lane.b32.xlu0 %v2884, 76
        %v2900 = vpop.permute.xlu0 %2899
        %vm2909 = vcmask 650848
        %2910 = vst.msk [vmem:[#allocation3] sm:$0xf] %vm2909, %v2886
        %2911 = vst.msk [vmem:[#allocation3 + $0x4] sm:$0xf] %vm2909, %v2888
        %2912 = vst.msk [vmem:[#allocation3 + $0x8] sm:$0xf] %vm2909, %v2890
        %2913 = vst.msk [vmem:[#allocation3 + $0xc] sm:$0xf] %vm2909, %v2892
        %2914 = vst.msk [vmem:[#allocation3 + $0x10] sm:$0xf] %vm2909, %v2894
        %2915 = vst.msk [vmem:[#allocation3 + $0x14] sm:$0xf] %vm2909, %v2896
        %2916 = vst.msk [vmem:[#allocation3 + $0x18] sm:$0xf] %vm2909, %v2898
        %2917 = vst.msk [vmem:[#allocation3 + $0x1c] sm:$0xf] %vm2909, %v2900
        %v2918 = vld [vmem:[#allocation2 + $0xb] sm:$0xff]
        %v2919 = vld [vmem:[#allocation2 + $0x13] sm:$0xff]
        %v2920 = vld [vmem:[#allocation2 + $0x1b] sm:$0xff]
        %v2921 = vld [vmem:[#allocation2 + $0x23] sm:$0xff]
        %v2922 = vld [vmem:[#allocation2 + $0x2b] sm:$0xff]
        %v2923 = vld [vmem:[#allocation2 + $0x33] sm:$0xff]
        %v2924 = vld [vmem:[#allocation2 + $0x3b] sm:$0xff]
        %v2925 = vld [vmem:[#allocation2 + $0x43] sm:$0xff]
        %v2926 = vadd.s32 %v1162, 3
        %v2927 = vadd.s32 %v1163, 3
        %v2928 = vadd.s32 %v1164, 3
        %v2929 = vadd.s32 %v1165, 3
        %v2930 = vadd.s32 %v1166, 3
        %v2931 = vadd.s32 %v1167, 3
        %v2932 = vadd.s32 %v1168, 3
        %v2933 = vadd.s32 %v1169, 3
        %vm2934 = vcmp.ge.s32.totalorder %v2926, 0
        %vm2935 = vcmp.ge.s32.totalorder %v2927, 0
        %vm2936 = vcmp.ge.s32.totalorder %v2928, 0
        %vm2937 = vcmp.ge.s32.totalorder %v2929, 0
        %vm2938 = vcmp.ge.s32.totalorder %v2930, 0
        %vm2939 = vcmp.ge.s32.totalorder %v2931, 0
        %vm2940 = vcmp.ge.s32.totalorder %v2932, 0
        %vm2941 = vcmp.ge.s32.totalorder %v2933, 0
        %vm2942 = vcmp.lt.s32.totalorder %v2926, 8
        %vm2943 = vcmp.lt.s32.totalorder %v2927, 8
        %vm2944 = vcmp.lt.s32.totalorder %v2928, 8
        %vm2945 = vcmp.lt.s32.totalorder %v2929, 8
        %vm2946 = vcmp.lt.s32.totalorder %v2930, 8
        %vm2947 = vcmp.lt.s32.totalorder %v2931, 8
        %vm2948 = vcmp.lt.s32.totalorder %v2932, 8
        %vm2949 = vcmp.lt.s32.totalorder %v2933, 8
        %vm2950 = vmand %vm2934, %vm2942
        %vm2951 = vmand %vm2935, %vm2943
        %vm2952 = vmand %vm2936, %vm2944
        %vm2953 = vmand %vm2937, %vm2945
        %vm2954 = vmand %vm2938, %vm2946
        %vm2955 = vmand %vm2939, %vm2947
        %vm2956 = vmand %vm2940, %vm2948
        %vm2957 = vmand %vm2941, %vm2949
        %v2958 = vsel %vm2950, 1, 0
        %v2959 = vsel %vm2951, 1, 0
        %v2960 = vsel %vm2952, 1, 0
        %v2961 = vsel %vm2953, 1, 0
        %v2962 = vsel %vm2954, 1, 0
        %v2963 = vsel %vm2955, 1, 0
        %v2964 = vsel %vm2956, 1, 0
        %v2965 = vsel %vm2957, 1, 0
        %2966 = vset.pattern.permute.xlu0 0
        %2967 = vperm.xlu0 %2966, %v2958
        %v2968 = vpop.permute.xlu0 %2967
        %2969 = vset.pattern.permute.xlu0 0
        %2970 = vperm.xlu0 %2969, %v2959
        %v2971 = vpop.permute.xlu0 %2970
        %2972 = vset.pattern.permute.xlu0 0
        %2973 = vperm.xlu0 %2972, %v2960
        %v2974 = vpop.permute.xlu0 %2973
        %2975 = vset.pattern.permute.xlu0 0
        %2976 = vperm.xlu0 %2975, %v2961
        %v2977 = vpop.permute.xlu0 %2976
        %2978 = vset.pattern.permute.xlu0 0
        %2979 = vperm.xlu0 %2978, %v2962
        %v2980 = vpop.permute.xlu0 %2979
        %2981 = vset.pattern.permute.xlu0 0
        %2982 = vperm.xlu0 %2981, %v2963
        %v2983 = vpop.permute.xlu0 %2982
        %2984 = vset.pattern.permute.xlu0 0
        %2985 = vperm.xlu0 %2984, %v2964
        %v2986 = vpop.permute.xlu0 %2985
        %2987 = vset.pattern.permute.xlu0 0
        %2988 = vperm.xlu0 %2987, %v2965
        %v2989 = vpop.permute.xlu0 %2988
        %vm2990 = vcmp.eq.s32.totalorder %v2968, 1
        %vm2991 = vcmp.eq.s32.totalorder %v2971, 1
        %vm2992 = vcmp.eq.s32.totalorder %v2974, 1
        %vm2993 = vcmp.eq.s32.totalorder %v2977, 1
        %vm2994 = vcmp.eq.s32.totalorder %v2980, 1
        %vm2995 = vcmp.eq.s32.totalorder %v2983, 1
        %vm2996 = vcmp.eq.s32.totalorder %v2986, 1
        %vm2997 = vcmp.eq.s32.totalorder %v2989, 1
        %v2998 = vsel %vm2990, %v2918, 0.0
        %v2999 = vsel %vm2991, %v2919, 0.0
        %v3000 = vsel %vm2992, %v2920, 0.0
        %v3001 = vsel %vm2993, %v2921, 0.0
        %v3002 = vsel %vm2994, %v2922, 0.0
        %v3003 = vsel %vm2995, %v2923, 0.0
        %v3004 = vsel %vm2996, %v2924, 0.0
        %v3005 = vsel %vm2997, %v2925, 0.0
        %v3006 = vpack.c.bf16 %v2999, %v2998
        %v3007 = vpack.c.bf16 %v3001, %v3000
        %v3008 = vpack.c.bf16 %v3003, %v3002
        %v3009 = vpack.c.bf16 %v3005, %v3004
        %v3014 = vunpack.c.l.b16 %v3006
        %v3015 = vunpack.c.h.b16 %v3006
        %v3016 = vunpack.c.l.b16 %v3007
        %v3017 = vunpack.c.h.b16 %v3007
        %v3018 = vunpack.c.l.b16 %v3008
        %v3019 = vunpack.c.h.b16 %v3008
        %v3020 = vunpack.c.l.b16 %v3009
        %v3021 = vunpack.c.h.b16 %v3009
        %v3022 = vpack.c.b16 %v3014, %v3014
        %v3023 = vpack.c.b16 %v3015, %v3015
        %v3024 = vpack.c.b16 %v3016, %v3016
        %v3025 = vpack.c.b16 %v3017, %v3017
        %v3026 = vpack.c.b16 %v3018, %v3018
        %v3027 = vpack.c.b16 %v3019, %v3019
        %v3028 = vpack.c.b16 %v3020, %v3020
        %v3029 = vpack.c.b16 %v3021, %v3021
        %3030 = vrot.lane.b32.xlu0 %v3022, 80
        %v3031 = vpop.permute.xlu0 %3030
        %3032 = vrot.lane.b32.xlu0 %v3023, 80
        %v3033 = vpop.permute.xlu0 %3032
        %3034 = vrot.lane.b32.xlu0 %v3024, 80
        %v3035 = vpop.permute.xlu0 %3034
        %3036 = vrot.lane.b32.xlu0 %v3025, 80
        %v3037 = vpop.permute.xlu0 %3036
        %3038 = vrot.lane.b32.xlu0 %v3026, 80
        %v3039 = vpop.permute.xlu0 %3038
        %3040 = vrot.lane.b32.xlu0 %v3027, 80
        %v3041 = vpop.permute.xlu0 %3040
        %3042 = vrot.lane.b32.xlu0 %v3028, 80
        %v3043 = vpop.permute.xlu0 %3042
        %3044 = vrot.lane.b32.xlu0 %v3029, 80
        %v3045 = vpop.permute.xlu0 %3044
        %vm3054 = vcmask 683648
        %3055 = vst.msk [vmem:[#allocation3] sm:$0xf] %vm3054, %v3031
        %3056 = vst.msk [vmem:[#allocation3 + $0x4] sm:$0xf] %vm3054, %v3033
        %3057 = vst.msk [vmem:[#allocation3 + $0x8] sm:$0xf] %vm3054, %v3035
        %3058 = vst.msk [vmem:[#allocation3 + $0xc] sm:$0xf] %vm3054, %v3037
        %3059 = vst.msk [vmem:[#allocation3 + $0x10] sm:$0xf] %vm3054, %v3039
        %3060 = vst.msk [vmem:[#allocation3 + $0x14] sm:$0xf] %vm3054, %v3041
        %3061 = vst.msk [vmem:[#allocation3 + $0x18] sm:$0xf] %vm3054, %v3043
        %3062 = vst.msk [vmem:[#allocation3 + $0x1c] sm:$0xf] %vm3054, %v3045
        %v3063 = vld [vmem:[#allocation2 + $0x1d] sm:$0xff]
        %v3064 = vld [vmem:[#allocation2 + $0x25] sm:$0xff]
        %v3065 = vld [vmem:[#allocation2 + $0x2d] sm:$0xff]
        %v3066 = vld [vmem:[#allocation2 + $0x35] sm:$0xff]
        %v3067 = vld [vmem:[#allocation2 + $0x3d] sm:$0xff]
        %v3068 = vld [vmem:[#allocation2 + $0x45] sm:$0xff]
        %v3069 = vld [vmem:[#allocation2 + $0x4d] sm:$0xff]
        %v3070 = vld [vmem:[#allocation2 + $0x55] sm:$0xff]
        %v3071 = vsel %vm2780, %v3063, 0.0
        %v3072 = vsel %vm2781, %v3064, 0.0
        %v3073 = vsel %vm2782, %v3065, 0.0
        %v3074 = vsel %vm2783, %v3066, 0.0
        %v3075 = vsel %vm2784, %v3067, 0.0
        %v3076 = vsel %vm2785, %v3068, 0.0
        %v3077 = vsel %vm2786, %v3069, 0.0
        %v3078 = vsel %vm2787, %v3070, 0.0
        %v3079 = vpack.c.bf16 %v3072, %v3071
        %v3080 = vpack.c.bf16 %v3074, %v3073
        %v3081 = vpack.c.bf16 %v3076, %v3075
        %v3082 = vpack.c.bf16 %v3078, %v3077
        %v3087 = vunpack.c.l.b16 %v3079
        %v3088 = vunpack.c.h.b16 %v3079
        %v3089 = vunpack.c.l.b16 %v3080
        %v3090 = vunpack.c.h.b16 %v3080
        %v3091 = vunpack.c.l.b16 %v3081
        %v3092 = vunpack.c.h.b16 %v3081
        %v3093 = vunpack.c.l.b16 %v3082
        %v3094 = vunpack.c.h.b16 %v3082
        %v3095 = vpack.c.b16 %v3087, %v3087
        %v3096 = vpack.c.b16 %v3088, %v3088
        %v3097 = vpack.c.b16 %v3089, %v3089
        %v3098 = vpack.c.b16 %v3090, %v3090
        %v3099 = vpack.c.b16 %v3091, %v3091
        %v3100 = vpack.c.b16 %v3092, %v3092
        %v3101 = vpack.c.b16 %v3093, %v3093
        %v3102 = vpack.c.b16 %v3094, %v3094
        %3103 = vrot.lane.b32.xlu0 %v3095, 84
        %v3104 = vpop.permute.xlu0 %3103
        %3105 = vrot.lane.b32.xlu0 %v3096, 84
        %v3106 = vpop.permute.xlu0 %3105
        %3107 = vrot.lane.b32.xlu0 %v3097, 84
        %v3108 = vpop.permute.xlu0 %3107
        %3109 = vrot.lane.b32.xlu0 %v3098, 84
        %v3110 = vpop.permute.xlu0 %3109
        %3111 = vrot.lane.b32.xlu0 %v3099, 84
        %v3112 = vpop.permute.xlu0 %3111
        %3113 = vrot.lane.b32.xlu0 %v3100, 84
        %v3114 = vpop.permute.xlu0 %3113
        %3115 = vrot.lane.b32.xlu0 %v3101, 84
        %v3116 = vpop.permute.xlu0 %3115
        %3117 = vrot.lane.b32.xlu0 %v3102, 84
        %v3118 = vpop.permute.xlu0 %3117
        %vm3127 = vcmask 716448
        %3128 = vst.msk [vmem:[#allocation3] sm:$0xf] %vm3127, %v3104
        %3129 = vst.msk [vmem:[#allocation3 + $0x4] sm:$0xf] %vm3127, %v3106
        %3130 = vst.msk [vmem:[#allocation3 + $0x8] sm:$0xf] %vm3127, %v3108
        %3131 = vst.msk [vmem:[#allocation3 + $0xc] sm:$0xf] %vm3127, %v3110
        %3132 = vst.msk [vmem:[#allocation3 + $0x10] sm:$0xf] %vm3127, %v3112
        %3133 = vst.msk [vmem:[#allocation3 + $0x14] sm:$0xf] %vm3127, %v3114
        %3134 = vst.msk [vmem:[#allocation3 + $0x18] sm:$0xf] %vm3127, %v3116
        %3135 = vst.msk [vmem:[#allocation3 + $0x1c] sm:$0xf] %vm3127, %v3118
        %v3136 = vld [vmem:[#allocation2 + $0x20] sm:$0xff]
        %v3137 = vld [vmem:[#allocation2 + $0x28] sm:$0xff]
        %v3138 = vld [vmem:[#allocation2 + $0x30] sm:$0xff]
        %v3139 = vld [vmem:[#allocation2 + $0x38] sm:$0xff]
        %v3140 = vld [vmem:[#allocation2 + $0x40] sm:$0xff]
        %v3141 = vld [vmem:[#allocation2 + $0x48] sm:$0xff]
        %v3142 = vld [vmem:[#allocation2 + $0x50] sm:$0xff]
        %v3143 = vld [vmem:[#allocation2 + $0x58] sm:$0xff]
        %v3144 = vpack.c.bf16 %v3137, %v3136
        %v3145 = vpack.c.bf16 %v3139, %v3138
        %v3146 = vpack.c.bf16 %v3141, %v3140
        %v3147 = vpack.c.bf16 %v3143, %v3142
        %v3152 = vunpack.c.l.b16 %v3144
        %v3153 = vunpack.c.h.b16 %v3144
        %v3154 = vunpack.c.l.b16 %v3145
        %v3155 = vunpack.c.h.b16 %v3145
        %v3156 = vunpack.c.l.b16 %v3146
        %v3157 = vunpack.c.h.b16 %v3146
        %v3158 = vunpack.c.l.b16 %v3147
        %v3159 = vunpack.c.h.b16 %v3147
        %v3160 = vpack.c.b16 %v3152, %v3152
        %v3161 = vpack.c.b16 %v3153, %v3153
        %v3162 = vpack.c.b16 %v3154, %v3154
        %v3163 = vpack.c.b16 %v3155, %v3155
        %v3164 = vpack.c.b16 %v3156, %v3156
        %v3165 = vpack.c.b16 %v3157, %v3157
        %v3166 = vpack.c.b16 %v3158, %v3158
        %v3167 = vpack.c.b16 %v3159, %v3159
        %3168 = vrot.lane.b32.xlu0 %v3160, 88
        %v3169 = vpop.permute.xlu0 %3168
        %3170 = vrot.lane.b32.xlu0 %v3161, 88
        %v3171 = vpop.permute.xlu0 %3170
        %3172 = vrot.lane.b32.xlu0 %v3162, 88
        %v3173 = vpop.permute.xlu0 %3172
        %3174 = vrot.lane.b32.xlu0 %v3163, 88
        %v3175 = vpop.permute.xlu0 %3174
        %3176 = vrot.lane.b32.xlu0 %v3164, 88
        %v3177 = vpop.permute.xlu0 %3176
        %3178 = vrot.lane.b32.xlu0 %v3165, 88
        %v3179 = vpop.permute.xlu0 %3178
        %3180 = vrot.lane.b32.xlu0 %v3166, 88
        %v3181 = vpop.permute.xlu0 %3180
        %3182 = vrot.lane.b32.xlu0 %v3167, 88
        %v3183 = vpop.permute.xlu0 %3182
        %vm3192 = vcmask 749248
        %3193 = vst.msk [vmem:[#allocation3] sm:$0xf] %vm3192, %v3169
        %3194 = vst.msk [vmem:[#allocation3 + $0x4] sm:$0xf] %vm3192, %v3171
        %3195 = vst.msk [vmem:[#allocation3 + $0x8] sm:$0xf] %vm3192, %v3173
        %3196 = vst.msk [vmem:[#allocation3 + $0xc] sm:$0xf] %vm3192, %v3175
        %3197 = vst.msk [vmem:[#allocation3 + $0x10] sm:$0xf] %vm3192, %v3177
        %3198 = vst.msk [vmem:[#allocation3 + $0x14] sm:$0xf] %vm3192, %v3179
        %3199 = vst.msk [vmem:[#allocation3 + $0x18] sm:$0xf] %vm3192, %v3181
        %3200 = vst.msk [vmem:[#allocation3 + $0x1c] sm:$0xf] %vm3192, %v3183
        %v3201 = vld [vmem:[#allocation2 + $0x23] sm:$0xff]
        %v3202 = vld [vmem:[#allocation2 + $0x2b] sm:$0xff]
        %v3203 = vld [vmem:[#allocation2 + $0x33] sm:$0xff]
        %v3204 = vld [vmem:[#allocation2 + $0x3b] sm:$0xff]
        %v3205 = vld [vmem:[#allocation2 + $0x43] sm:$0xff]
        %v3206 = vld [vmem:[#allocation2 + $0x4b] sm:$0xff]
        %v3207 = vld [vmem:[#allocation2 + $0x53] sm:$0xff]
        %v3208 = vld [vmem:[#allocation2 + $0x5b] sm:$0xff]
        %v3209 = vsel %vm2990, %v3201, 0.0
        %v3210 = vsel %vm2991, %v3202, 0.0
        %v3211 = vsel %vm2992, %v3203, 0.0
        %v3212 = vsel %vm2993, %v3204, 0.0
        %v3213 = vsel %vm2994, %v3205, 0.0
        %v3214 = vsel %vm2995, %v3206, 0.0
        %v3215 = vsel %vm2996, %v3207, 0.0
        %v3216 = vsel %vm2997, %v3208, 0.0
        %v3217 = vpack.c.bf16 %v3210, %v3209
        %v3218 = vpack.c.bf16 %v3212, %v3211
        %v3219 = vpack.c.bf16 %v3214, %v3213
        %v3220 = vpack.c.bf16 %v3216, %v3215
        %v3225 = vunpack.c.l.b16 %v3217
        %v3226 = vunpack.c.h.b16 %v3217
        %v3227 = vunpack.c.l.b16 %v3218
        %v3228 = vunpack.c.h.b16 %v3218
        %v3229 = vunpack.c.l.b16 %v3219
        %v3230 = vunpack.c.h.b16 %v3219
        %v3231 = vunpack.c.l.b16 %v3220
        %v3232 = vunpack.c.h.b16 %v3220
        %v3233 = vpack.c.b16 %v3225, %v3225
        %v3234 = vpack.c.b16 %v3226, %v3226
        %v3235 = vpack.c.b16 %v3227, %v3227
        %v3236 = vpack.c.b16 %v3228, %v3228
        %v3237 = vpack.c.b16 %v3229, %v3229
        %v3238 = vpack.c.b16 %v3230, %v3230
        %v3239 = vpack.c.b16 %v3231, %v3231
        %v3240 = vpack.c.b16 %v3232, %v3232
        %3241 = vrot.lane.b32.xlu0 %v3233, 92
        %v3242 = vpop.permute.xlu0 %3241
        %3243 = vrot.lane.b32.xlu0 %v3234, 92
        %v3244 = vpop.permute.xlu0 %3243
        %3245 = vrot.lane.b32.xlu0 %v3235, 92
        %v3246 = vpop.permute.xlu0 %3245
        %3247 = vrot.lane.b32.xlu0 %v3236, 92
        %v3248 = vpop.permute.xlu0 %3247
        %3249 = vrot.lane.b32.xlu0 %v3237, 92
        %v3250 = vpop.permute.xlu0 %3249
        %3251 = vrot.lane.b32.xlu0 %v3238, 92
        %v3252 = vpop.permute.xlu0 %3251
        %3253 = vrot.lane.b32.xlu0 %v3239, 92
        %v3254 = vpop.permute.xlu0 %3253
        %3255 = vrot.lane.b32.xlu0 %v3240, 92
        %v3256 = vpop.permute.xlu0 %3255
        %vm3265 = vcmask 782048
        %3266 = vst.msk [vmem:[#allocation3] sm:$0xf] %vm3265, %v3242
        %3267 = vst.msk [vmem:[#allocation3 + $0x4] sm:$0xf] %vm3265, %v3244
        %3268 = vst.msk [vmem:[#allocation3 + $0x8] sm:$0xf] %vm3265, %v3246
        %3269 = vst.msk [vmem:[#allocation3 + $0xc] sm:$0xf] %vm3265, %v3248
        %3270 = vst.msk [vmem:[#allocation3 + $0x10] sm:$0xf] %vm3265, %v3250
        %3271 = vst.msk [vmem:[#allocation3 + $0x14] sm:$0xf] %vm3265, %v3252
        %3272 = vst.msk [vmem:[#allocation3 + $0x18] sm:$0xf] %vm3265, %v3254
        %3273 = vst.msk [vmem:[#allocation3 + $0x1c] sm:$0xf] %vm3265, %v3256
        %v3274 = vld [vmem:[#allocation2 + $0x35] sm:$0xff]
        %v3275 = vld [vmem:[#allocation2 + $0x3d] sm:$0xff]
        %v3276 = vld [vmem:[#allocation2 + $0x45] sm:$0xff]
        %v3277 = vld [vmem:[#allocation2 + $0x4d] sm:$0xff]
        %v3278 = vld [vmem:[#allocation2 + $0x55] sm:$0xff]
        %v3279 = vld [vmem:[#allocation2 + $0x5d] sm:$0xff]
        %v3280 = vld [vmem:[#allocation2 + $0x65] sm:$0xff]
        %v3281 = vld [vmem:[#allocation2 + $0x6d] sm:$0xff]
        %v3282 = vsel %vm2780, %v3274, 0.0
        %v3283 = vsel %vm2781, %v3275, 0.0
        %v3284 = vsel %vm2782, %v3276, 0.0
        %v3285 = vsel %vm2783, %v3277, 0.0
        %v3286 = vsel %vm2784, %v3278, 0.0
        %v3287 = vsel %vm2785, %v3279, 0.0
        %v3288 = vsel %vm2786, %v3280, 0.0
        %v3289 = vsel %vm2787, %v3281, 0.0
        %v3290 = vpack.c.bf16 %v3283, %v3282
        %v3291 = vpack.c.bf16 %v3285, %v3284
        %v3292 = vpack.c.bf16 %v3287, %v3286
        %v3293 = vpack.c.bf16 %v3289, %v3288
        %v3298 = vunpack.c.l.b16 %v3290
        %v3299 = vunpack.c.h.b16 %v3290
        %v3300 = vunpack.c.l.b16 %v3291
        %v3301 = vunpack.c.h.b16 %v3291
        %v3302 = vunpack.c.l.b16 %v3292
        %v3303 = vunpack.c.h.b16 %v3292
        %v3304 = vunpack.c.l.b16 %v3293
        %v3305 = vunpack.c.h.b16 %v3293
        %v3306 = vpack.c.b16 %v3298, %v3298
        %v3307 = vpack.c.b16 %v3299, %v3299
        %v3308 = vpack.c.b16 %v3300, %v3300
        %v3309 = vpack.c.b16 %v3301, %v3301
        %v3310 = vpack.c.b16 %v3302, %v3302
        %v3311 = vpack.c.b16 %v3303, %v3303
        %v3312 = vpack.c.b16 %v3304, %v3304
        %v3313 = vpack.c.b16 %v3305, %v3305
        %3314 = vrot.lane.b32.xlu0 %v3306, 96
        %v3315 = vpop.permute.xlu0 %3314
        %3316 = vrot.lane.b32.xlu0 %v3307, 96
        %v3317 = vpop.permute.xlu0 %3316
        %3318 = vrot.lane.b32.xlu0 %v3308, 96
        %v3319 = vpop.permute.xlu0 %3318
        %3320 = vrot.lane.b32.xlu0 %v3309, 96
        %v3321 = vpop.permute.xlu0 %3320
        %3322 = vrot.lane.b32.xlu0 %v3310, 96
        %v3323 = vpop.permute.xlu0 %3322
        %3324 = vrot.lane.b32.xlu0 %v3311, 96
        %v3325 = vpop.permute.xlu0 %3324
        %3326 = vrot.lane.b32.xlu0 %v3312, 96
        %v3327 = vpop.permute.xlu0 %3326
        %3328 = vrot.lane.b32.xlu0 %v3313, 96
        %v3329 = vpop.permute.xlu0 %3328
        %vm3338 = vcmask 814848
        %3339 = vst.msk [vmem:[#allocation3] sm:$0xf] %vm3338, %v3315
        %3340 = vst.msk [vmem:[#allocation3 + $0x4] sm:$0xf] %vm3338, %v3317
        %3341 = vst.msk [vmem:[#allocation3 + $0x8] sm:$0xf] %vm3338, %v3319
        %3342 = vst.msk [vmem:[#allocation3 + $0xc] sm:$0xf] %vm3338, %v3321
        %3343 = vst.msk [vmem:[#allocation3 + $0x10] sm:$0xf] %vm3338, %v3323
        %3344 = vst.msk [vmem:[#allocation3 + $0x14] sm:$0xf] %vm3338, %v3325
        %3345 = vst.msk [vmem:[#allocation3 + $0x18] sm:$0xf] %vm3338, %v3327
        %3346 = vst.msk [vmem:[#allocation3 + $0x1c] sm:$0xf] %vm3338, %v3329
        %v3347 = vld [vmem:[#allocation2 + $0x38] sm:$0xff]
        %v3348 = vld [vmem:[#allocation2 + $0x40] sm:$0xff]
        %v3349 = vld [vmem:[#allocation2 + $0x48] sm:$0xff]
        %v3350 = vld [vmem:[#allocation2 + $0x50] sm:$0xff]
        %v3351 = vld [vmem:[#allocation2 + $0x58] sm:$0xff]
        %v3352 = vld [vmem:[#allocation2 + $0x60] sm:$0xff]
        %v3353 = vld [vmem:[#allocation2 + $0x68] sm:$0xff]
        %v3354 = vld [vmem:[#allocation2 + $0x70] sm:$0xff]
        %v3355 = vpack.c.bf16 %v3348, %v3347
        %v3356 = vpack.c.bf16 %v3350, %v3349
        %v3357 = vpack.c.bf16 %v3352, %v3351
        %v3358 = vpack.c.bf16 %v3354, %v3353
        %v3363 = vunpack.c.l.b16 %v3355
        %v3364 = vunpack.c.h.b16 %v3355
        %v3365 = vunpack.c.l.b16 %v3356
        %v3366 = vunpack.c.h.b16 %v3356
        %v3367 = vunpack.c.l.b16 %v3357
        %v3368 = vunpack.c.h.b16 %v3357
        %v3369 = vunpack.c.l.b16 %v3358
        %v3370 = vunpack.c.h.b16 %v3358
        %v3371 = vpack.c.b16 %v3363, %v3363
        %v3372 = vpack.c.b16 %v3364, %v3364
        %v3373 = vpack.c.b16 %v3365, %v3365
        %v3374 = vpack.c.b16 %v3366, %v3366
        %v3375 = vpack.c.b16 %v3367, %v3367
        %v3376 = vpack.c.b16 %v3368, %v3368
        %v3377 = vpack.c.b16 %v3369, %v3369
        %v3378 = vpack.c.b16 %v3370, %v3370
        %3379 = vrot.lane.b32.xlu0 %v3371, 100
        %v3380 = vpop.permute.xlu0 %3379
        %3381 = vrot.lane.b32.xlu0 %v3372, 100
        %v3382 = vpop.permute.xlu0 %3381
        %3383 = vrot.lane.b32.xlu0 %v3373, 100
        %v3384 = vpop.permute.xlu0 %3383
        %3385 = vrot.lane.b32.xlu0 %v3374, 100
        %v3386 = vpop.permute.xlu0 %3385
        %3387 = vrot.lane.b32.xlu0 %v3375, 100
        %v3388 = vpop.permute.xlu0 %3387
        %3389 = vrot.lane.b32.xlu0 %v3376, 100
        %v3390 = vpop.permute.xlu0 %3389
        %3391 = vrot.lane.b32.xlu0 %v3377, 100
        %v3392 = vpop.permute.xlu0 %3391
        %3393 = vrot.lane.b32.xlu0 %v3378, 100
        %v3394 = vpop.permute.xlu0 %3393
        %vm3403 = vcmask 847648
        %3404 = vst.msk [vmem:[#allocation3] sm:$0xf] %vm3403, %v3380
        %3405 = vst.msk [vmem:[#allocation3 + $0x4] sm:$0xf] %vm3403, %v3382
        %3406 = vst.msk [vmem:[#allocation3 + $0x8] sm:$0xf] %vm3403, %v3384
        %3407 = vst.msk [vmem:[#allocation3 + $0xc] sm:$0xf] %vm3403, %v3386
        %3408 = vst.msk [vmem:[#allocation3 + $0x10] sm:$0xf] %vm3403, %v3388
        %3409 = vst.msk [vmem:[#allocation3 + $0x14] sm:$0xf] %vm3403, %v3390
        %3410 = vst.msk [vmem:[#allocation3 + $0x18] sm:$0xf] %vm3403, %v3392
        %3411 = vst.msk [vmem:[#allocation3 + $0x1c] sm:$0xf] %vm3403, %v3394
        %v3412 = vld [vmem:[#allocation2 + $0x3b] sm:$0xff]
        %v3413 = vld [vmem:[#allocation2 + $0x43] sm:$0xff]
        %v3414 = vld [vmem:[#allocation2 + $0x4b] sm:$0xff]
        %v3415 = vld [vmem:[#allocation2 + $0x53] sm:$0xff]
        %v3416 = vld [vmem:[#allocation2 + $0x5b] sm:$0xff]
        %v3417 = vld [vmem:[#allocation2 + $0x63] sm:$0xff]
        %v3418 = vld [vmem:[#allocation2 + $0x6b] sm:$0xff]
        %v3419 = vld [vmem:[#allocation2 + $0x73] sm:$0xff]
        %v3420 = vsel %vm2990, %v3412, 0.0
        %v3421 = vsel %vm2991, %v3413, 0.0
        %v3422 = vsel %vm2992, %v3414, 0.0
        %v3423 = vsel %vm2993, %v3415, 0.0
        %v3424 = vsel %vm2994, %v3416, 0.0
        %v3425 = vsel %vm2995, %v3417, 0.0
        %v3426 = vsel %vm2996, %v3418, 0.0
        %v3427 = vsel %vm2997, %v3419, 0.0
        %v3428 = vpack.c.bf16 %v3421, %v3420
        %v3429 = vpack.c.bf16 %v3423, %v3422
        %v3430 = vpack.c.bf16 %v3425, %v3424
        %v3431 = vpack.c.bf16 %v3427, %v3426
        %v3436 = vunpack.c.l.b16 %v3428
        %v3437 = vunpack.c.h.b16 %v3428
        %v3438 = vunpack.c.l.b16 %v3429
        %v3439 = vunpack.c.h.b16 %v3429
        %v3440 = vunpack.c.l.b16 %v3430
        %v3441 = vunpack.c.h.b16 %v3430
        %v3442 = vunpack.c.l.b16 %v3431
        %v3443 = vunpack.c.h.b16 %v3431
        %v3444 = vpack.c.b16 %v3436, %v3436
        %v3445 = vpack.c.b16 %v3437, %v3437
        %v3446 = vpack.c.b16 %v3438, %v3438
        %v3447 = vpack.c.b16 %v3439, %v3439
        %v3448 = vpack.c.b16 %v3440, %v3440
        %v3449 = vpack.c.b16 %v3441, %v3441
        %v3450 = vpack.c.b16 %v3442, %v3442
        %v3451 = vpack.c.b16 %v3443, %v3443
        %3452 = vrot.lane.b32.xlu0 %v3444, 104
        %v3453 = vpop.permute.xlu0 %3452
        %3454 = vrot.lane.b32.xlu0 %v3445, 104
        %v3455 = vpop.permute.xlu0 %3454
        %3456 = vrot.lane.b32.xlu0 %v3446, 104
        %v3457 = vpop.permute.xlu0 %3456
        %3458 = vrot.lane.b32.xlu0 %v3447, 104
        %v3459 = vpop.permute.xlu0 %3458
        %3460 = vrot.lane.b32.xlu0 %v3448, 104
        %v3461 = vpop.permute.xlu0 %3460
        %3462 = vrot.lane.b32.xlu0 %v3449, 104
        %v3463 = vpop.permute.xlu0 %3462
        %3464 = vrot.lane.b32.xlu0 %v3450, 104
        %v3465 = vpop.permute.xlu0 %3464
        %3466 = vrot.lane.b32.xlu0 %v3451, 104
        %v3467 = vpop.permute.xlu0 %3466
        %vm3476 = vcmask 880448
        %3477 = vst.msk [vmem:[#allocation3] sm:$0xf] %vm3476, %v3453
        %3478 = vst.msk [vmem:[#allocation3 + $0x4] sm:$0xf] %vm3476, %v3455
        %3479 = vst.msk [vmem:[#allocation3 + $0x8] sm:$0xf] %vm3476, %v3457
        %3480 = vst.msk [vmem:[#allocation3 + $0xc] sm:$0xf] %vm3476, %v3459
        %3481 = vst.msk [vmem:[#allocation3 + $0x10] sm:$0xf] %vm3476, %v3461
        %3482 = vst.msk [vmem:[#allocation3 + $0x14] sm:$0xf] %vm3476, %v3463
        %3483 = vst.msk [vmem:[#allocation3 + $0x18] sm:$0xf] %vm3476, %v3465
        %3484 = vst.msk [vmem:[#allocation3 + $0x1c] sm:$0xf] %vm3476, %v3467
        %v3485 = vld [vmem:[#allocation3] sm:$0xf]
        %v3486 = vld [vmem:[#allocation3 + $0x4] sm:$0xf]
        %v3487 = vld [vmem:[#allocation3 + $0x8] sm:$0xf]
        %v3488 = vld [vmem:[#allocation3 + $0xc] sm:$0xf]
        %v3489 = vld [vmem:[#allocation3 + $0x10] sm:$0xf]
        %v3490 = vld [vmem:[#allocation3 + $0x14] sm:$0xf]
        %v3491 = vld [vmem:[#allocation3 + $0x18] sm:$0xf]
        %v3492 = vld [vmem:[#allocation3 + $0x1c] sm:$0xf]
        %v3493 = vld [vmem:[%s8] sm:$0xf]
        %v3494 = vld [vmem:[%s8 + $0x4] sm:$0xf]
        %v3495 = vld [vmem:[%s8 + $0x8] sm:$0xf]
        %v3496 = vld [vmem:[%s8 + $0xc] sm:$0xf]
        %v3497 = vld [vmem:[%s8 + $0x10] sm:$0xf]
        %v3498 = vld [vmem:[%s8 + $0x14] sm:$0xf]
        %v3499 = vld [vmem:[%s8 + $0x18] sm:$0xf]
        %v3500 = vld [vmem:[%s8 + $0x1c] sm:$0xf]
        %v3501 = vld [vmem:[%s8 + $0x20] sm:$0xf]
        %v3502 = vld [vmem:[%s8 + $0x24] sm:$0xf]
        %v3503 = vld [vmem:[%s8 + $0x28] sm:$0xf]
        %v3504 = vld [vmem:[%s8 + $0x2c] sm:$0xf]
        %v3505 = vld [vmem:[%s8 + $0x30] sm:$0xf]
        %v3506 = vld [vmem:[%s8 + $0x34] sm:$0x3]
        %v3507 = vld [vmem:[%s9] sm:$0x1]
        %v3509 = vlaneseq
        %v3510 = vshrl.u32 %v3509, 7
        %v3511 = vsub.s32 0, %v3510
        %v3512 = vrot.slane %v3507, %v3511
        %v3522 = vunpack.c.l.b16 %v3485
        %v3523 = vunpack.c.l.b16 %v3486
        %v3524 = vunpack.c.l.b16 %v3487
        %v3525 = vunpack.c.l.b16 %v3488
        %v3526 = vunpack.c.l.b16 %v3489
        %v3527 = vunpack.c.l.b16 %v3490
        %v3528 = vunpack.c.l.b16 %v3491
        %v3529 = vunpack.c.l.b16 %v3492
        %v3530 = vpack.c.b16 %v3523, %v3522
        %v3531 = vpack.c.b16 %v3525, %v3524
        %v3532 = vpack.c.b16 %v3527, %v3526
        %v3533 = vpack.c.b16 %v3529, %v3528
        %v3548 = vunpack.c.l.b16 %v3493
        %v3549 = vunpack.c.l.b16 %v3494
        %v3550 = vunpack.c.l.b16 %v3495
        %v3551 = vunpack.c.l.b16 %v3496
        %v3552 = vunpack.c.l.b16 %v3497
        %v3553 = vunpack.c.l.b16 %v3498
        %v3554 = vunpack.c.l.b16 %v3499
        %v3555 = vunpack.c.l.b16 %v3500
        %v3556 = vunpack.c.l.b16 %v3501
        %v3557 = vunpack.c.l.b16 %v3502
        %v3558 = vunpack.c.l.b16 %v3503
        %v3559 = vunpack.c.l.b16 %v3504
        %v3560 = vunpack.c.l.b16 %v3505
        %v3561 = vunpack.c.l.b16 %v3506
        %v3562 = vpack.c.b16 %v3549, %v3548
        %v3563 = vpack.c.b16 %v3551, %v3550
        %v3564 = vpack.c.b16 %v3553, %v3552
        %v3565 = vpack.c.b16 %v3555, %v3554
        %v3566 = vpack.c.b16 %v3557, %v3556
        %v3567 = vpack.c.b16 %v3559, %v3558
        %v3568 = vpack.c.b16 %v3561, %v3560
        %vm3575 = vcmask 883712
        %v3577 = vsel %vm3575, %v3530, 0
        %v3580 = vsel %vm3575, %v3531, 0
        %v3583 = vsel %vm3575, %v3532, 0
        %v3586 = vsel %vm3575, %v3533, 0
        %vm3588 = vcmask 1045504
        %v3590 = vsel %vm3588, %v3568, 0
        %3592 = vmatprep.subr.bf16.mxu0 0
        %3593 = vmatpush1.bf16.msra.mxu0 0
        %3594 = vmatprep.subr.bf16.mxu0 0
        %3595 = vmatpush1.bf16.msra.mxu0 %v3590
        %3596 = vmatprep.subr.bf16.mxu0 0
        %3597 = vmatpush1.bf16.msra.mxu0 %v3567
        %3598 = vmatprep.subr.bf16.mxu0 0
        %3599 = vmatpush1.bf16.msra.mxu0 %v3566
        %3600 = vmatprep.subr.bf16.mxu0 0
        %3601 = vmatpush1.bf16.msra.mxu0 %v3565
        %3602 = vmatprep.subr.bf16.mxu0 0
        %3603 = vmatpush1.bf16.msra.mxu0 %v3564
        %3604 = vmatprep.subr.bf16.mxu0 0
        %3605 = vmatpush1.bf16.msra.mxu0 %v3563
        %3606 = vmatprep.subr.bf16.mxu0 0
        %3607 = vmatpush1.bf16.msra.mxu0 %v3562
        %3608 = vmatprep.subr.bf16.mxu0 0
        %3609 = vmatpush2.bf16.msra.mxu0 0
        %3610 = vmatprep.subr.bf16.mxu0 0
        %3611 = vmatpush2.bf16.msra.mxu0 0
        %3612 = vmatprep.subr.bf16.mxu0 0
        %3613 = vmatpush2.bf16.msra.mxu0 0
        %3614 = vmatprep.subr.bf16.mxu0 0
        %3615 = vmatpush2.bf16.msra.mxu0 0
        %3616 = vmatprep.subr.bf16.mxu0 0
        %3617 = vmatpush2.bf16.msra.mxu0 0
        %3618 = vmatprep.subr.bf16.mxu0 0
        %3619 = vmatpush2.bf16.msra.mxu0 0
        %3620 = vmatprep.subr.bf16.mxu0 0
        %3621 = vmatpush2.bf16.msra.mxu0 0
        %3622 = vmatprep.subr.bf16.mxu0 0
        %3623 = vmatpush2.bf16.msra.mxu0 0
        %3624 = vmatprep.mubr.bf16.mxu0 0
        %3625 = vmatmul.mubr.bf16.gmra.mxu0 %v3577
        %v3626 = vpop.f32.mrf.mxu0
        %v3627 = vadd.f32 %v3512, %v3626
        %v3628 = vpop.f32.mrf.mxu0
        %v3629 = vpop.f32.mrf.mxu0
        %v3630 = vadd.f32 %v3512, %v3629
        %v3631 = vpop.f32.mrf.mxu0
        %3632 = vmatprep.mubr.bf16.mxu0 0
        %3633 = vmatmul.mubr.bf16.gmra.mxu0 %v3580
        %v3634 = vpop.f32.mrf.mxu0
        %v3635 = vadd.f32 %v3512, %v3634
        %v3636 = vpop.f32.mrf.mxu0
        %v3637 = vpop.f32.mrf.mxu0
        %v3638 = vadd.f32 %v3512, %v3637
        %v3639 = vpop.f32.mrf.mxu0
        %3640 = vmatprep.mubr.bf16.mxu0 0
        %3641 = vmatmul.mubr.bf16.gmra.mxu0 %v3583
        %v3642 = vpop.f32.mrf.mxu0
        %v3643 = vadd.f32 %v3512, %v3642
        %v3644 = vpop.f32.mrf.mxu0
        %v3645 = vpop.f32.mrf.mxu0
        %v3646 = vadd.f32 %v3512, %v3645
        %v3647 = vpop.f32.mrf.mxu0
        %3648 = vmatprep.mubr.bf16.mxu0 0
        %3649 = vmatmul.mubr.bf16.gmra.mxu0 %v3586
        %v3650 = vpop.f32.mrf.mxu0
        %v3651 = vadd.f32 %v3512, %v3650
        %v3652 = vpop.f32.mrf.mxu0
        %v3653 = vpop.f32.mrf.mxu0
        %v3654 = vadd.f32 %v3512, %v3653
        %v3655 = vpop.f32.mrf.mxu0
        %3656 = vdwg.mxu0
        %v3657 = vld [vmem:[%s10] sm:$0x1]
        %v3659 = vlaneseq
        %v3660 = vshrl.u32 %v3659, 7
        %v3661 = vsub.s32 0, %v3660
        %v3662 = vrot.slane %v3657, %v3661
        %v3664 = vmul.f32 %v3627, %v3662
        %v3665 = vmul.f32 %v3630, %v3662
        %v3666 = vmul.f32 %v3635, %v3662
        %v3667 = vmul.f32 %v3638, %v3662
        %v3668 = vmul.f32 %v3643, %v3662
        %v3669 = vmul.f32 %v3646, %v3662
        %v3670 = vmul.f32 %v3651, %v3662
        %v3671 = vmul.f32 %v3654, %v3662
        %v3672 = vsel %vm1145, %v3664, 0.0
        %3673 = vadd.xlane.f32.xlu0 %v3672
        %v3674 = vpop.xlane.xlu0 %3673
        %v3675 = vsel %vm1145, %v3665, 0.0
        %3676 = vadd.xlane.f32.xlu0 %v3675
        %v3677 = vpop.xlane.xlu0 %3676
        %v3678 = vsel %vm1145, %v3666, 0.0
        %3679 = vadd.xlane.f32.xlu0 %v3678
        %v3680 = vpop.xlane.xlu0 %3679
        %v3681 = vsel %vm1145, %v3667, 0.0
        %3682 = vadd.xlane.f32.xlu0 %v3681
        %v3683 = vpop.xlane.xlu0 %3682
        %v3684 = vsel %vm1145, %v3668, 0.0
        %3685 = vadd.xlane.f32.xlu0 %v3684
        %v3686 = vpop.xlane.xlu0 %3685
        %v3687 = vsel %vm1145, %v3669, 0.0
        %3688 = vadd.xlane.f32.xlu0 %v3687
        %v3689 = vpop.xlane.xlu0 %3688
        %v3690 = vsel %vm1145, %v3670, 0.0
        %3691 = vadd.xlane.f32.xlu0 %v3690
        %v3692 = vpop.xlane.xlu0 %3691
        %v3693 = vsel %vm1145, %v3671, 0.0
        %3694 = vadd.xlane.f32.xlu0 %v3693
        %v3695 = vpop.xlane.xlu0 %3694
        %s3696 = sld [smem:[#allocation4 + $0x3]]
        %v3697 = vstv %s3696
        %v3698 = vadd.f32 %v3674, %v3697
        %v3699 = vadd.f32 %v3677, %v3697
        %v3700 = vadd.f32 %v3680, %v3697
        %v3701 = vadd.f32 %v3683, %v3697
        %v3702 = vadd.f32 %v3686, %v3697
        %v3703 = vadd.f32 %v3689, %v3697
        %v3704 = vadd.f32 %v3692, %v3697
        %v3705 = vadd.f32 %v3695, %v3697
        %v3706 = vxor.u32 %v3698, 2147483648
        %v3707 = vxor.u32 %v3699, 2147483648
        %v3708 = vxor.u32 %v3700, 2147483648
        %v3709 = vxor.u32 %v3701, 2147483648
        %v3710 = vxor.u32 %v3702, 2147483648
        %v3711 = vxor.u32 %v3703, 2147483648
        %v3712 = vxor.u32 %v3704, 2147483648
        %v3713 = vxor.u32 %v3705, 2147483648
        %v3714 = vmul.f32 %v3706, 1.442695
        %v3715 = vpow.pop %v3714
        %v3716 = vmul.f32 %v3707, 1.442695
        %v3717 = vpow.pop %v3716
        %v3718 = vmul.f32 %v3708, 1.442695
        %v3719 = vpow.pop %v3718
        %v3720 = vmul.f32 %v3709, 1.442695
        %v3721 = vpow.pop %v3720
        %v3722 = vmul.f32 %v3710, 1.442695
        %v3723 = vpow.pop %v3722
        %v3724 = vmul.f32 %v3711, 1.442695
        %v3725 = vpow.pop %v3724
        %v3726 = vmul.f32 %v3712, 1.442695
        %v3727 = vpow.pop %v3726
        %v3728 = vmul.f32 %v3713, 1.442695
        %v3729 = vpow.pop %v3728
        %v3730 = vadd.f32 %v3715, 1.0
        %v3731 = vadd.f32 %v3717, 1.0
        %v3732 = vadd.f32 %v3719, 1.0
        %v3733 = vadd.f32 %v3721, 1.0
        %v3734 = vadd.f32 %v3723, 1.0
        %v3735 = vadd.f32 %v3725, 1.0
        %v3736 = vadd.f32 %v3727, 1.0
        %v3737 = vadd.f32 %v3729, 1.0
        %v3738 = vrcp.pop %v3730
        %v3739 = vmul.f32 1.0, %v3738
        %v3740 = vrcp.pop %v3731
        %v3741 = vmul.f32 1.0, %v3740
        %v3742 = vrcp.pop %v3732
        %v3743 = vmul.f32 1.0, %v3742
        %v3744 = vrcp.pop %v3733
        %v3745 = vmul.f32 1.0, %v3744
        %v3746 = vrcp.pop %v3734
        %v3747 = vmul.f32 1.0, %v3746
        %v3748 = vrcp.pop %v3735
        %v3749 = vmul.f32 1.0, %v3748
        %v3750 = vrcp.pop %v3736
        %v3751 = vmul.f32 1.0, %v3750
        %v3752 = vrcp.pop %v3737
        %v3753 = vmul.f32 1.0, %v3752
        %v3754 = vld [vmem:[%s611] sm:$0xf]
        %v3755 = vld [vmem:[%s611 + $0x4] sm:$0xf]
        %v3756 = vld [vmem:[%s611 + $0x8] sm:$0xf]
        %v3757 = vld [vmem:[%s611 + $0xc] sm:$0xf]
        %v3758 = vld [vmem:[%s611 + $0x10] sm:$0xf]
        %v3759 = vld [vmem:[%s611 + $0x14] sm:$0xf]
        %v3760 = vld [vmem:[%s611 + $0x18] sm:$0xf]
        %v3761 = vld [vmem:[%s611 + $0x1c] sm:$0xf]
        %v3762 = vunpack.c.l.bf16 %v3754
        %v3763 = vunpack.c.l.bf16 %v3755
        %v3764 = vunpack.c.l.bf16 %v3756
        %v3765 = vunpack.c.l.bf16 %v3757
        %v3766 = vunpack.c.l.bf16 %v3758
        %v3767 = vunpack.c.l.bf16 %v3759
        %v3768 = vunpack.c.l.bf16 %v3760
        %v3769 = vunpack.c.l.bf16 %v3761
        %s3770 = sld [smem:[#allocation4 + $0x4]]
        %v3771 = vadd.f32 %v739, 1.0
        %v3772 = vstv %s3770
        %v3773 = vmul.f32 %v3772, %v3771
        %v3774 = vadd.f32 %v3739, 1.0
        %v3775 = vadd.f32 %v3741, 1.0
        %v3776 = vadd.f32 %v3743, 1.0
        %v3777 = vadd.f32 %v3745, 1.0
        %v3778 = vadd.f32 %v3747, 1.0
        %v3779 = vadd.f32 %v3749, 1.0
        %v3780 = vadd.f32 %v3751, 1.0
        %v3781 = vadd.f32 %v3753, 1.0
        %v3782 = vlaneseq
        %v3783 = vshrl.u32 %v3782, 7
        %v3784 = vsub.s32 0, %v3783
        %v3785 = vrot.slane %v3773, %v3784
        %v3786 = vmul.f32 %v3785, %v3774
        %v3787 = vmul.f32 %v3785, %v3775
        %v3788 = vmul.f32 %v3785, %v3776
        %v3789 = vmul.f32 %v3785, %v3777
        %v3790 = vmul.f32 %v3785, %v3778
        %v3791 = vmul.f32 %v3785, %v3779
        %v3792 = vmul.f32 %v3785, %v3780
        %v3793 = vmul.f32 %v3785, %v3781
        %s3794 = sld [smem:[#allocation4 + $0x5]]
        %v3795 = vstv %s3794
        %v3796 = vadd.f32 %v3786, %v3795
        %v3797 = vadd.f32 %v3787, %v3795
        %v3798 = vadd.f32 %v3788, %v3795
        %v3799 = vadd.f32 %v3789, %v3795
        %v3800 = vadd.f32 %v3790, %v3795
        %v3801 = vadd.f32 %v3791, %v3795
        %v3802 = vadd.f32 %v3792, %v3795
        %v3803 = vadd.f32 %v3793, %v3795
        %v3804 = vmul.f32 %v3762, %v3796
        %v3805 = vmul.f32 %v3763, %v3797
        %v3806 = vmul.f32 %v3764, %v3798
        %v3807 = vmul.f32 %v3765, %v3799
        %v3808 = vmul.f32 %v3766, %v3800
        %v3809 = vmul.f32 %v3767, %v3801
        %v3810 = vmul.f32 %v3768, %v3802
        %v3811 = vmul.f32 %v3769, %v3803
        %3812 = vst.msk [vmem:[%s616] sm:$0xff] %vm634, %v3804
        %3813 = vst.msk [vmem:[%s616 + $0x8] sm:$0xff] %vm634, %v3805
        %3814 = vst.msk [vmem:[%s616 + $0x10] sm:$0xff] %vm634, %v3806
        %3815 = vst.msk [vmem:[%s616 + $0x18] sm:$0xff] %vm634, %v3807
        %3816 = vst.msk [vmem:[%s616 + $0x20] sm:$0xff] %vm634, %v3808
        %3817 = vst.msk [vmem:[%s616 + $0x28] sm:$0xff] %vm634, %v3809
        %3818 = vst.msk [vmem:[%s616 + $0x30] sm:$0xff] %vm634, %v3810
        %3819 = vst.msk [vmem:[%s616 + $0x38] sm:$0xff] %vm634, %v3811
        %v3820 = vld [vmem:[%s13] sm:$0xf]
        %v3821 = vld [vmem:[%s15] sm:$0xf]
        %v3822 = vld [vmem:[%s14] sm:$0x1]
        %v3823 = vld [vmem:[%s16] sm:$0x1]
        %v3824 = vld [vmem:[%s611] sm:$0xf]
        %v3825 = vld [vmem:[%s611 + $0x4] sm:$0xf]
        %v3826 = vld [vmem:[%s611 + $0x8] sm:$0xf]
        %v3827 = vld [vmem:[%s611 + $0xc] sm:$0xf]
        %v3828 = vld [vmem:[%s611 + $0x10] sm:$0xf]
        %v3829 = vld [vmem:[%s611 + $0x14] sm:$0xf]
        %v3830 = vld [vmem:[%s611 + $0x18] sm:$0xf]
        %v3831 = vld [vmem:[%s611 + $0x1c] sm:$0xf]
        %v3832 = vld [vmem:[%s11] sm:$0xf]
        %v3833 = vld [vmem:[%s12] sm:$0x1]
        %v3835 = vlaneseq
        %v3836 = vshrl.u32 %v3835, 7
        %v3837 = vsub.s32 0, %v3836
        %v3838 = vrot.slane %v3833, %v3837
        %v3848 = vunpack.c.l.b16 %v3824
        %v3849 = vunpack.c.l.b16 %v3825
        %v3850 = vunpack.c.l.b16 %v3826
        %v3851 = vunpack.c.l.b16 %v3827
        %v3852 = vunpack.c.l.b16 %v3828
        %v3853 = vunpack.c.l.b16 %v3829
        %v3854 = vunpack.c.l.b16 %v3830
        %v3855 = vunpack.c.l.b16 %v3831
        %v3856 = vpack.c.b16 %v3849, %v3848
        %v3857 = vpack.c.b16 %v3851, %v3850
        %v3858 = vpack.c.b16 %v3853, %v3852
        %v3859 = vpack.c.b16 %v3855, %v3854
        %v3861 = vsel %vm634, %v3856, 0
        %v3864 = vsel %vm634, %v3857, 0
        %v3867 = vsel %vm634, %v3858, 0
        %v3870 = vsel %vm634, %v3859, 0
        %v3873 = vsel %vm1076, %v3832, 0
        %3875 = vmatprep.subr.bf16.mxu0 0
        %3876 = vmatpush1.bf16.msra.mxu0 0
        %3877 = vmatprep.subr.bf16.mxu0 0
        %3878 = vmatpush1.bf16.msra.mxu0 0
        %3879 = vmatprep.subr.bf16.mxu0 0
        %3880 = vmatpush1.bf16.msra.mxu0 0
        %3881 = vmatprep.subr.bf16.mxu0 0
        %3882 = vmatpush1.bf16.msra.mxu0 0
        %3883 = vmatprep.subr.bf16.mxu0 0
        %3884 = vmatpush1.bf16.msra.mxu0 0
        %3885 = vmatprep.subr.bf16.mxu0 0
        %3886 = vmatpush1.bf16.msra.mxu0 0
        %3887 = vmatprep.subr.bf16.mxu0 0
        %3888 = vmatpush1.bf16.msra.mxu0 0
        %3889 = vmatprep.subr.bf16.mxu0 0
        %3890 = vmatpush1.bf16.msra.mxu0 %v3873
        %3891 = vmatprep.subr.bf16.mxu0 0
        %3892 = vmatpush2.bf16.msra.mxu0 0
        %3893 = vmatprep.subr.bf16.mxu0 0
        %3894 = vmatpush2.bf16.msra.mxu0 0
        %3895 = vmatprep.subr.bf16.mxu0 0
        %3896 = vmatpush2.bf16.msra.mxu0 0
        %3897 = vmatprep.subr.bf16.mxu0 0
        %3898 = vmatpush2.bf16.msra.mxu0 0
        %3899 = vmatprep.subr.bf16.mxu0 0
        %3900 = vmatpush2.bf16.msra.mxu0 0
        %3901 = vmatprep.subr.bf16.mxu0 0
        %3902 = vmatpush2.bf16.msra.mxu0 0
        %3903 = vmatprep.subr.bf16.mxu0 0
        %3904 = vmatpush2.bf16.msra.mxu0 0
        %3905 = vmatprep.subr.bf16.mxu0 0
        %3906 = vmatpush2.bf16.msra.mxu0 0
        %3907 = vmatprep.mubr.bf16.mxu0 0
        %3908 = vmatmul.mubr.bf16.gmra.mxu0 %v3861
        %v3909 = vpop.f32.mrf.mxu0
        %v3910 = vadd.f32 %v3838, %v3909
        %v3911 = vpop.f32.mrf.mxu0
        %v3912 = vpop.f32.mrf.mxu0
        %v3913 = vadd.f32 %v3838, %v3912
        %v3914 = vpop.f32.mrf.mxu0
        %3915 = vmatprep.mubr.bf16.mxu0 0
        %3916 = vmatmul.mubr.bf16.gmra.mxu0 %v3864
        %v3917 = vpop.f32.mrf.mxu0
        %v3918 = vadd.f32 %v3838, %v3917
        %v3919 = vpop.f32.mrf.mxu0
        %v3920 = vpop.f32.mrf.mxu0
        %v3921 = vadd.f32 %v3838, %v3920
        %v3922 = vpop.f32.mrf.mxu0
        %3923 = vmatprep.mubr.bf16.mxu0 0
        %3924 = vmatmul.mubr.bf16.gmra.mxu0 %v3867
        %v3925 = vpop.f32.mrf.mxu0
        %v3926 = vadd.f32 %v3838, %v3925
        %v3927 = vpop.f32.mrf.mxu0
        %v3928 = vpop.f32.mrf.mxu0
        %v3929 = vadd.f32 %v3838, %v3928
        %v3930 = vpop.f32.mrf.mxu0
        %3931 = vmatprep.mubr.bf16.mxu0 0
        %3932 = vmatmul.mubr.bf16.gmra.mxu0 %v3870
        %v3933 = vpop.f32.mrf.mxu0
        %v3934 = vadd.f32 %v3838, %v3933
        %v3935 = vpop.f32.mrf.mxu0
        %v3936 = vpop.f32.mrf.mxu0
        %v3937 = vadd.f32 %v3838, %v3936
        %v3938 = vpop.f32.mrf.mxu0
        %3939 = vdwg.mxu0
        %v3940 = vpack.c.bf16 %v3913, %v3910
        %v3941 = vpack.c.bf16 %v3921, %v3918
        %v3942 = vpack.c.bf16 %v3929, %v3926
        %v3943 = vpack.c.bf16 %v3937, %v3934
        %v3945 = vlaneseq
        %v3946 = vshrl.u32 %v3945, 7
        %v3947 = vsub.s32 0, %v3946
        %v3948 = vrot.slane %v3822, %v3947
        %v3951 = vsel %vm1076, %v3820, 0
        %3953 = vmatprep.subr.bf16.mxu0 0
        %3954 = vmatpush1.bf16.msra.mxu0 0
        %3955 = vmatprep.subr.bf16.mxu0 0
        %3956 = vmatpush1.bf16.msra.mxu0 0
        %3957 = vmatprep.subr.bf16.mxu0 0
        %3958 = vmatpush1.bf16.msra.mxu0 0
        %3959 = vmatprep.subr.bf16.mxu0 0
        %3960 = vmatpush1.bf16.msra.mxu0 0
        %3961 = vmatprep.subr.bf16.mxu0 0
        %3962 = vmatpush1.bf16.msra.mxu0 0
        %3963 = vmatprep.subr.bf16.mxu0 0
        %3964 = vmatpush1.bf16.msra.mxu0 0
        %3965 = vmatprep.subr.bf16.mxu0 0
        %3966 = vmatpush1.bf16.msra.mxu0 0
        %3967 = vmatprep.subr.bf16.mxu0 0
        %3968 = vmatpush1.bf16.msra.mxu0 %v3951
        %3969 = vmatprep.subr.bf16.mxu0 0
        %3970 = vmatpush2.bf16.msra.mxu0 0
        %3971 = vmatprep.subr.bf16.mxu0 0
        %3972 = vmatpush2.bf16.msra.mxu0 0
        %3973 = vmatprep.subr.bf16.mxu0 0
        %3974 = vmatpush2.bf16.msra.mxu0 0
        %3975 = vmatprep.subr.bf16.mxu0 0
        %3976 = vmatpush2.bf16.msra.mxu0 0
        %3977 = vmatprep.subr.bf16.mxu0 0
        %3978 = vmatpush2.bf16.msra.mxu0 0
        %3979 = vmatprep.subr.bf16.mxu0 0
        %3980 = vmatpush2.bf16.msra.mxu0 0
        %3981 = vmatprep.subr.bf16.mxu0 0
        %3982 = vmatpush2.bf16.msra.mxu0 0
        %3983 = vmatprep.subr.bf16.mxu0 0
        %3984 = vmatpush2.bf16.msra.mxu0 0
        %3985 = vmatprep.mubr.bf16.mxu0 0
        %3986 = vmatmul.mubr.bf16.gmra.mxu0 %v3861
        %v3987 = vpop.f32.mrf.mxu0
        %v3988 = vadd.f32 %v3948, %v3987
        %v3989 = vpop.f32.mrf.mxu0
        %v3990 = vpop.f32.mrf.mxu0
        %v3991 = vadd.f32 %v3948, %v3990
        %v3992 = vpop.f32.mrf.mxu0
        %3993 = vmatprep.mubr.bf16.mxu0 0
        %3994 = vmatmul.mubr.bf16.gmra.mxu0 %v3864
        %v3995 = vpop.f32.mrf.mxu0
        %v3996 = vadd.f32 %v3948, %v3995
        %v3997 = vpop.f32.mrf.mxu0
        %v3998 = vpop.f32.mrf.mxu0
        %v3999 = vadd.f32 %v3948, %v3998
        %v4000 = vpop.f32.mrf.mxu0
        %4001 = vmatprep.mubr.bf16.mxu0 0
        %4002 = vmatmul.mubr.bf16.gmra.mxu0 %v3867
        %v4003 = vpop.f32.mrf.mxu0
        %v4004 = vadd.f32 %v3948, %v4003
        %v4005 = vpop.f32.mrf.mxu0
        %v4006 = vpop.f32.mrf.mxu0
        %v4007 = vadd.f32 %v3948, %v4006
        %v4008 = vpop.f32.mrf.mxu0
        %4009 = vmatprep.mubr.bf16.mxu0 0
        %4010 = vmatmul.mubr.bf16.gmra.mxu0 %v3870
        %v4011 = vpop.f32.mrf.mxu0
        %v4012 = vadd.f32 %v3948, %v4011
        %v4013 = vpop.f32.mrf.mxu0
        %v4014 = vpop.f32.mrf.mxu0
        %v4015 = vadd.f32 %v3948, %v4014
        %v4016 = vpop.f32.mrf.mxu0
        %4017 = vdwg.mxu0
        %v4018 = vpack.c.bf16 %v3991, %v3988
        %v4019 = vpack.c.bf16 %v3999, %v3996
        %v4020 = vpack.c.bf16 %v4007, %v4004
        %v4021 = vpack.c.bf16 %v4015, %v4012
        %v4023 = vlaneseq
        %v4024 = vshrl.u32 %v4023, 7
        %v4025 = vsub.s32 0, %v4024
        %v4026 = vrot.slane %v3823, %v4025
        %v4029 = vsel %vm1076, %v3821, 0
        %4031 = vmatprep.subr.bf16.mxu0 0
        %4032 = vmatpush1.bf16.msra.mxu0 0
        %4033 = vmatprep.subr.bf16.mxu0 0
        %4034 = vmatpush1.bf16.msra.mxu0 0
        %4035 = vmatprep.subr.bf16.mxu0 0
        %4036 = vmatpush1.bf16.msra.mxu0 0
        %4037 = vmatprep.subr.bf16.mxu0 0
        %4038 = vmatpush1.bf16.msra.mxu0 0
        %4039 = vmatprep.subr.bf16.mxu0 0
        %4040 = vmatpush1.bf16.msra.mxu0 0
        %4041 = vmatprep.subr.bf16.mxu0 0
        %4042 = vmatpush1.bf16.msra.mxu0 0
        %4043 = vmatprep.subr.bf16.mxu0 0
        %4044 = vmatpush1.bf16.msra.mxu0 0
        %4045 = vmatprep.subr.bf16.mxu0 0
        %4046 = vmatpush1.bf16.msra.mxu0 %v4029
        %4047 = vmatprep.subr.bf16.mxu0 0
        %4048 = vmatpush2.bf16.msra.mxu0 0
        %4049 = vmatprep.subr.bf16.mxu0 0
        %4050 = vmatpush2.bf16.msra.mxu0 0
        %4051 = vmatprep.subr.bf16.mxu0 0
        %4052 = vmatpush2.bf16.msra.mxu0 0
        %4053 = vmatprep.subr.bf16.mxu0 0
        %4054 = vmatpush2.bf16.msra.mxu0 0
        %4055 = vmatprep.subr.bf16.mxu0 0
        %4056 = vmatpush2.bf16.msra.mxu0 0
        %4057 = vmatprep.subr.bf16.mxu0 0
        %4058 = vmatpush2.bf16.msra.mxu0 0
        %4059 = vmatprep.subr.bf16.mxu0 0
        %4060 = vmatpush2.bf16.msra.mxu0 0
        %4061 = vmatprep.subr.bf16.mxu0 0
        %4062 = vmatpush2.bf16.msra.mxu0 0
        %4063 = vmatprep.mubr.bf16.mxu0 0
        %4064 = vmatmul.mubr.bf16.gmra.mxu0 %v3861
        %v4065 = vpop.f32.mrf.mxu0
        %v4066 = vadd.f32 %v4026, %v4065
        %v4067 = vpop.f32.mrf.mxu0
        %v4068 = vpop.f32.mrf.mxu0
        %v4069 = vadd.f32 %v4026, %v4068
        %v4070 = vpop.f32.mrf.mxu0
        %4071 = vmatprep.mubr.bf16.mxu0 0
        %4072 = vmatmul.mubr.bf16.gmra.mxu0 %v3864
        %v4073 = vpop.f32.mrf.mxu0
        %v4074 = vadd.f32 %v4026, %v4073
        %v4075 = vpop.f32.mrf.mxu0
        %v4076 = vpop.f32.mrf.mxu0
        %v4077 = vadd.f32 %v4026, %v4076
        %v4078 = vpop.f32.mrf.mxu0
        %4079 = vmatprep.mubr.bf16.mxu0 0
        %4080 = vmatmul.mubr.bf16.gmra.mxu0 %v3867
        %v4081 = vpop.f32.mrf.mxu0
        %v4082 = vadd.f32 %v4026, %v4081
        %v4083 = vpop.f32.mrf.mxu0
        %v4084 = vpop.f32.mrf.mxu0
        %v4085 = vadd.f32 %v4026, %v4084
        %v4086 = vpop.f32.mrf.mxu0
        %4087 = vmatprep.mubr.bf16.mxu0 0
        %4088 = vmatmul.mubr.bf16.gmra.mxu0 %v3870
        %v4089 = vpop.f32.mrf.mxu0
        %v4090 = vadd.f32 %v4026, %v4089
        %v4091 = vpop.f32.mrf.mxu0
        %v4092 = vpop.f32.mrf.mxu0
        %v4093 = vadd.f32 %v4026, %v4092
        %v4094 = vpop.f32.mrf.mxu0
        %4095 = vdwg.mxu0
        %v4096 = vpack.c.bf16 %v4069, %v4066
        %v4097 = vpack.c.bf16 %v4077, %v4074
        %v4098 = vpack.c.bf16 %v4085, %v4082
        %v4099 = vpack.c.bf16 %v4093, %v4090
        %v4101 = vsel %vm1145, %v3940, 0
        %v4104 = vsel %vm1145, %v3941, 0
        %v4107 = vsel %vm1145, %v3942, 0
        %v4110 = vsel %vm1145, %v3943, 0
        %v4113 = vsel %vm1145, %v4018, 0
        %v4116 = vsel %vm1145, %v4019, 0
        %v4119 = vsel %vm1145, %v4020, 0
        %v4122 = vsel %vm1145, %v4021, 0
        %4124 = vmatprep.subr.bf16.mxu0 0
        %4125 = vmatpush1.bf16.xpose.msra.mxu0 0
        %4126 = vmatprep.subr.bf16.mxu0 0
        %4127 = vmatpush1.bf16.xpose.msra.mxu0 0
        %4128 = vmatprep.subr.bf16.mxu0 0
        %4129 = vmatpush1.bf16.xpose.msra.mxu0 0
        %4130 = vmatprep.subr.bf16.mxu0 0
        %4131 = vmatpush1.bf16.xpose.msra.mxu0 0
        %4132 = vmatprep.subr.bf16.mxu0 0
        %4133 = vmatpush1.bf16.xpose.msra.mxu0 %v4122
        %4134 = vmatprep.subr.bf16.mxu0 0
        %4135 = vmatpush1.bf16.xpose.msra.mxu0 %v4119
        %4136 = vmatprep.subr.bf16.mxu0 0
        %4137 = vmatpush1.bf16.xpose.msra.mxu0 %v4116
        %4138 = vmatprep.subr.bf16.mxu0 0
        %4139 = vmatpush1.bf16.xpose.msra.mxu0 %v4113
        %4140 = vmatprep.subr.bf16.mxu0 0
        %4141 = vmatpush2.bf16.xpose.msra.mxu0 0
        %4142 = vmatprep.subr.bf16.mxu0 0
        %4143 = vmatpush2.bf16.xpose.msra.mxu0 0
        %4144 = vmatprep.subr.bf16.mxu0 0
        %4145 = vmatpush2.bf16.xpose.msra.mxu0 0
        %4146 = vmatprep.subr.bf16.mxu0 0
        %4147 = vmatpush2.bf16.xpose.msra.mxu0 0
        %4148 = vmatprep.subr.bf16.mxu0 0
        %4149 = vmatpush2.bf16.xpose.msra.mxu0 0
        %4150 = vmatprep.subr.bf16.mxu0 0
        %4151 = vmatpush2.bf16.xpose.msra.mxu0 0
        %4152 = vmatprep.subr.bf16.mxu0 0
        %4153 = vmatpush2.bf16.xpose.msra.mxu0 0
        %4154 = vmatprep.subr.bf16.mxu0 0
        %4155 = vmatpush2.bf16.xpose.msra.mxu0 0
        %4156 = vmatprep.mubr.bf16.mxu0 0
        %4157 = vmatmul.mubr.bf16.gmra.mxu0 %v4101
        %v4158 = vpop.f32.mrf.mxu0
        %v4159 = vadd.f32 0.0, %v4158
        %v4160 = vpop.f32.mrf.mxu0
        %v4161 = vpop.f32.mrf.mxu0
        %v4162 = vadd.f32 0.0, %v4161
        %v4163 = vpop.f32.mrf.mxu0
        %4164 = vmatprep.mubr.bf16.mxu0 0
        %4165 = vmatmul.mubr.bf16.gmra.mxu0 %v4104
        %v4166 = vpop.f32.mrf.mxu0
        %v4167 = vadd.f32 0.0, %v4166
        %v4168 = vpop.f32.mrf.mxu0
        %v4169 = vpop.f32.mrf.mxu0
        %v4170 = vadd.f32 0.0, %v4169
        %v4171 = vpop.f32.mrf.mxu0
        %4172 = vmatprep.mubr.bf16.mxu0 0
        %4173 = vmatmul.mubr.bf16.gmra.mxu0 %v4107
        %v4174 = vpop.f32.mrf.mxu0
        %v4175 = vadd.f32 0.0, %v4174
        %v4176 = vpop.f32.mrf.mxu0
        %v4177 = vpop.f32.mrf.mxu0
        %v4178 = vadd.f32 0.0, %v4177
        %v4179 = vpop.f32.mrf.mxu0
        %4180 = vmatprep.mubr.bf16.mxu0 0
        %4181 = vmatmul.mubr.bf16.gmra.mxu0 %v4110
        %v4182 = vpop.f32.mrf.mxu0
        %v4183 = vadd.f32 0.0, %v4182
        %v4184 = vpop.f32.mrf.mxu0
        %v4185 = vpop.f32.mrf.mxu0
        %v4186 = vadd.f32 0.0, %v4185
        %v4187 = vpop.f32.mrf.mxu0
        %4188 = vdwg.mxu0
        %vm4189 = vcmask 523264
        %v4190 = vsel %vm4189, %v4159, -inf
        %v4191 = vsel %vm4189, %v4162, -inf
        %v4192 = vsel %vm4189, %v4167, -inf
        %v4193 = vsel %vm4189, %v4170, -inf
        %v4194 = vsel %vm4189, %v4175, -inf
        %v4195 = vmax.f32 %v4190, %v4194
        %v4196 = vsel %vm4189, %v4178, -inf
        %v4197 = vmax.f32 %v4191, %v4196
        %v4198 = vsel %vm4189, %v4183, -inf
        %v4199 = vmax.f32 %v4192, %v4198
        %v4200 = vsel %vm4189, %v4186, -inf
        %v4201 = vmax.f32 %v4193, %v4200
        %v4202 = vmax.f32 %v4195, %v4197
        %v4203 = vmax.f32 %v4199, %v4201
        %v4204 = vmax.f32 %v4202, %v4203
        %4205 = vmax.xlane.f32.xlu0 %v4204
        %v4206 = vpop.xlane.xlu0 %4205
        %v4207 = vrot.slane %v4206, 4
        %v4208 = vmax.f32 %v4206, %v4207
        %v4209 = vrot.slane %v4208, 2
        %v4210 = vmax.f32 %v4208, %v4209
        %v4211 = vrot.slane %v4210, 1
        %v4212 = vmax.f32 %v4210, %v4211
        %s4213 = vtos %v4212
        %v4214 = vstv %s4213
        %v4215 = vsub.f32 -inf, %v4214
        %v4216 = vmul.f32 %v4215, 1.442695
        %v4217 = vpow.pop %v4216
        %v4218 = vsub.f32 %v4159, %v4214
        %v4219 = vsub.f32 %v4162, %v4214
        %v4220 = vsub.f32 %v4167, %v4214
        %v4221 = vsub.f32 %v4170, %v4214
        %v4222 = vsub.f32 %v4175, %v4214
        %v4223 = vsub.f32 %v4178, %v4214
        %v4224 = vsub.f32 %v4183, %v4214
        %v4225 = vsub.f32 %v4186, %v4214
        %v4226 = vmul.f32 %v4218, 1.442695
        %v4227 = vpow.pop %v4226
        %v4228 = vmul.f32 %v4219, 1.442695
        %v4229 = vpow.pop %v4228
        %v4230 = vmul.f32 %v4220, 1.442695
        %v4231 = vpow.pop %v4230
        %v4232 = vmul.f32 %v4221, 1.442695
        %v4233 = vpow.pop %v4232
        %v4234 = vmul.f32 %v4222, 1.442695
        %v4235 = vpow.pop %v4234
        %v4236 = vmul.f32 %v4223, 1.442695
        %v4237 = vpow.pop %v4236
        %v4238 = vmul.f32 %v4224, 1.442695
        %v4239 = vpow.pop %v4238
        %v4240 = vmul.f32 %v4225, 1.442695
        %v4241 = vpow.pop %v4240
        %v4242 = vmul.f32 %v4217, 0.0
        %v4243 = vsel %vm4189, %v4227, 0.0
        %v4244 = vsel %vm4189, %v4229, 0.0
        %v4245 = vadd.f32 %v4243, %v4244
        %v4246 = vsel %vm4189, %v4231, 0.0
        %v4247 = vadd.f32 %v4245, %v4246
        %v4248 = vsel %vm4189, %v4233, 0.0
        %v4249 = vadd.f32 %v4247, %v4248
        %v4250 = vsel %vm4189, %v4235, 0.0
        %v4251 = vadd.f32 %v4249, %v4250
        %v4252 = vsel %vm4189, %v4237, 0.0
        %v4253 = vadd.f32 %v4251, %v4252
        %v4254 = vsel %vm4189, %v4239, 0.0
        %v4255 = vadd.f32 %v4253, %v4254
        %v4256 = vsel %vm4189, %v4241, 0.0
        %v4257 = vadd.f32 %v4255, %v4256
        %4258 = vadd.xlane.f32.xlu0 %v4257
        %v4259 = vpop.xlane.xlu0 %4258
        %v4260 = vrot.slane %v4259, 4
        %v4261 = vadd.f32 %v4259, %v4260
        %v4262 = vrot.slane %v4261, 2
        %v4263 = vadd.f32 %v4261, %v4262
        %v4264 = vrot.slane %v4263, 1
        %v4265 = vadd.f32 %v4263, %v4264
        %s4266 = vtos %v4265
        %v4267 = vstv %s4266
        %v4268 = vadd.f32 %v4242, %v4267
        %v4269 = vpack.c.bf16 %v4229, %v4227
        %v4270 = vpack.c.bf16 %v4233, %v4231
        %v4271 = vpack.c.bf16 %v4237, %v4235
        %v4272 = vpack.c.bf16 %v4241, %v4239
        %v4274 = vsel %vm4189, %v4269, 0
        %v4277 = vsel %vm4189, %v4270, 0
        %v4280 = vsel %vm4189, %v4271, 0
        %v4283 = vsel %vm4189, %v4272, 0
        %4285 = vmatprep.subr.bf16.mxu0 0
        %4286 = vmatpush1.bf16.msra.mxu0 0
        %4287 = vmatprep.subr.bf16.mxu0 0
        %4288 = vmatpush1.bf16.msra.mxu0 0
        %4289 = vmatprep.subr.bf16.mxu0 0
        %4290 = vmatpush1.bf16.msra.mxu0 0
        %4291 = vmatprep.subr.bf16.mxu0 0
        %4292 = vmatpush1.bf16.msra.mxu0 0
        %4293 = vmatprep.subr.bf16.mxu0 0
        %4294 = vmatpush1.bf16.msra.mxu0 %v4099
        %4295 = vmatprep.subr.bf16.mxu0 0
        %4296 = vmatpush1.bf16.msra.mxu0 %v4098
        %4297 = vmatprep.subr.bf16.mxu0 0
        %4298 = vmatpush1.bf16.msra.mxu0 %v4097
        %4299 = vmatprep.subr.bf16.mxu0 0
        %4300 = vmatpush1.bf16.msra.mxu0 %v4096
        %4301 = vmatprep.subr.bf16.mxu0 0
        %4302 = vmatpush2.bf16.msra.mxu0 0
        %4303 = vmatprep.subr.bf16.mxu0 0
        %4304 = vmatpush2.bf16.msra.mxu0 0
        %4305 = vmatprep.subr.bf16.mxu0 0
        %4306 = vmatpush2.bf16.msra.mxu0 0
        %4307 = vmatprep.subr.bf16.mxu0 0
        %4308 = vmatpush2.bf16.msra.mxu0 0
        %4309 = vmatprep.subr.bf16.mxu0 0
        %4310 = vmatpush2.bf16.msra.mxu0 0
        %4311 = vmatprep.subr.bf16.mxu0 0
        %4312 = vmatpush2.bf16.msra.mxu0 0
        %4313 = vmatprep.subr.bf16.mxu0 0
        %4314 = vmatpush2.bf16.msra.mxu0 0
        %4315 = vmatprep.subr.bf16.mxu0 0
        %4316 = vmatpush2.bf16.msra.mxu0 0
        %4317 = vmatprep.mubr.bf16.mxu0 0
        %4318 = vmatmul.mubr.bf16.gmra.mxu0 %v4274
        %v4319 = vpop.f32.mrf.mxu0
        %v4320 = vadd.f32 0.0, %v4319
        %v4321 = vpop.f32.mrf.mxu0
        %v4322 = vpop.f32.mrf.mxu0
        %v4323 = vadd.f32 0.0, %v4322
        %v4324 = vpop.f32.mrf.mxu0
        %4325 = vmatprep.mubr.bf16.mxu0 0
        %4326 = vmatmul.mubr.bf16.gmra.mxu0 %v4277
        %v4327 = vpop.f32.mrf.mxu0
        %v4328 = vadd.f32 0.0, %v4327
        %v4329 = vpop.f32.mrf.mxu0
        %v4330 = vpop.f32.mrf.mxu0
        %v4331 = vadd.f32 0.0, %v4330
        %v4332 = vpop.f32.mrf.mxu0
        %4333 = vmatprep.mubr.bf16.mxu0 0
        %4334 = vmatmul.mubr.bf16.gmra.mxu0 %v4280
        %v4335 = vpop.f32.mrf.mxu0
        %v4336 = vadd.f32 0.0, %v4335
        %v4337 = vpop.f32.mrf.mxu0
        %v4338 = vpop.f32.mrf.mxu0
        %v4339 = vadd.f32 0.0, %v4338
        %v4340 = vpop.f32.mrf.mxu0
        %4341 = vmatprep.mubr.bf16.mxu0 0
        %4342 = vmatmul.mubr.bf16.gmra.mxu0 %v4283
        %v4343 = vpop.f32.mrf.mxu0
        %v4344 = vadd.f32 0.0, %v4343
        %v4345 = vpop.f32.mrf.mxu0
        %v4346 = vpop.f32.mrf.mxu0
        %v4347 = vadd.f32 0.0, %v4346
        %v4348 = vpop.f32.mrf.mxu0
        %4349 = vdwg.mxu0
        %v4350 = vadd.f32 %v4242, %v4320
        %v4351 = vadd.f32 %v4242, %v4323
        %v4352 = vadd.f32 %v4242, %v4328
        %v4353 = vadd.f32 %v4242, %v4331
        %v4354 = vadd.f32 %v4242, %v4336
        %v4355 = vadd.f32 %v4242, %v4339
        %v4356 = vadd.f32 %v4242, %v4344
        %v4357 = vadd.f32 %v4242, %v4347
        %v4358 = vrcp.pop %v4268
        %v4359 = vmul.f32 %v4350, %v4358
        %v4360 = vmul.f32 %v4351, %v4358
        %v4361 = vmul.f32 %v4352, %v4358
        %v4362 = vmul.f32 %v4353, %v4358
        %v4363 = vmul.f32 %v4354, %v4358
        %v4364 = vmul.f32 %v4355, %v4358
        %v4365 = vmul.f32 %v4356, %v4358
        %v4366 = vmul.f32 %v4357, %v4358
        %v4367 = vpack.c.bf16 %v4360, %v4359
        %v4368 = vpack.c.bf16 %v4362, %v4361
        %v4369 = vpack.c.bf16 %v4364, %v4363
        %v4370 = vpack.c.bf16 %v4366, %v4365
        %v4371 = vld [vmem:[%s17] sm:$0x3]
        %v4372 = vld [vmem:[%s18] sm:$0x1]
        %v4374 = vlaneseq
        %v4375 = vshrl.u32 %v4374, 7
        %v4376 = vsub.s32 0, %v4375
        %v4377 = vrot.slane %v4372, %v4376
        %v4380 = vsel %vm1145, %v4367, 0
        %v4383 = vsel %vm1145, %v4368, 0
        %v4386 = vsel %vm1145, %v4369, 0
        %v4389 = vsel %vm1145, %v4370, 0
        %vm4391 = vcmask 1041408
        %v4393 = vsel %vm4391, %v4371, 0
        %4395 = vmatprep.subr.bf16.mxu0 0
        %4396 = vmatpush1.bf16.msra.mxu0 0
        %4397 = vmatprep.subr.bf16.mxu0 0
        %4398 = vmatpush1.bf16.msra.mxu0 0
        %4399 = vmatprep.subr.bf16.mxu0 0
        %4400 = vmatpush1.bf16.msra.mxu0 0
        %4401 = vmatprep.subr.bf16.mxu0 0
        %4402 = vmatpush1.bf16.msra.mxu0 0
        %4403 = vmatprep.subr.bf16.mxu0 0
        %4404 = vmatpush1.bf16.msra.mxu0 0
        %4405 = vmatprep.subr.bf16.mxu0 0
        %4406 = vmatpush1.bf16.msra.mxu0 0
        %4407 = vmatprep.subr.bf16.mxu0 0
        %4408 = vmatpush1.bf16.msra.mxu0 0
        %4409 = vmatprep.subr.bf16.mxu0 0
        %4410 = vmatpush1.bf16.msra.mxu0 %v4393
        %4411 = vmatprep.subr.bf16.mxu0 0
        %4412 = vmatpush2.bf16.msra.mxu0 0
        %4413 = vmatprep.subr.bf16.mxu0 0
        %4414 = vmatpush2.bf16.msra.mxu0 0
        %4415 = vmatprep.subr.bf16.mxu0 0
        %4416 = vmatpush2.bf16.msra.mxu0 0
        %4417 = vmatprep.subr.bf16.mxu0 0
        %4418 = vmatpush2.bf16.msra.mxu0 0
        %4419 = vmatprep.subr.bf16.mxu0 0
        %4420 = vmatpush2.bf16.msra.mxu0 0
        %4421 = vmatprep.subr.bf16.mxu0 0
        %4422 = vmatpush2.bf16.msra.mxu0 0
        %4423 = vmatprep.subr.bf16.mxu0 0
        %4424 = vmatpush2.bf16.msra.mxu0 0
        %4425 = vmatprep.subr.bf16.mxu0 0
        %4426 = vmatpush2.bf16.msra.mxu0 0
        %4427 = vmatprep.mubr.bf16.mxu0 0
        %4428 = vmatmul.mubr.bf16.gmra.mxu0 %v4380
        %v4429 = vpop.f32.mrf.mxu0
        %v4430 = vadd.f32 %v4377, %v4429
        %v4431 = vpop.f32.mrf.mxu0
        %v4432 = vpop.f32.mrf.mxu0
        %v4433 = vadd.f32 %v4377, %v4432
        %v4434 = vpop.f32.mrf.mxu0
        %4435 = vmatprep.mubr.bf16.mxu0 0
        %4436 = vmatmul.mubr.bf16.gmra.mxu0 %v4383
        %v4437 = vpop.f32.mrf.mxu0
        %v4438 = vadd.f32 %v4377, %v4437
        %v4439 = vpop.f32.mrf.mxu0
        %v4440 = vpop.f32.mrf.mxu0
        %v4441 = vadd.f32 %v4377, %v4440
        %v4442 = vpop.f32.mrf.mxu0
        %4443 = vmatprep.mubr.bf16.mxu0 0
        %4444 = vmatmul.mubr.bf16.gmra.mxu0 %v4386
        %v4445 = vpop.f32.mrf.mxu0
        %v4446 = vadd.f32 %v4377, %v4445
        %v4447 = vpop.f32.mrf.mxu0
        %v4448 = vpop.f32.mrf.mxu0
        %v4449 = vadd.f32 %v4377, %v4448
        %v4450 = vpop.f32.mrf.mxu0
        %4451 = vmatprep.mubr.bf16.mxu0 0
        %4452 = vmatmul.mubr.bf16.gmra.mxu0 %v4389
        %v4453 = vpop.f32.mrf.mxu0
        %v4454 = vadd.f32 %v4377, %v4453
        %v4455 = vpop.f32.mrf.mxu0
        %v4456 = vpop.f32.mrf.mxu0
        %v4457 = vadd.f32 %v4377, %v4456
        %v4458 = vpop.f32.mrf.mxu0
        %4459 = vdwg.mxu0
        %v4460 = vld [vmem:[%s616] sm:$0xff]
        %v4461 = vld [vmem:[%s616 + $0x8] sm:$0xff]
        %v4462 = vld [vmem:[%s616 + $0x10] sm:$0xff]
        %v4463 = vld [vmem:[%s616 + $0x18] sm:$0xff]
        %v4464 = vld [vmem:[%s616 + $0x20] sm:$0xff]
        %v4465 = vld [vmem:[%s616 + $0x28] sm:$0xff]
        %v4466 = vld [vmem:[%s616 + $0x30] sm:$0xff]
        %v4467 = vld [vmem:[%s616 + $0x38] sm:$0xff]
        %s4468 = sld [smem:[#allocation4 + $0x6]]
        %v4469 = vunpack.c.l.bf16 %v3824
        %v4470 = vunpack.c.l.bf16 %v3825
        %v4471 = vunpack.c.l.bf16 %v3826
        %v4472 = vunpack.c.l.bf16 %v3827
        %v4473 = vunpack.c.l.bf16 %v3828
        %v4474 = vunpack.c.l.bf16 %v3829
        %v4475 = vunpack.c.l.bf16 %v3830
        %v4476 = vunpack.c.l.bf16 %v3831
        %v4478 = vsel %vm1076, %v1035, 0
        %4480 = vmatprep.subr.bf16.mxu0 0
        %4481 = vmatpush1.bf16.msra.mxu0 0
        %4482 = vmatprep.subr.bf16.mxu0 0
        %4483 = vmatpush1.bf16.msra.mxu0 0
        %4484 = vmatprep.subr.bf16.mxu0 0
        %4485 = vmatpush1.bf16.msra.mxu0 0
        %4486 = vmatprep.subr.bf16.mxu0 0
        %4487 = vmatpush1.bf16.msra.mxu0 0
        %4488 = vmatprep.subr.bf16.mxu0 0
        %4489 = vmatpush1.bf16.msra.mxu0 0
        %4490 = vmatprep.subr.bf16.mxu0 0
        %4491 = vmatpush1.bf16.msra.mxu0 0
        %4492 = vmatprep.subr.bf16.mxu0 0
        %4493 = vmatpush1.bf16.msra.mxu0 0
        %4494 = vmatprep.subr.bf16.mxu0 0
        %4495 = vmatpush1.bf16.msra.mxu0 %v4478
        %4496 = vmatprep.subr.bf16.mxu0 0
        %4497 = vmatpush2.bf16.msra.mxu0 0
        %4498 = vmatprep.subr.bf16.mxu0 0
        %4499 = vmatpush2.bf16.msra.mxu0 0
        %4500 = vmatprep.subr.bf16.mxu0 0
        %4501 = vmatpush2.bf16.msra.mxu0 0
        %4502 = vmatprep.subr.bf16.mxu0 0
        %4503 = vmatpush2.bf16.msra.mxu0 0
        %4504 = vmatprep.subr.bf16.mxu0 0
        %4505 = vmatpush2.bf16.msra.mxu0 0
        %4506 = vmatprep.subr.bf16.mxu0 0
        %4507 = vmatpush2.bf16.msra.mxu0 0
        %4508 = vmatprep.subr.bf16.mxu0 0
        %4509 = vmatpush2.bf16.msra.mxu0 0
        %4510 = vmatprep.subr.bf16.mxu0 0
        %4511 = vmatpush2.bf16.msra.mxu0 0
        %4512 = vmatprep.mubr.bf16.mxu0 0
        %4513 = vmatmul.mubr.bf16.gmra.mxu0 %v3861
        %v4514 = vpop.f32.mrf.mxu0
        %v4515 = vadd.f32 1.0, %v4514
        %v4516 = vpop.f32.mrf.mxu0
        %v4517 = vpop.f32.mrf.mxu0
        %v4518 = vadd.f32 1.0, %v4517
        %v4519 = vpop.f32.mrf.mxu0
        %4520 = vmatprep.mubr.bf16.mxu0 0
        %4521 = vmatmul.mubr.bf16.gmra.mxu0 %v3864
        %v4522 = vpop.f32.mrf.mxu0
        %v4523 = vadd.f32 1.0, %v4522
        %v4524 = vpop.f32.mrf.mxu0
        %v4525 = vpop.f32.mrf.mxu0
        %v4526 = vadd.f32 1.0, %v4525
        %v4527 = vpop.f32.mrf.mxu0
        %4528 = vmatprep.mubr.bf16.mxu0 0
        %4529 = vmatmul.mubr.bf16.gmra.mxu0 %v3867
        %v4530 = vpop.f32.mrf.mxu0
        %v4531 = vadd.f32 1.0, %v4530
        %v4532 = vpop.f32.mrf.mxu0
        %v4533 = vpop.f32.mrf.mxu0
        %v4534 = vadd.f32 1.0, %v4533
        %v4535 = vpop.f32.mrf.mxu0
        %4536 = vmatprep.mubr.bf16.mxu0 0
        %4537 = vmatmul.mubr.bf16.gmra.mxu0 %v3870
        %v4538 = vpop.f32.mrf.mxu0
        %v4539 = vadd.f32 1.0, %v4538
        %v4540 = vpop.f32.mrf.mxu0
        %v4541 = vpop.f32.mrf.mxu0
        %v4542 = vadd.f32 1.0, %v4541
        %v4543 = vpop.f32.mrf.mxu0
        %4544 = vdwg.mxu0
        %v4545 = vmul.f32 %v4469, %v4515
        %v4546 = vmul.f32 %v4470, %v4518
        %v4547 = vmul.f32 %v4471, %v4523
        %v4548 = vmul.f32 %v4472, %v4526
        %v4549 = vmul.f32 %v4473, %v4531
        %v4550 = vmul.f32 %v4474, %v4534
        %v4551 = vmul.f32 %v4475, %v4539
        %v4552 = vmul.f32 %v4476, %v4542
        %v4553 = vadd.f32 %v4430, 1.0
        %v4554 = vadd.f32 %v4433, 1.0
        %v4555 = vadd.f32 %v4438, 1.0
        %v4556 = vadd.f32 %v4441, 1.0
        %v4557 = vadd.f32 %v4446, 1.0
        %v4558 = vadd.f32 %v4449, 1.0
        %v4559 = vadd.f32 %v4454, 1.0
        %v4560 = vadd.f32 %v4457, 1.0
        %v4561 = vmul.f32 %v4545, %v4553
        %v4562 = vmul.f32 %v4546, %v4554
        %v4563 = vmul.f32 %v4547, %v4555
        %v4564 = vmul.f32 %v4548, %v4556
        %v4565 = vmul.f32 %v4549, %v4557
        %v4566 = vmul.f32 %v4550, %v4558
        %v4567 = vmul.f32 %v4551, %v4559
        %v4568 = vmul.f32 %v4552, %v4560
        %v4569 = vstv %s4468
        %v4570 = vmul.f32 %v4569, %v4561
        %v4571 = vmul.f32 %v4569, %v4562
        %v4572 = vmul.f32 %v4569, %v4563
        %v4573 = vmul.f32 %v4569, %v4564
        %v4574 = vmul.f32 %v4569, %v4565
        %v4575 = vmul.f32 %v4569, %v4566
        %v4576 = vmul.f32 %v4569, %v4567
        %v4577 = vmul.f32 %v4569, %v4568
        %v4578 = vadd.f32 %v4460, %v4570
        %v4579 = vadd.f32 %v4461, %v4571
        %v4580 = vadd.f32 %v4462, %v4572
        %v4581 = vadd.f32 %v4463, %v4573
        %v4582 = vadd.f32 %v4464, %v4574
        %v4583 = vadd.f32 %v4465, %v4575
        %v4584 = vadd.f32 %v4466, %v4576
        %v4585 = vadd.f32 %v4467, %v4577
        %4586 = vst.msk [vmem:[%s616] sm:$0xff] %vm634, %v4578
        %4587 = vst.msk [vmem:[%s616 + $0x8] sm:$0xff] %vm634, %v4579
        %4588 = vst.msk [vmem:[%s616 + $0x10] sm:$0xff] %vm634, %v4580
        %4589 = vst.msk [vmem:[%s616 + $0x18] sm:$0xff] %vm634, %v4581
        %4590 = vst.msk [vmem:[%s616 + $0x20] sm:$0xff] %vm634, %v4582
        %4591 = vst.msk [vmem:[%s616 + $0x28] sm:$0xff] %vm634, %v4583
        %4592 = vst.msk [vmem:[%s616 + $0x30] sm:$0xff] %vm634, %v4584
        %4593 = vst.msk [vmem:[%s616 + $0x38] sm:$0xff] %vm634, %v4585
        %p4594 = scmp.lt.s32.totalorder %s31, 1
        %s4595 = scalar_select %p4594, %s31, 1
        %s4596 = smul.addr %s4595, 8
        %s4597 = smul.addr %s4596, 8
        %s4598 = scalar_lea.vmem %s19, %s4597
        // Predicated region
        $region101: #{glam_forward.1} parent=95 // pred_check
          %p4599 = pneg %p453
        $region102: #{glam_forward.1} parent=95 // pred_check_branch
          %4601 = sbr.rel (%p4599) target = $region104
        $region103: #{glam_forward.1} parent=95 // pred_region
          _
        $region104: #{glam_forward.1} parent=95 // pred_fallthru
          _
      $region96: #{glam_forward.1} parent=5 // pred_fallthru
        _
      %p4602 = scmp.le.s32.totalorder 2, %s26
      // Predicated region
      $region105: #{glam_forward.1} parent=5 // pred_check
        %p4603 = pneg %p4602
      $region106: #{glam_forward.1} parent=5 // pred_check_branch
        %4605 = sbr.rel (%p4603) target = $region108
      $region107: #{glam_forward.1} parent=5 // pred_region
        %s4606 = ssub.s32 %s26, 2
        // Predicated region
        $region109: #{glam_forward.1} parent=107 // pred_check
          %p4607 = pneg %p459
        $region110: #{glam_forward.1} parent=107 // pred_check_branch
          %4609 = sbr.rel (%p4607) target = $region112
        $region111: #{glam_forward.1} parent=107 // pred_region
          %p4610 = scmp.lt.s32.totalorder %s32, 1
          %s4611 = scalar_select %p4610, %s32, 1
          %s4612 = smul.addr %s4611, 8
          %s4613 = smul.addr %s4612, 8
          %s4614 = scalar_lea.vmem %s19, %s4613
        $region112: #{glam_forward.1} parent=107 // pred_fallthru
          _
      $region108: #{glam_forward.1} parent=5 // pred_fallthru
        _
    $region6: #{glam_forward.1} parent=1 // loop_footer
      %s30 = sadd.s32 1, %s26
    $region7: #{glam_forward.1} parent=1 // loop_footer_branch
      %25 = sbr.rel target = $region3
    $region8: #{glam_forward.1} parent=1 // loop_exit
      _
    %4615 = vsyncpa [#allocation5], 1
    %s4616 = scalar_lea.sflag [#allocation5], 1
    %4617 = vsyncpa %s4616, 1

</llo_original>
